<compile_context>
chip_gen: v7x
topology: tpu7x:2x2x1
jax: 0.10.0
libtpu: 0.0.40
codegen_flags: <defaults>
</compile_context>

<pallas_src>
import functools
import math

import jax
import jax.numpy as jnp
from jax.experimental import pallas as pl
from jax.experimental.pallas import tpu as pltpu


# ---------------------------------------------------------------------------
# Fused kernel: conv1/2/3 + BN + ReLU, per-sample max-pool, fc1/2/3 + BN +
# ReLU, point shift -- for one batch tile (b_tile samples) per grid step.
# ---------------------------------------------------------------------------
def _center_reg_kernel(
    pts_ref, cls_ref,
    w1_ref, s1_ref, b1_ref,
    w2_ref, s2_ref, b2_ref,
    w3_ref, s3_ref, b3_ref,
    f1f_ref, f1c_ref, fs1_ref, fb1_ref,
    f2_ref, fs2_ref, fb2_ref,
    f3_ref, fb3_ref,
    pts_out_ref, off_out_ref,
    *, b_tile, n_pts,
):
    f32 = jnp.float32
    bf16 = jnp.bfloat16

    x = pts_ref[...]                                      # (4, b_tile*n_pts) f32

    # conv1 (K=4) as 4 VPU broadcast mul-adds (avoid a tiny-K MXU pass).
    w1 = w1_ref[...]                                      # (128, 4)
    h = w1[:, 0:1] * x[0:1, :]
    for k in range(1, 4):
        h = h + w1[:, k:k + 1] * x[k:k + 1, :]            # (128, L)
    h = jnp.maximum(h * s1_ref[...] + b1_ref[...], 0.0)

    # conv2 / conv3: one batched MXU matmul each over all tile lanes.
    h = jnp.dot(w2_ref[...], h.astype(bf16), preferred_element_type=f32)
    h = jnp.maximum(h * s2_ref[...] + b2_ref[...], 0.0)   # (128, L)
    h = jnp.dot(w3_ref[...], h.astype(bf16), preferred_element_type=f32)
    h = jnp.maximum(h * s3_ref[...] + b3_ref[...], 0.0)   # (256, L)

    # Per-sample global max-pool over aligned lane slices -> (256, b_tile).
    cols = [jnp.max(h[:, b * n_pts:(b + 1) * n_pts], axis=1, keepdims=True)
            for b in range(b_tile)]
    feat = cols[0] if b_tile == 1 else jnp.concatenate(cols, axis=1)

    # FC head, batched across the tile (RHS width = b_tile), kept f32.
    cls = cls_ref[0]                                      # (n_cls, b_tile)
    f1c = f1c_ref[...]                                    # (256, n_cls)
    g = jnp.dot(f1f_ref[...], feat, preferred_element_type=f32)  # (256, b_tile)
    for c in range(f1c.shape[1]):                         # class mix on the VPU
        g = g + f1c[:, c:c + 1] * cls[c:c + 1, :]
    g = jnp.maximum(g * fs1_ref[...] + fb1_ref[...], 0.0)
    g = jnp.dot(f2_ref[...], g, preferred_element_type=f32)      # (128, b_tile)
    g = jnp.maximum(g * fs2_ref[...] + fb2_ref[...], 0.0)
    # fc3 padded to 4 output rows (row 3 == 0) -> off4[3] is exactly 0.
    off4 = jnp.dot(f3_ref[...], g, preferred_element_type=f32) + fb3_ref[...]

    off_out_ref[0] = off4                                 # (4, b_tile) lane-dense

    # Point shift: aligned, full-sublane, unmasked lane-slice stores.
    for b in range(b_tile):
        sl = slice(b * n_pts, (b + 1) * n_pts)
        pts_out_ref[:, sl] = x[:, sl] - off4[:, b:b + 1]


# ---------------------------------------------------------------------------
# Tiling policy (generation-aware, VMEM-budgeted).
# ---------------------------------------------------------------------------
def _multi_tensorcore_chip():
    try:
        dev = jax.devices()[0]
        if dev.platform != "tpu":
            return False
        kind = dev.device_kind.lower()
        return any(tag in kind for tag in ("v4", "v5p", "v7", "tpu7"))
    except Exception:
        return False


def _choose_tiling(bs, n_pts_padded):
    # Per lane-point: f32 h1/h2/h3 activations + bf16 casts feeding conv2/3
    # + double-buffered 4-channel f32 in/out point blocks.
    per_lane_bytes = (128 + 128 + 256) * 4 + (128 + 128) * 2 + 2 * 2 * 4 * 4
    per_sample = per_lane_bytes * max(n_pts_padded, 1)
    budget = 12 << 20                 # conservative vs v5e's 16 MiB scoped default
    cap = max(1, budget // per_sample)
    cap = min(cap, 16, bs)            # keep in-kernel per-sample unrolls short
    if _multi_tensorcore_chip() and bs >= 2:
        cap = min(cap, max(1, bs // 2))   # >= 2 grid steps so both TCs get work
    b_tile = int(max(1, cap))
    n_steps = -(-bs // b_tile)        # cdiv; non-divisible bs handled by padding
    return b_tile, n_steps


# ---------------------------------------------------------------------------
# Wrapper: one pallas_call, grid over batch tiles.
# ---------------------------------------------------------------------------
def _forward_arrays(kp, pts, cls_pred, center):
    bs, n_ch, n_pts = pts.shape
    pts = pts.astype(jnp.float32)
    cls2 = cls_pred.astype(jnp.float32).reshape(bs, -1)        # (bs, n_cls)
    center = center.astype(jnp.float32).reshape(bs, 3)
    n_cls = cls2.shape[1]

    # Pad the point axis to a lane multiple (duplicate last column: max-safe).
    if n_pts % 128:
        pad = 128 - n_pts % 128
        pts = jnp.concatenate(
            [pts, jnp.broadcast_to(pts[:, :, -1:], (bs, n_ch, pad))], axis=2)
    np_pad = pts.shape[2]

    b_tile, n_steps = _choose_tiling(bs, np_pad)
    bs_pad = b_tile * n_steps
    if bs_pad != bs:
        pts = jnp.pad(pts, ((0, bs_pad - bs), (0, 0), (0, 0)))
        cls2 = jnp.pad(cls2, ((0, bs_pad - bs), (0, 0)))

    # Channel-major layout: lane axis = batch*points (one matmul per layer/step).
    pts_cm = pts.transpose(1, 0, 2).reshape(n_ch, bs_pad * np_pad)
    cls3 = cls2.reshape(n_steps, b_tile, n_cls).transpose(0, 2, 1)

    weights = (kp["w1"], kp["s1"], kp["b1"],
               kp["w2"], kp["s2"], kp["b2"],
               kp["w3"], kp["s3"], kp["b3"],
               kp["f1f"], kp["f1c"], kp["fs1"], kp["fb1"],
               kp["f2"], kp["fs2"], kp["fb2"],
               kp["f3"], kp["fb3"])

    l_blk = b_tile * np_pad
    kernel = functools.partial(_center_reg_kernel, b_tile=b_tile, n_pts=np_pad)

    pts_new_cm, off = pl.pallas_call(
        kernel,
        out_shape=(jax.ShapeDtypeStruct((n_ch, bs_pad * np_pad), jnp.float32),
                   jax.ShapeDtypeStruct((n_steps, 4, b_tile), jnp.float32)),
        grid=(n_steps,),
        in_specs=[pl.BlockSpec((n_ch, l_blk), lambda i: (0, i)),
                  pl.BlockSpec((1, n_cls, b_tile), lambda i: (i, 0, 0))]
                 + [pl.BlockSpec(w.shape, lambda i: (0, 0)) for w in weights],
        out_specs=(pl.BlockSpec((n_ch, l_blk), lambda i: (0, i)),
                   pl.BlockSpec((1, 4, b_tile), lambda i: (i, 0, 0))),
        compiler_params=pltpu.CompilerParams(
            dimension_semantics=("parallel",),
            vmem_limit_bytes=32 * 1024 * 1024),
    )(pts_cm, cls3, *weights)

    pts_new = pts_new_cm.reshape(n_ch, bs_pad, np_pad).transpose(1, 0, 2)
    pts_new = pts_new[:bs, :, :n_pts]
    off = off.transpose(0, 2, 1).reshape(bs_pad, 4)[:bs, :3]
    return pts_new, center + off


_forward_arrays_jit = jax.jit(_forward_arrays)


def center_reg_net_forward(kp, data_dict):
    pts_new, ctr_new = _forward_arrays_jit(
        kp, data_dict["points"], data_dict["cls_pred"], data_dict["center"])
    out = dict(data_dict)
    out["points"] = pts_new
    out["center"] = ctr_new
    return out


# ---------------------------------------------------------------------------
# Parameter construction (PyTorch-default-style uniform init) + BN folding.
# ---------------------------------------------------------------------------
def init_linear(key, in_dim, out_dim, zero=False):
    if zero:
        return (jnp.zeros((out_dim, in_dim), jnp.float32),
                jnp.zeros((out_dim,), jnp.float32))
    kw, kb = jax.random.split(key)
    bound = 1.0 / math.sqrt(in_dim)
    w = jax.random.uniform(kw, (out_dim, in_dim), jnp.float32, -bound, bound)
    b = jax.random.uniform(kb, (out_dim,), jnp.float32, -bound, bound)
    return w, b


def bn_fold(num_ch, eps=1e-5):
    gamma = jnp.ones((num_ch,), jnp.float32)
    beta = jnp.zeros((num_ch,), jnp.float32)
    mean = jnp.zeros((num_ch,), jnp.float32)
    var = jnp.ones((num_ch,), jnp.float32)
    scale = gamma / jnp.sqrt(var + eps)
    shift = beta - mean * scale
    return scale, shift


def make_params(n_classes=3, seed=0, zero_fc3=True):
    key = jax.random.PRNGKey(seed)
    ks = jax.random.split(key, 6)
    p = {}
    p["conv1_w"], p["conv1_b"] = init_linear(ks[0], 4, 128)      # Conv1d(4,128,1)
    p["conv2_w"], p["conv2_b"] = init_linear(ks[1], 128, 128)    # Conv1d(128,128,1)
    p["conv3_w"], p["conv3_b"] = init_linear(ks[2], 128, 256)    # Conv1d(128,256,1)
    p["fc1_w"], p["fc1_b"] = init_linear(ks[3], 256 + n_classes, 256)
    p["fc2_w"], p["fc2_b"] = init_linear(ks[4], 256, 128)
    p["fc3_w"], p["fc3_b"] = init_linear(ks[5], 128, 3, zero=zero_fc3)
    p["bn1"] = bn_fold(128)
    p["bn2"] = bn_fold(128)
    p["bn3"] = bn_fold(256)
    p["fcbn1"] = bn_fold(256)
    p["fcbn2"] = bn_fold(128)
    return p


def fold_params(p):
    """Kernel-ready params: fold BN, split fc1, pad fc3 (zero row), cast conv2/3 bf16."""
    def col(v):
        return v.reshape(-1, 1).astype(jnp.float32)

    def fold_bias(bias, bn):
        scale, shift = bn
        return col(scale), col(scale * bias + shift)

    kp = {}
    kp["w1"] = p["conv1_w"].astype(jnp.float32)               # (128, 4)
    kp["s1"], kp["b1"] = fold_bias(p["conv1_b"], p["bn1"])
    kp["w2"] = p["conv2_w"].astype(jnp.bfloat16)              # (128, 128)
    kp["s2"], kp["b2"] = fold_bias(p["conv2_b"], p["bn2"])
    kp["w3"] = p["conv3_w"].astype(jnp.bfloat16)              # (256, 128)
    kp["s3"], kp["b3"] = fold_bias(p["conv3_b"], p["bn3"])

    fc1_w = p["fc1_w"]                                        # (256, 256+ncls)
    kp["f1f"] = fc1_w[:, :256].astype(jnp.float32)            # (256, 256)
    kp["f1c"] = fc1_w[:, 256:].astype(jnp.float32)            # (256, ncls)
    kp["fs1"], kp["fb1"] = fold_bias(p["fc1_b"], p["fcbn1"])
    kp["f2"] = p["fc2_w"].astype(jnp.float32)                 # (128, 256)
    kp["fs2"], kp["fb2"] = fold_bias(p["fc2_b"], p["fcbn2"])

    # fc3 padded with an explicit ZERO 4th output row so the in-kernel offset
    # is a (4, b_tile) block whose intensity component is exactly 0.
    kp["f3"] = jnp.concatenate(
        [p["fc3_w"].astype(jnp.float32),
         jnp.zeros((1, p["fc3_w"].shape[1]), jnp.float32)], axis=0)   # (4, 128)
    kp["fb3"] = jnp.concatenate(
        [p["fc3_b"].astype(jnp.float32), jnp.zeros((1,), jnp.float32)],
        axis=0).reshape(4, 1)
    return kp


# ---------------------------------------------------------------------------
# Pure-JAX reference for a sanity check.
# ---------------------------------------------------------------------------
def reference_forward(params, data_dict):
    bs = data_dict["batch_size"]
    pts = data_dict["points"].astype(jnp.float32)
    cls_pred = data_dict["cls_pred"].astype(jnp.float32)
    center = data_dict["center"].astype(jnp.float32)

    def conv_bn_relu(x, w, b, bn):      # x: (bs, C_in, N)
        s, sh = bn
        z = jnp.einsum("oc,bcn->bon", w, x) + b[None, :, None]
        return jnp.maximum(z * s[None, :, None] + sh[None, :, None], 0.0)

    h = conv_bn_relu(pts, params["conv1_w"], params["conv1_b"], params["bn1"])
    h = conv_bn_relu(h, params["conv2_w"], params["conv2_b"], params["bn2"])
    h = conv_bn_relu(h, params["conv3_w"], params["conv3_b"], params["bn3"])
    feat = jnp.max(h, axis=2)                                   # (bs, 256)
    xcat = jnp.concatenate([feat, cls_pred.reshape(bs, -1)], axis=1)

    def fc_bn_relu(x, w, b, bn):
        s, sh = bn
        z = x @ w.T + b[None, :]
        return jnp.maximum(z * s[None, :] + sh[None, :], 0.0)

    h = fc_bn_relu(xcat, params["fc1_w"], params["fc1_b"], params["fcbn1"])
    h = fc_bn_relu(h, params["fc2_w"], params["fc2_b"], params["fcbn2"])
    x = h @ params["fc3_w"].T + params["fc3_b"][None, :]

    pts_new = pts.at[:, :3, :].add(-x[:, :, None])
    return {"points": pts_new, "center": center + x}


if __name__ == "__main__":
    bs, n_classes, n_pts = 2, 3, 128
    key = jax.random.PRNGKey(0)
    k_pts, k_cls, k_ctr = jax.random.split(key, 3)

    pts = jax.random.normal(k_pts, (bs, 4, n_pts), jnp.float32)
    cls_logits = jax.random.normal(k_cls, (bs, n_classes), jnp.float32)
    cls_pred = jax.nn.one_hot(jnp.argmax(cls_logits, axis=-1), n_classes,
                              dtype=jnp.float32)
    center = jax.random.normal(k_ctr, (bs, 3), jnp.float32)

    # Non-zero fc3 so the check exercises the whole network (the module's
    # default zero-init would make the predicted offset identically zero).
    raw = make_params(n_classes=n_classes, seed=0, zero_fc3=False)
    kp = fold_params(raw)

    data_dict = {"batch_size": bs, "points": pts, "cls_pred": cls_pred,
                 "center": center}

    out = center_reg_net_forward(kp, data_dict)
    jax.block_until_ready(out["points"])
    jax.block_until_ready(out["center"])

    ref = reference_forward(raw, data_dict)
    assert out["points"].shape == (bs, 4, n_pts)
    assert out["center"].shape == (bs, 3)
    # conv2/conv3 use bf16 MXU operands (f32 accumulation); FC head is f32.
    assert jnp.allclose(out["points"], ref["points"], rtol=2e-2, atol=2e-2)
    assert jnp.allclose(out["center"], ref["center"], rtol=2e-2, atol=2e-2)

    print("KERNEL_OK")
</pallas_src>

<mosaic_0001>
module attributes {stable_mosaic.version = 11 : i64} {
  func.func @_center_reg_kernel(%arg0: i32, %arg1: memref<4x256xf32, #tpu.memory_space<vmem>>, %arg2: memref<1x3x2xf32, #tpu.memory_space<vmem>>, %arg3: memref<128x4xf32, #tpu.memory_space<vmem>>, %arg4: memref<128x1xf32, #tpu.memory_space<vmem>>, %arg5: memref<128x1xf32, #tpu.memory_space<vmem>>, %arg6: memref<128x128xbf16, #tpu.memory_space<vmem>>, %arg7: memref<128x1xf32, #tpu.memory_space<vmem>>, %arg8: memref<128x1xf32, #tpu.memory_space<vmem>>, %arg9: memref<256x128xbf16, #tpu.memory_space<vmem>>, %arg10: memref<256x1xf32, #tpu.memory_space<vmem>>, %arg11: memref<256x1xf32, #tpu.memory_space<vmem>>, %arg12: memref<256x256xf32, #tpu.memory_space<vmem>>, %arg13: memref<256x3xf32, #tpu.memory_space<vmem>>, %arg14: memref<256x1xf32, #tpu.memory_space<vmem>>, %arg15: memref<256x1xf32, #tpu.memory_space<vmem>>, %arg16: memref<128x256xf32, #tpu.memory_space<vmem>>, %arg17: memref<128x1xf32, #tpu.memory_space<vmem>>, %arg18: memref<128x1xf32, #tpu.memory_space<vmem>>, %arg19: memref<4x128xf32, #tpu.memory_space<vmem>>, %arg20: memref<4x1xf32, #tpu.memory_space<vmem>>, %arg21: memref<4x256xf32, #tpu.memory_space<vmem>>, %arg22: memref<1x4x2xf32, #tpu.memory_space<vmem>>) attributes {dimension_semantics = [#tpu.dimension_semantics<parallel>], iteration_bounds = array<i64: 1>, scalar_prefetch = 0 : i64, scratch_operands = 0 : i64, tpu.core_type = #tpu.core_type<tc>, window_params = [{transform_indices = @transform_0, window_bounds = array<i64: 4, 256>}, {transform_indices = @transform_1, window_bounds = array<i64: 1, 3, 2>}, {pipeline_mode = #tpu.pipeline_mode<synchronous>, transform_indices = @transform_2, window_bounds = array<i64: 128, 4>}, {pipeline_mode = #tpu.pipeline_mode<synchronous>, transform_indices = @transform_3, window_bounds = array<i64: 128, 1>}, {pipeline_mode = #tpu.pipeline_mode<synchronous>, transform_indices = @transform_4, window_bounds = array<i64: 128, 1>}, {pipeline_mode = #tpu.pipeline_mode<synchronous>, transform_indices = @transform_5, window_bounds = array<i64: 128, 128>}, {pipeline_mode = #tpu.pipeline_mode<synchronous>, transform_indices = @transform_6, window_bounds = array<i64: 128, 1>}, {pipeline_mode = #tpu.pipeline_mode<synchronous>, transform_indices = @transform_7, window_bounds = array<i64: 128, 1>}, {pipeline_mode = #tpu.pipeline_mode<synchronous>, transform_indices = @transform_8, window_bounds = array<i64: 256, 128>}, {pipeline_mode = #tpu.pipeline_mode<synchronous>, transform_indices = @transform_9, window_bounds = array<i64: 256, 1>}, {pipeline_mode = #tpu.pipeline_mode<synchronous>, transform_indices = @transform_10, window_bounds = array<i64: 256, 1>}, {pipeline_mode = #tpu.pipeline_mode<synchronous>, transform_indices = @transform_11, window_bounds = array<i64: 256, 256>}, {pipeline_mode = #tpu.pipeline_mode<synchronous>, transform_indices = @transform_12, window_bounds = array<i64: 256, 3>}, {pipeline_mode = #tpu.pipeline_mode<synchronous>, transform_indices = @transform_13, window_bounds = array<i64: 256, 1>}, {pipeline_mode = #tpu.pipeline_mode<synchronous>, transform_indices = @transform_14, window_bounds = array<i64: 256, 1>}, {pipeline_mode = #tpu.pipeline_mode<synchronous>, transform_indices = @transform_15, window_bounds = array<i64: 128, 256>}, {pipeline_mode = #tpu.pipeline_mode<synchronous>, transform_indices = @transform_16, window_bounds = array<i64: 128, 1>}, {pipeline_mode = #tpu.pipeline_mode<synchronous>, transform_indices = @transform_17, window_bounds = array<i64: 128, 1>}, {pipeline_mode = #tpu.pipeline_mode<synchronous>, transform_indices = @transform_18, window_bounds = array<i64: 4, 128>}, {pipeline_mode = #tpu.pipeline_mode<synchronous>, transform_indices = @transform_19, window_bounds = array<i64: 4, 1>}, {transform_indices = @transform_20, window_bounds = array<i64: 4, 256>}, {transform_indices = @transform_21, window_bounds = array<i64: 1, 4, 2>}]} {
    %c0 = arith.constant 0 : index
    %c0_0 = arith.constant 0 : index
    %0 = vector.load %arg1[%c0, %c0_0] : memref<4x256xf32, #tpu.memory_space<vmem>>, vector<4x256xf32>
    %c0_1 = arith.constant 0 : index
    %c0_2 = arith.constant 0 : index
    %1 = vector.load %arg3[%c0_1, %c0_2] : memref<128x4xf32, #tpu.memory_space<vmem>>, vector<128x4xf32>
    %2 = vector.extract_strided_slice %1 {offsets = [0, 0], sizes = [128, 1], strides = [1, 1]} : vector<128x4xf32> to vector<128x1xf32>
    %3 = vector.extract_strided_slice %0 {offsets = [0, 0], sizes = [1, 256], strides = [1, 1]} : vector<4x256xf32> to vector<1x256xf32>
    %4 = vector.broadcast %2 : vector<128x1xf32> to vector<128x256xf32>
    %5 = vector.broadcast %3 : vector<1x256xf32> to vector<128x256xf32>
    %6 = arith.mulf %4, %5 : vector<128x256xf32>
    %7 = vector.extract_strided_slice %1 {offsets = [0, 1], sizes = [128, 1], strides = [1, 1]} : vector<128x4xf32> to vector<128x1xf32>
    %8 = vector.extract_strided_slice %0 {offsets = [1, 0], sizes = [1, 256], strides = [1, 1]} : vector<4x256xf32> to vector<1x256xf32>
    %9 = vector.broadcast %7 : vector<128x1xf32> to vector<128x256xf32>
    %10 = vector.broadcast %8 : vector<1x256xf32> to vector<128x256xf32>
    %11 = arith.mulf %9, %10 : vector<128x256xf32>
    %12 = arith.addf %6, %11 : vector<128x256xf32>
    %13 = vector.extract_strided_slice %1 {offsets = [0, 2], sizes = [128, 1], strides = [1, 1]} : vector<128x4xf32> to vector<128x1xf32>
    %14 = vector.extract_strided_slice %0 {offsets = [2, 0], sizes = [1, 256], strides = [1, 1]} : vector<4x256xf32> to vector<1x256xf32>
    %15 = vector.broadcast %13 : vector<128x1xf32> to vector<128x256xf32>
    %16 = vector.broadcast %14 : vector<1x256xf32> to vector<128x256xf32>
    %17 = arith.mulf %15, %16 : vector<128x256xf32>
    %18 = arith.addf %12, %17 : vector<128x256xf32>
    %19 = vector.extract_strided_slice %1 {offsets = [0, 3], sizes = [128, 1], strides = [1, 1]} : vector<128x4xf32> to vector<128x1xf32>
    %20 = vector.extract_strided_slice %0 {offsets = [3, 0], sizes = [1, 256], strides = [1, 1]} : vector<4x256xf32> to vector<1x256xf32>
    %21 = vector.broadcast %19 : vector<128x1xf32> to vector<128x256xf32>
    %22 = vector.broadcast %20 : vector<1x256xf32> to vector<128x256xf32>
    %23 = arith.mulf %21, %22 : vector<128x256xf32>
    %24 = arith.addf %18, %23 : vector<128x256xf32>
    %c0_3 = arith.constant 0 : index
    %c0_4 = arith.constant 0 : index
    %25 = vector.load %arg4[%c0_3, %c0_4] : memref<128x1xf32, #tpu.memory_space<vmem>>, vector<128x1xf32>
    %26 = vector.broadcast %25 : vector<128x1xf32> to vector<128x256xf32>
    %27 = arith.mulf %24, %26 : vector<128x256xf32>
    %c0_5 = arith.constant 0 : index
    %c0_6 = arith.constant 0 : index
    %28 = vector.load %arg5[%c0_5, %c0_6] : memref<128x1xf32, #tpu.memory_space<vmem>>, vector<128x1xf32>
    %29 = vector.broadcast %28 : vector<128x1xf32> to vector<128x256xf32>
    %30 = arith.addf %27, %29 : vector<128x256xf32>
    %cst = arith.constant 0.000000e+00 : f32
    %31 = vector.broadcast %cst : f32 to vector<128x256xf32>
    %32 = arith.maximumf %30, %31 : vector<128x256xf32>
    %c0_7 = arith.constant 0 : index
    %c0_8 = arith.constant 0 : index
    %33 = vector.load %arg6[%c0_7, %c0_8] : memref<128x128xbf16, #tpu.memory_space<vmem>>, vector<128x128xbf16>
    %34 = arith.truncf %32 : vector<128x256xf32> to vector<128x256xbf16>
    %cst_9 = arith.constant dense<0.000000e+00> : vector<128x256xf32>
    %35 = tpu.matmul %33, %34, %cst_9 {dimension_numbers = #tpu.dot_dimension_numbers<[1], [0], [0], [1], [0, 0, 1, 1], [], []>} : vector<128x128xbf16>, vector<128x256xbf16>, vector<128x256xf32> -> vector<128x256xf32>
    %c0_10 = arith.constant 0 : index
    %c0_11 = arith.constant 0 : index
    %36 = vector.load %arg7[%c0_10, %c0_11] : memref<128x1xf32, #tpu.memory_space<vmem>>, vector<128x1xf32>
    %37 = vector.broadcast %36 : vector<128x1xf32> to vector<128x256xf32>
    %38 = arith.mulf %35, %37 : vector<128x256xf32>
    %c0_12 = arith.constant 0 : index
    %c0_13 = arith.constant 0 : index
    %39 = vector.load %arg8[%c0_12, %c0_13] : memref<128x1xf32, #tpu.memory_space<vmem>>, vector<128x1xf32>
    %40 = vector.broadcast %39 : vector<128x1xf32> to vector<128x256xf32>
    %41 = arith.addf %38, %40 : vector<128x256xf32>
    %cst_14 = arith.constant 0.000000e+00 : f32
    %42 = vector.broadcast %cst_14 : f32 to vector<128x256xf32>
    %43 = arith.maximumf %41, %42 : vector<128x256xf32>
    %c0_15 = arith.constant 0 : index
    %c0_16 = arith.constant 0 : index
    %44 = vector.load %arg9[%c0_15, %c0_16] : memref<256x128xbf16, #tpu.memory_space<vmem>>, vector<256x128xbf16>
    %45 = arith.truncf %43 : vector<128x256xf32> to vector<128x256xbf16>
    %cst_17 = arith.constant dense<0.000000e+00> : vector<256x256xf32>
    %46 = tpu.matmul %44, %45, %cst_17 {dimension_numbers = #tpu.dot_dimension_numbers<[1], [0], [0], [1], [0, 0, 1, 1], [], []>} : vector<256x128xbf16>, vector<128x256xbf16>, vector<256x256xf32> -> vector<256x256xf32>
    %c0_18 = arith.constant 0 : index
    %c0_19 = arith.constant 0 : index
    %47 = vector.load %arg10[%c0_18, %c0_19] : memref<256x1xf32, #tpu.memory_space<vmem>>, vector<256x1xf32>
    %48 = vector.broadcast %47 : vector<256x1xf32> to vector<256x256xf32>
    %49 = arith.mulf %46, %48 : vector<256x256xf32>
    %c0_20 = arith.constant 0 : index
    %c0_21 = arith.constant 0 : index
    %50 = vector.load %arg11[%c0_20, %c0_21] : memref<256x1xf32, #tpu.memory_space<vmem>>, vector<256x1xf32>
    %51 = vector.broadcast %50 : vector<256x1xf32> to vector<256x256xf32>
    %52 = arith.addf %49, %51 : vector<256x256xf32>
    %cst_22 = arith.constant 0.000000e+00 : f32
    %53 = vector.broadcast %cst_22 : f32 to vector<256x256xf32>
    %54 = arith.maximumf %52, %53 : vector<256x256xf32>
    %55 = vector.extract_strided_slice %54 {offsets = [0, 0], sizes = [256, 128], strides = [1, 1]} : vector<256x256xf32> to vector<256x128xf32>
    %cst_23 = arith.constant dense<0xFF800000> : vector<256xf32>
    %56 = vector.multi_reduction <maximumf>, %55, %cst_23 [1] : vector<256x128xf32> to vector<256xf32>
    %57 = vector.shape_cast %56 : vector<256xf32> to vector<256x1xf32>
    %58 = vector.extract_strided_slice %54 {offsets = [0, 128], sizes = [256, 128], strides = [1, 1]} : vector<256x256xf32> to vector<256x128xf32>
    %cst_24 = arith.constant dense<0xFF800000> : vector<256xf32>
    %59 = vector.multi_reduction <maximumf>, %58, %cst_24 [1] : vector<256x128xf32> to vector<256xf32>
    %60 = vector.shape_cast %59 : vector<256xf32> to vector<256x1xf32>
    %61 = tpu.concatenate %57, %60 in 1 : vector<256x1xf32>, vector<256x1xf32> -> vector<256x2xf32>
    %c0_25 = arith.constant 0 : index
    %c0_26 = arith.constant 0 : index
    %c0_27 = arith.constant 0 : index
    %62 = vector.load %arg2[%c0_25, %c0_26, %c0_27] : memref<1x3x2xf32, #tpu.memory_space<vmem>>, vector<1x3x2xf32>
    %63 = vector.shape_cast %62 : vector<1x3x2xf32> to vector<3x2xf32>
    %c0_28 = arith.constant 0 : index
    %c0_29 = arith.constant 0 : index
    %64 = vector.load %arg13[%c0_28, %c0_29] : memref<256x3xf32, #tpu.memory_space<vmem>>, vector<256x3xf32>
    %c0_30 = arith.constant 0 : index
    %c0_31 = arith.constant 0 : index
    %65 = vector.load %arg12[%c0_30, %c0_31] : memref<256x256xf32, #tpu.memory_space<vmem>>, vector<256x256xf32>
    %cst_32 = arith.constant dense<0.000000e+00> : vector<256x2xf32>
    %66 = tpu.matmul %65, %61, %cst_32 {dimension_numbers = #tpu.dot_dimension_numbers<[1], [0], [0], [1], [0, 0, 1, 1], [], []>} : vector<256x256xf32>, vector<256x2xf32>, vector<256x2xf32> -> vector<256x2xf32>
    %67 = vector.extract_strided_slice %64 {offsets = [0, 0], sizes = [256, 1], strides = [1, 1]} : vector<256x3xf32> to vector<256x1xf32>
    %68 = vector.extract_strided_slice %63 {offsets = [0, 0], sizes = [1, 2], strides = [1, 1]} : vector<3x2xf32> to vector<1x2xf32>
    %69 = vector.broadcast %67 : vector<256x1xf32> to vector<256x2xf32>
    %70 = vector.broadcast %68 : vector<1x2xf32> to vector<256x2xf32>
    %71 = arith.mulf %69, %70 : vector<256x2xf32>
    %72 = arith.addf %66, %71 : vector<256x2xf32>
    %73 = vector.extract_strided_slice %64 {offsets = [0, 1], sizes = [256, 1], strides = [1, 1]} : vector<256x3xf32> to vector<256x1xf32>
    %74 = vector.extract_strided_slice %63 {offsets = [1, 0], sizes = [1, 2], strides = [1, 1]} : vector<3x2xf32> to vector<1x2xf32>
    %75 = vector.broadcast %73 : vector<256x1xf32> to vector<256x2xf32>
    %76 = vector.broadcast %74 : vector<1x2xf32> to vector<256x2xf32>
    %77 = arith.mulf %75, %76 : vector<256x2xf32>
    %78 = arith.addf %72, %77 : vector<256x2xf32>
    %79 = vector.extract_strided_slice %64 {offsets = [0, 2], sizes = [256, 1], strides = [1, 1]} : vector<256x3xf32> to vector<256x1xf32>
    %80 = vector.extract_strided_slice %63 {offsets = [2, 0], sizes = [1, 2], strides = [1, 1]} : vector<3x2xf32> to vector<1x2xf32>
    %81 = vector.broadcast %79 : vector<256x1xf32> to vector<256x2xf32>
    %82 = vector.broadcast %80 : vector<1x2xf32> to vector<256x2xf32>
    %83 = arith.mulf %81, %82 : vector<256x2xf32>
    %84 = arith.addf %78, %83 : vector<256x2xf32>
    %c0_33 = arith.constant 0 : index
    %c0_34 = arith.constant 0 : index
    %85 = vector.load %arg14[%c0_33, %c0_34] : memref<256x1xf32, #tpu.memory_space<vmem>>, vector<256x1xf32>
    %86 = vector.broadcast %85 : vector<256x1xf32> to vector<256x2xf32>
    %87 = arith.mulf %84, %86 : vector<256x2xf32>
    %c0_35 = arith.constant 0 : index
    %c0_36 = arith.constant 0 : index
    %88 = vector.load %arg15[%c0_35, %c0_36] : memref<256x1xf32, #tpu.memory_space<vmem>>, vector<256x1xf32>
    %89 = vector.broadcast %88 : vector<256x1xf32> to vector<256x2xf32>
    %90 = arith.addf %87, %89 : vector<256x2xf32>
    %cst_37 = arith.constant 0.000000e+00 : f32
    %91 = vector.broadcast %cst_37 : f32 to vector<256x2xf32>
    %92 = arith.maximumf %90, %91 : vector<256x2xf32>
    %c0_38 = arith.constant 0 : index
    %c0_39 = arith.constant 0 : index
    %93 = vector.load %arg16[%c0_38, %c0_39] : memref<128x256xf32, #tpu.memory_space<vmem>>, vector<128x256xf32>
    %cst_40 = arith.constant dense<0.000000e+00> : vector<128x2xf32>
    %94 = tpu.matmul %93, %92, %cst_40 {dimension_numbers = #tpu.dot_dimension_numbers<[1], [0], [0], [1], [0, 0, 1, 1], [], []>} : vector<128x256xf32>, vector<256x2xf32>, vector<128x2xf32> -> vector<128x2xf32>
    %c0_41 = arith.constant 0 : index
    %c0_42 = arith.constant 0 : index
    %95 = vector.load %arg17[%c0_41, %c0_42] : memref<128x1xf32, #tpu.memory_space<vmem>>, vector<128x1xf32>
    %96 = vector.broadcast %95 : vector<128x1xf32> to vector<128x2xf32>
    %97 = arith.mulf %94, %96 : vector<128x2xf32>
    %c0_43 = arith.constant 0 : index
    %c0_44 = arith.constant 0 : index
    %98 = vector.load %arg18[%c0_43, %c0_44] : memref<128x1xf32, #tpu.memory_space<vmem>>, vector<128x1xf32>
    %99 = vector.broadcast %98 : vector<128x1xf32> to vector<128x2xf32>
    %100 = arith.addf %97, %99 : vector<128x2xf32>
    %cst_45 = arith.constant 0.000000e+00 : f32
    %101 = vector.broadcast %cst_45 : f32 to vector<128x2xf32>
    %102 = arith.maximumf %100, %101 : vector<128x2xf32>
    %c0_46 = arith.constant 0 : index
    %c0_47 = arith.constant 0 : index
    %103 = vector.load %arg19[%c0_46, %c0_47] : memref<4x128xf32, #tpu.memory_space<vmem>>, vector<4x128xf32>
    %cst_48 = arith.constant dense<0.000000e+00> : vector<4x2xf32>
    %104 = tpu.matmul %103, %102, %cst_48 {dimension_numbers = #tpu.dot_dimension_numbers<[1], [0], [0], [1], [0, 0, 1, 1], [], []>} : vector<4x128xf32>, vector<128x2xf32>, vector<4x2xf32> -> vector<4x2xf32>
    %c0_49 = arith.constant 0 : index
    %c0_50 = arith.constant 0 : index
    %105 = vector.load %arg20[%c0_49, %c0_50] : memref<4x1xf32, #tpu.memory_space<vmem>>, vector<4x1xf32>
    %106 = vector.broadcast %105 : vector<4x1xf32> to vector<4x2xf32>
    %107 = arith.addf %104, %106 : vector<4x2xf32>
    %c0_51 = arith.constant 0 : index
    %c0_52 = arith.constant 0 : index
    %c0_53 = arith.constant 0 : index
    %108 = vector.load %arg22[%c0_51, %c0_52, %c0_53] : memref<1x4x2xf32, #tpu.memory_space<vmem>>, vector<1x4x2xf32>
    %109 = vector.shape_cast %108 : vector<1x4x2xf32> to vector<4x2xf32>
    %110 = vector.shape_cast %107 : vector<4x2xf32> to vector<1x4x2xf32>
    tpu.vector_store %arg22[%c0_51, %c0_52, %c0_53], %110 {strides = array<i32>} : memref<1x4x2xf32, #tpu.memory_space<vmem>>, vector<1x4x2xf32>,
    %111 = vector.extract_strided_slice %0 {offsets = [0, 0], sizes = [4, 128], strides = [1, 1]} : vector<4x256xf32> to vector<4x128xf32>
    %112 = vector.extract_strided_slice %107 {offsets = [0, 0], sizes = [4, 1], strides = [1, 1]} : vector<4x2xf32> to vector<4x1xf32>
    %113 = vector.broadcast %112 : vector<4x1xf32> to vector<4x128xf32>
    %114 = arith.subf %111, %113 : vector<4x128xf32>
    %c0_54 = arith.constant 0 : index
    %c0_55 = arith.constant 0 : index
    %115 = vector.load %arg21[%c0_54, %c0_55] : memref<4x256xf32, #tpu.memory_space<vmem>>, vector<4x128xf32>
    tpu.vector_store %arg21[%c0_54, %c0_55], %114 {strides = array<i32>} : memref<4x256xf32, #tpu.memory_space<vmem>>, vector<4x128xf32>,
    %116 = vector.extract_strided_slice %0 {offsets = [0, 128], sizes = [4, 128], strides = [1, 1]} : vector<4x256xf32> to vector<4x128xf32>
    %117 = vector.extract_strided_slice %107 {offsets = [0, 1], sizes = [4, 1], strides = [1, 1]} : vector<4x2xf32> to vector<4x1xf32>
    %118 = vector.broadcast %117 : vector<4x1xf32> to vector<4x128xf32>
    %119 = arith.subf %116, %118 : vector<4x128xf32>
    %c0_56 = arith.constant 0 : index
    %c128 = arith.constant 128 : index
    %120 = vector.load %arg21[%c0_56, %c128] : memref<4x256xf32, #tpu.memory_space<vmem>>, vector<4x128xf32>
    tpu.vector_store %arg21[%c0_56, %c128], %119 {strides = array<i32>} : memref<4x256xf32, #tpu.memory_space<vmem>>, vector<4x128xf32>,
    return
  }
  func.func @transform_0(%arg0: i32) -> (i32, i32) {
    %c0_i32 = arith.constant 0 : i32
    %c0_i32_0 = arith.constant 0 : i32
    return %c0_i32, %arg0 : i32, i32
  }
  func.func @transform_1(%arg0: i32) -> (i32, i32, i32) {
    %c0_i32 = arith.constant 0 : i32
    %c0_i32_0 = arith.constant 0 : i32
    %c0_i32_1 = arith.constant 0 : i32
    return %arg0, %c0_i32, %c0_i32_0 : i32, i32, i32
  }
  func.func @transform_2(%arg0: i32) -> (i32, i32) {
    %c0_i32 = arith.constant 0 : i32
    %c0_i32_0 = arith.constant 0 : i32
    %c0_i32_1 = arith.constant 0 : i32
    return %c0_i32, %c0_i32_0 : i32, i32
  }
  func.func @transform_3(%arg0: i32) -> (i32, i32) {
    %c0_i32 = arith.constant 0 : i32
    %c0_i32_0 = arith.constant 0 : i32
    %c0_i32_1 = arith.constant 0 : i32
    return %c0_i32, %c0_i32_0 : i32, i32
  }
  func.func @transform_4(%arg0: i32) -> (i32, i32) {
    %c0_i32 = arith.constant 0 : i32
    %c0_i32_0 = arith.constant 0 : i32
    %c0_i32_1 = arith.constant 0 : i32
    return %c0_i32, %c0_i32_0 : i32, i32
  }
  func.func @transform_5(%arg0: i32) -> (i32, i32) {
    %c0_i32 = arith.constant 0 : i32
    %c0_i32_0 = arith.constant 0 : i32
    %c0_i32_1 = arith.constant 0 : i32
    return %c0_i32, %c0_i32_0 : i32, i32
  }
  func.func @transform_6(%arg0: i32) -> (i32, i32) {
    %c0_i32 = arith.constant 0 : i32
    %c0_i32_0 = arith.constant 0 : i32
    %c0_i32_1 = arith.constant 0 : i32
    return %c0_i32, %c0_i32_0 : i32, i32
  }
  func.func @transform_7(%arg0: i32) -> (i32, i32) {
    %c0_i32 = arith.constant 0 : i32
    %c0_i32_0 = arith.constant 0 : i32
    %c0_i32_1 = arith.constant 0 : i32
    return %c0_i32, %c0_i32_0 : i32, i32
  }
  func.func @transform_8(%arg0: i32) -> (i32, i32) {
    %c0_i32 = arith.constant 0 : i32
    %c0_i32_0 = arith.constant 0 : i32
    %c0_i32_1 = arith.constant 0 : i32
    return %c0_i32, %c0_i32_0 : i32, i32
  }
  func.func @transform_9(%arg0: i32) -> (i32, i32) {
    %c0_i32 = arith.constant 0 : i32
    %c0_i32_0 = arith.constant 0 : i32
    %c0_i32_1 = arith.constant 0 : i32
    return %c0_i32, %c0_i32_0 : i32, i32
  }
  func.func @transform_10(%arg0: i32) -> (i32, i32) {
    %c0_i32 = arith.constant 0 : i32
    %c0_i32_0 = arith.constant 0 : i32
    %c0_i32_1 = arith.constant 0 : i32
    return %c0_i32, %c0_i32_0 : i32, i32
  }
  func.func @transform_11(%arg0: i32) -> (i32, i32) {
    %c0_i32 = arith.constant 0 : i32
    %c0_i32_0 = arith.constant 0 : i32
    %c0_i32_1 = arith.constant 0 : i32
    return %c0_i32, %c0_i32_0 : i32, i32
  }
  func.func @transform_12(%arg0: i32) -> (i32, i32) {
    %c0_i32 = arith.constant 0 : i32
    %c0_i32_0 = arith.constant 0 : i32
    %c0_i32_1 = arith.constant 0 : i32
    return %c0_i32, %c0_i32_0 : i32, i32
  }
  func.func @transform_13(%arg0: i32) -> (i32, i32) {
    %c0_i32 = arith.constant 0 : i32
    %c0_i32_0 = arith.constant 0 : i32
    %c0_i32_1 = arith.constant 0 : i32
    return %c0_i32, %c0_i32_0 : i32, i32
  }
  func.func @transform_14(%arg0: i32) -> (i32, i32) {
    %c0_i32 = arith.constant 0 : i32
    %c0_i32_0 = arith.constant 0 : i32
    %c0_i32_1 = arith.constant 0 : i32
    return %c0_i32, %c0_i32_0 : i32, i32
  }
  func.func @transform_15(%arg0: i32) -> (i32, i32) {
    %c0_i32 = arith.constant 0 : i32
    %c0_i32_0 = arith.constant 0 : i32
    %c0_i32_1 = arith.constant 0 : i32
    return %c0_i32, %c0_i32_0 : i32, i32
  }
  func.func @transform_16(%arg0: i32) -> (i32, i32) {
    %c0_i32 = arith.constant 0 : i32
    %c0_i32_0 = arith.constant 0 : i32
    %c0_i32_1 = arith.constant 0 : i32
    return %c0_i32, %c0_i32_0 : i32, i32
  }
  func.func @transform_17(%arg0: i32) -> (i32, i32) {
    %c0_i32 = arith.constant 0 : i32
    %c0_i32_0 = arith.constant 0 : i32
    %c0_i32_1 = arith.constant 0 : i32
    return %c0_i32, %c0_i32_0 : i32, i32
  }
  func.func @transform_18(%arg0: i32) -> (i32, i32) {
    %c0_i32 = arith.constant 0 : i32
    %c0_i32_0 = arith.constant 0 : i32
    %c0_i32_1 = arith.constant 0 : i32
    return %c0_i32, %c0_i32_0 : i32, i32
  }
  func.func @transform_19(%arg0: i32) -> (i32, i32) {
    %c0_i32 = arith.constant 0 : i32
    %c0_i32_0 = arith.constant 0 : i32
    %c0_i32_1 = arith.constant 0 : i32
    return %c0_i32, %c0_i32_0 : i32, i32
  }
  func.func @transform_20(%arg0: i32) -> (i32, i32) {
    %c0_i32 = arith.constant 0 : i32
    %c0_i32_0 = arith.constant 0 : i32
    return %c0_i32, %arg0 : i32, i32
  }
  func.func @transform_21(%arg0: i32) -> (i32, i32, i32) {
    %c0_i32 = arith.constant 0 : i32
    %c0_i32_0 = arith.constant 0 : i32
    %c0_i32_1 = arith.constant 0 : i32
    return %arg0, %c0_i32, %c0_i32_0 : i32, i32, i32
  }
}

</mosaic_0001>

<llo_original>
// kernel: _forward_arrays.1
$region0: #{_forward_arrays.1}
  #allocation0 [shape = 'u32[]', space=smem, size = 0x4, offset = 0x4, fixed_abs, tag = 'smem constant byte address 0x4 - core index']
  #allocation1 [shape = 'u32[144,128]{1,0:T(1,128)}', space=vmem, size = 0x12000, scoped, tag = 'internal scratch']
  %s0 = inlined_call_operand.vmem [shape: f32[4,256], index: 0, kind: input, shape index: {}]
  %s1 = inlined_call_operand.vmem [shape: f32[1,3,2], index: 1, kind: input, shape index: {}]
  %s2 = inlined_call_operand.vmem [shape: f32[128,4], index: 2, kind: input, shape index: {}]
  %s3 = inlined_call_operand.vmem [shape: f32[128,1], index: 3, kind: input, shape index: {}]
  %s4 = inlined_call_operand.vmem [shape: f32[128,1], index: 4, kind: input, shape index: {}]
  %s5 = inlined_call_operand.vmem [shape: bf16[128,128], index: 5, kind: input, shape index: {}]
  %s6 = inlined_call_operand.vmem [shape: f32[128,1], index: 6, kind: input, shape index: {}]
  %s7 = inlined_call_operand.vmem [shape: f32[128,1], index: 7, kind: input, shape index: {}]
  %s8 = inlined_call_operand.vmem [shape: bf16[256,128], index: 8, kind: input, shape index: {}]
  %s9 = inlined_call_operand.vmem [shape: f32[256,1], index: 9, kind: input, shape index: {}]
  %s10 = inlined_call_operand.vmem [shape: f32[256,1], index: 10, kind: input, shape index: {}]
  %s11 = inlined_call_operand.vmem [shape: f32[256,256], index: 11, kind: input, shape index: {}]
  %s12 = inlined_call_operand.vmem [shape: f32[256,3], index: 12, kind: input, shape index: {}]
  %s13 = inlined_call_operand.vmem [shape: f32[256,1], index: 13, kind: input, shape index: {}]
  %s14 = inlined_call_operand.vmem [shape: f32[256,1], index: 14, kind: input, shape index: {}]
  %s15 = inlined_call_operand.vmem [shape: f32[128,256], index: 15, kind: input, shape index: {}]
  %s16 = inlined_call_operand.vmem [shape: f32[128,1], index: 16, kind: input, shape index: {}]
  %s17 = inlined_call_operand.vmem [shape: f32[128,1], index: 17, kind: input, shape index: {}]
  %s18 = inlined_call_operand.vmem [shape: f32[4,128], index: 18, kind: input, shape index: {}]
  %s19 = inlined_call_operand.vmem [shape: f32[4,1], index: 19, kind: input, shape index: {}]
  %s20 = inlined_call_operand.hbm [shape: f32[4,256], index: 20, kind: output, shape index: {0}]
  %s21 = inlined_call_operand.vmem [shape: f32[1,4,2], index: 21, kind: output, shape index: {1}]
  %22 = xla_tuple %s20, %s21
  %s23 = sld [smem:[#allocation0]]
  $region98: #{_forward_arrays.1} parent=0
    _
  %s25 = ssub.s32 1, %s23
  %s26 = scalar_select 0, %s25, %s23
  $region1: #{_forward_arrays.1} parent=0
    #allocation2 [shape = 'u8[4096]{0}', space=vmem, size = 0x1000, scoped, tag = 'output window, operand 0, single buffered']
    #allocation3 [shape = 's32[1]{0}', space=sflag, size = 0x4, scoped, tag = 'scoped memory for _forward_arrays.1']
    %27 = vsyncpa [#allocation3], 0
    // Predicated region
    $region2: #{_forward_arrays.1} parent=1 // pred_check
      _
    $region3: #{_forward_arrays.1} parent=1 // pred_check_branch
      %29 = sbr.rel (0) target = $region5
    $region4: #{_forward_arrays.1} parent=1 // pred_region
      _
    $region5: #{_forward_arrays.1} parent=1 // pred_fallthru
      _
    // Predicated region
    $region6: #{_forward_arrays.1} parent=1 // pred_check
      _
    $region7: #{_forward_arrays.1} parent=1 // pred_check_branch
      %31 = sbr.rel (0) target = $region9
    $region8: #{_forward_arrays.1} parent=1 // pred_region
      _
    $region9: #{_forward_arrays.1} parent=1 // pred_fallthru
      _
    // Predicated region
    $region10: #{_forward_arrays.1} parent=1 // pred_check
      _
    $region11: #{_forward_arrays.1} parent=1 // pred_check_branch
      %33 = sbr.rel (0) target = $region13
    $region12: #{_forward_arrays.1} parent=1 // pred_region
      _
    $region13: #{_forward_arrays.1} parent=1 // pred_fallthru
      _
    // Predicated region
    $region14: #{_forward_arrays.1} parent=1 // pred_check
      _
    $region15: #{_forward_arrays.1} parent=1 // pred_check_branch
      %35 = sbr.rel (0) target = $region17
    $region16: #{_forward_arrays.1} parent=1 // pred_region
      _
    $region17: #{_forward_arrays.1} parent=1 // pred_fallthru
      _
    // Predicated region
    $region18: #{_forward_arrays.1} parent=1 // pred_check
      _
    $region19: #{_forward_arrays.1} parent=1 // pred_check_branch
      %37 = sbr.rel (0) target = $region21
    $region20: #{_forward_arrays.1} parent=1 // pred_region
      _
    $region21: #{_forward_arrays.1} parent=1 // pred_fallthru
      _
    // Predicated region
    $region22: #{_forward_arrays.1} parent=1 // pred_check
      _
    $region23: #{_forward_arrays.1} parent=1 // pred_check_branch
      %39 = sbr.rel (0) target = $region25
    $region24: #{_forward_arrays.1} parent=1 // pred_region
      _
    $region25: #{_forward_arrays.1} parent=1 // pred_fallthru
      _
    // Predicated region
    $region26: #{_forward_arrays.1} parent=1 // pred_check
      _
    $region27: #{_forward_arrays.1} parent=1 // pred_check_branch
      %41 = sbr.rel (0) target = $region29
    $region28: #{_forward_arrays.1} parent=1 // pred_region
      _
    $region29: #{_forward_arrays.1} parent=1 // pred_fallthru
      _
    // Predicated region
    $region30: #{_forward_arrays.1} parent=1 // pred_check
      _
    $region31: #{_forward_arrays.1} parent=1 // pred_check_branch
      %43 = sbr.rel (0) target = $region33
    $region32: #{_forward_arrays.1} parent=1 // pred_region
      _
    $region33: #{_forward_arrays.1} parent=1 // pred_fallthru
      _
    // Predicated region
    $region34: #{_forward_arrays.1} parent=1 // pred_check
      _
    $region35: #{_forward_arrays.1} parent=1 // pred_check_branch
      %45 = sbr.rel (0) target = $region37
    $region36: #{_forward_arrays.1} parent=1 // pred_region
      _
    $region37: #{_forward_arrays.1} parent=1 // pred_fallthru
      _
    // Predicated region
    $region38: #{_forward_arrays.1} parent=1 // pred_check
      _
    $region39: #{_forward_arrays.1} parent=1 // pred_check_branch
      %47 = sbr.rel (0) target = $region41
    $region40: #{_forward_arrays.1} parent=1 // pred_region
      _
    $region41: #{_forward_arrays.1} parent=1 // pred_fallthru
      _
    // Predicated region
    $region42: #{_forward_arrays.1} parent=1 // pred_check
      _
    $region43: #{_forward_arrays.1} parent=1 // pred_check_branch
      %49 = sbr.rel (0) target = $region45
    $region44: #{_forward_arrays.1} parent=1 // pred_region
      _
    $region45: #{_forward_arrays.1} parent=1 // pred_fallthru
      _
    // Predicated region
    $region46: #{_forward_arrays.1} parent=1 // pred_check
      _
    $region47: #{_forward_arrays.1} parent=1 // pred_check_branch
      %51 = sbr.rel (0) target = $region49
    $region48: #{_forward_arrays.1} parent=1 // pred_region
      _
    $region49: #{_forward_arrays.1} parent=1 // pred_fallthru
      _
    // Predicated region
    $region50: #{_forward_arrays.1} parent=1 // pred_check
      _
    $region51: #{_forward_arrays.1} parent=1 // pred_check_branch
      %53 = sbr.rel (0) target = $region53
    $region52: #{_forward_arrays.1} parent=1 // pred_region
      _
    $region53: #{_forward_arrays.1} parent=1 // pred_fallthru
      _
    // Predicated region
    $region54: #{_forward_arrays.1} parent=1 // pred_check
      _
    $region55: #{_forward_arrays.1} parent=1 // pred_check_branch
      %55 = sbr.rel (0) target = $region57
    $region56: #{_forward_arrays.1} parent=1 // pred_region
      _
    $region57: #{_forward_arrays.1} parent=1 // pred_fallthru
      _
    // Predicated region
    $region58: #{_forward_arrays.1} parent=1 // pred_check
      _
    $region59: #{_forward_arrays.1} parent=1 // pred_check_branch
      %57 = sbr.rel (0) target = $region61
    $region60: #{_forward_arrays.1} parent=1 // pred_region
      _
    $region61: #{_forward_arrays.1} parent=1 // pred_fallthru
      _
    // Predicated region
    $region62: #{_forward_arrays.1} parent=1 // pred_check
      _
    $region63: #{_forward_arrays.1} parent=1 // pred_check_branch
      %59 = sbr.rel (0) target = $region65
    $region64: #{_forward_arrays.1} parent=1 // pred_region
      _
    $region65: #{_forward_arrays.1} parent=1 // pred_fallthru
      _
    // Predicated region
    $region66: #{_forward_arrays.1} parent=1 // pred_check
      _
    $region67: #{_forward_arrays.1} parent=1 // pred_check_branch
      %61 = sbr.rel (0) target = $region69
    $region68: #{_forward_arrays.1} parent=1 // pred_region
      _
    $region69: #{_forward_arrays.1} parent=1 // pred_fallthru
      _
    // Predicated region
    $region70: #{_forward_arrays.1} parent=1 // pred_check
      _
    $region71: #{_forward_arrays.1} parent=1 // pred_check_branch
      %63 = sbr.rel (0) target = $region73
    $region72: #{_forward_arrays.1} parent=1 // pred_region
      _
    $region73: #{_forward_arrays.1} parent=1 // pred_fallthru
      _
    // Predicated region
    $region74: #{_forward_arrays.1} parent=1 // pred_check
      _
    $region75: #{_forward_arrays.1} parent=1 // pred_check_branch
      %65 = sbr.rel (0) target = $region77
    $region76: #{_forward_arrays.1} parent=1 // pred_region
      _
    $region77: #{_forward_arrays.1} parent=1 // pred_fallthru
      _
    // Predicated region
    $region78: #{_forward_arrays.1} parent=1 // pred_check
      _
    $region79: #{_forward_arrays.1} parent=1 // pred_check_branch
      %67 = sbr.rel (0) target = $region81
    $region80: #{_forward_arrays.1} parent=1 // pred_region
      _
    $region81: #{_forward_arrays.1} parent=1 // pred_fallthru
      _
    %v69 = vld [vmem:[%s0] sm:$0xff]
    %v70 = vld [vmem:[%s2] sm:$0xff]
    %v71 = vld [vmem:[%s2 + $0x8] sm:$0xff]
    %v72 = vld [vmem:[%s2 + $0x10] sm:$0xff]
    %v73 = vld [vmem:[%s2 + $0x18] sm:$0xff]
    %v74 = vld [vmem:[%s2 + $0x20] sm:$0xff]
    %v75 = vld [vmem:[%s2 + $0x28] sm:$0xff]
    %v76 = vld [vmem:[%s2 + $0x30] sm:$0xff]
    %v77 = vld [vmem:[%s2 + $0x38] sm:$0xff]
    %v78 = vld [vmem:[%s2 + $0x40] sm:$0xff]
    %v79 = vld [vmem:[%s2 + $0x48] sm:$0xff]
    %v80 = vld [vmem:[%s2 + $0x50] sm:$0xff]
    %v81 = vld [vmem:[%s2 + $0x58] sm:$0xff]
    %v82 = vld [vmem:[%s2 + $0x60] sm:$0xff]
    %v83 = vld [vmem:[%s2 + $0x68] sm:$0xff]
    %v84 = vld [vmem:[%s2 + $0x70] sm:$0xff]
    %v85 = vld [vmem:[%s2 + $0x78] sm:$0xff]
    %87 = vset.pattern.permute.xlu0 0
    %88 = vperm.xlu0 %87, %v70
    %v89 = vpop.permute.xlu0 %88
    %92 = vset.pattern.permute.xlu0 0
    %93 = vperm.xlu0 %92, %v71
    %v94 = vpop.permute.xlu0 %93
    %97 = vset.pattern.permute.xlu0 0
    %98 = vperm.xlu0 %97, %v72
    %v99 = vpop.permute.xlu0 %98
    %102 = vset.pattern.permute.xlu0 0
    %103 = vperm.xlu0 %102, %v73
    %v104 = vpop.permute.xlu0 %103
    %107 = vset.pattern.permute.xlu0 0
    %108 = vperm.xlu0 %107, %v74
    %v109 = vpop.permute.xlu0 %108
    %112 = vset.pattern.permute.xlu0 0
    %113 = vperm.xlu0 %112, %v75
    %v114 = vpop.permute.xlu0 %113
    %117 = vset.pattern.permute.xlu0 0
    %118 = vperm.xlu0 %117, %v76
    %v119 = vpop.permute.xlu0 %118
    %122 = vset.pattern.permute.xlu0 0
    %123 = vperm.xlu0 %122, %v77
    %v124 = vpop.permute.xlu0 %123
    %127 = vset.pattern.permute.xlu0 0
    %128 = vperm.xlu0 %127, %v78
    %v129 = vpop.permute.xlu0 %128
    %132 = vset.pattern.permute.xlu0 0
    %133 = vperm.xlu0 %132, %v79
    %v134 = vpop.permute.xlu0 %133
    %137 = vset.pattern.permute.xlu0 0
    %138 = vperm.xlu0 %137, %v80
    %v139 = vpop.permute.xlu0 %138
    %142 = vset.pattern.permute.xlu0 0
    %143 = vperm.xlu0 %142, %v81
    %v144 = vpop.permute.xlu0 %143
    %147 = vset.pattern.permute.xlu0 0
    %148 = vperm.xlu0 %147, %v82
    %v149 = vpop.permute.xlu0 %148
    %152 = vset.pattern.permute.xlu0 0
    %153 = vperm.xlu0 %152, %v83
    %v154 = vpop.permute.xlu0 %153
    %157 = vset.pattern.permute.xlu0 0
    %158 = vperm.xlu0 %157, %v84
    %v159 = vpop.permute.xlu0 %158
    %162 = vset.pattern.permute.xlu0 0
    %163 = vperm.xlu0 %162, %v85
    %v164 = vpop.permute.xlu0 %163
    %v167 = vlaneseq
    %v168 = vshrl.u32 %v167, 7
    %v169 = vsub.s32 0, %v168
    %v170 = vrot.slane %v69, %v169
    %v171 = vlaneseq
    %v172 = vshrl.u32 %v171, 7
    %v173 = vsub.s32 4, %v172
    %v174 = vrot.slane %v69, %v173
    %v177 = vlaneseq
    %v178 = vshrl.u32 %v177, 7
    %v179 = vsub.s32 0, %v178
    %v180 = vrot.slane %v170, %v179
    %v181 = vlaneseq
    %v182 = vshrl.u32 %v181, 7
    %v183 = vsub.s32 0, %v182
    %v184 = vrot.slane %v174, %v183
    %v185 = vmul.f32 %v89, %v180
    %v186 = vmul.f32 %v89, %v184
    %v187 = vmul.f32 %v94, %v180
    %v188 = vmul.f32 %v94, %v184
    %v189 = vmul.f32 %v99, %v180
    %v190 = vmul.f32 %v99, %v184
    %v191 = vmul.f32 %v104, %v180
    %v192 = vmul.f32 %v104, %v184
    %v193 = vmul.f32 %v109, %v180
    %v194 = vmul.f32 %v109, %v184
    %v195 = vmul.f32 %v114, %v180
    %v196 = vmul.f32 %v114, %v184
    %v197 = vmul.f32 %v119, %v180
    %v198 = vmul.f32 %v119, %v184
    %v199 = vmul.f32 %v124, %v180
    %v200 = vmul.f32 %v124, %v184
    %v201 = vmul.f32 %v129, %v180
    %v202 = vmul.f32 %v129, %v184
    %v203 = vmul.f32 %v134, %v180
    %v204 = vmul.f32 %v134, %v184
    %v205 = vmul.f32 %v139, %v180
    %v206 = vmul.f32 %v139, %v184
    %v207 = vmul.f32 %v144, %v180
    %v208 = vmul.f32 %v144, %v184
    %v209 = vmul.f32 %v149, %v180
    %v210 = vmul.f32 %v149, %v184
    %v211 = vmul.f32 %v154, %v180
    %v212 = vmul.f32 %v154, %v184
    %v213 = vmul.f32 %v159, %v180
    %v214 = vmul.f32 %v159, %v184
    %v215 = vmul.f32 %v164, %v180
    %v216 = vmul.f32 %v164, %v184
    %217 = vset.pattern.permute.xlu0 1
    %218 = vperm.xlu0 %217, %v70
    %v219 = vpop.permute.xlu0 %218
    %221 = vset.pattern.permute.xlu0 1
    %222 = vperm.xlu0 %221, %v71
    %v223 = vpop.permute.xlu0 %222
    %225 = vset.pattern.permute.xlu0 1
    %226 = vperm.xlu0 %225, %v72
    %v227 = vpop.permute.xlu0 %226
    %229 = vset.pattern.permute.xlu0 1
    %230 = vperm.xlu0 %229, %v73
    %v231 = vpop.permute.xlu0 %230
    %233 = vset.pattern.permute.xlu0 1
    %234 = vperm.xlu0 %233, %v74
    %v235 = vpop.permute.xlu0 %234
    %237 = vset.pattern.permute.xlu0 1
    %238 = vperm.xlu0 %237, %v75
    %v239 = vpop.permute.xlu0 %238
    %241 = vset.pattern.permute.xlu0 1
    %242 = vperm.xlu0 %241, %v76
    %v243 = vpop.permute.xlu0 %242
    %245 = vset.pattern.permute.xlu0 1
    %246 = vperm.xlu0 %245, %v77
    %v247 = vpop.permute.xlu0 %246
    %249 = vset.pattern.permute.xlu0 1
    %250 = vperm.xlu0 %249, %v78
    %v251 = vpop.permute.xlu0 %250
    %253 = vset.pattern.permute.xlu0 1
    %254 = vperm.xlu0 %253, %v79
    %v255 = vpop.permute.xlu0 %254
    %257 = vset.pattern.permute.xlu0 1
    %258 = vperm.xlu0 %257, %v80
    %v259 = vpop.permute.xlu0 %258
    %261 = vset.pattern.permute.xlu0 1
    %262 = vperm.xlu0 %261, %v81
    %v263 = vpop.permute.xlu0 %262
    %265 = vset.pattern.permute.xlu0 1
    %266 = vperm.xlu0 %265, %v82
    %v267 = vpop.permute.xlu0 %266
    %269 = vset.pattern.permute.xlu0 1
    %270 = vperm.xlu0 %269, %v83
    %v271 = vpop.permute.xlu0 %270
    %273 = vset.pattern.permute.xlu0 1
    %274 = vperm.xlu0 %273, %v84
    %v275 = vpop.permute.xlu0 %274
    %277 = vset.pattern.permute.xlu0 1
    %278 = vperm.xlu0 %277, %v85
    %v279 = vpop.permute.xlu0 %278
    %v281 = vlaneseq
    %v282 = vshrl.u32 %v281, 7
    %v283 = vsub.s32 1, %v282
    %v284 = vrot.slane %v69, %v283
    %v285 = vlaneseq
    %v286 = vshrl.u32 %v285, 7
    %v287 = vsub.s32 5, %v286
    %v288 = vrot.slane %v69, %v287
    %v291 = vlaneseq
    %v292 = vshrl.u32 %v291, 7
    %v293 = vsub.s32 1, %v292
    %v294 = vrot.slane %v284, %v293
    %v295 = vlaneseq
    %v296 = vshrl.u32 %v295, 7
    %v297 = vsub.s32 1, %v296
    %v298 = vrot.slane %v288, %v297
    %v299 = vmul.f32 %v219, %v294
    %v300 = vmul.f32 %v219, %v298
    %v301 = vmul.f32 %v223, %v294
    %v302 = vmul.f32 %v223, %v298
    %v303 = vmul.f32 %v227, %v294
    %v304 = vmul.f32 %v227, %v298
    %v305 = vmul.f32 %v231, %v294
    %v306 = vmul.f32 %v231, %v298
    %v307 = vmul.f32 %v235, %v294
    %v308 = vmul.f32 %v235, %v298
    %v309 = vmul.f32 %v239, %v294
    %v310 = vmul.f32 %v239, %v298
    %v311 = vmul.f32 %v243, %v294
    %v312 = vmul.f32 %v243, %v298
    %v313 = vmul.f32 %v247, %v294
    %v314 = vmul.f32 %v247, %v298
    %v315 = vmul.f32 %v251, %v294
    %v316 = vmul.f32 %v251, %v298
    %v317 = vmul.f32 %v255, %v294
    %v318 = vmul.f32 %v255, %v298
    %v319 = vmul.f32 %v259, %v294
    %v320 = vmul.f32 %v259, %v298
    %v321 = vmul.f32 %v263, %v294
    %v322 = vmul.f32 %v263, %v298
    %v323 = vmul.f32 %v267, %v294
    %v324 = vmul.f32 %v267, %v298
    %v325 = vmul.f32 %v271, %v294
    %v326 = vmul.f32 %v271, %v298
    %v327 = vmul.f32 %v275, %v294
    %v328 = vmul.f32 %v275, %v298
    %v329 = vmul.f32 %v279, %v294
    %v330 = vmul.f32 %v279, %v298
    %v331 = vadd.f32 %v185, %v299
    %v332 = vadd.f32 %v186, %v300
    %v333 = vadd.f32 %v187, %v301
    %v334 = vadd.f32 %v188, %v302
    %v335 = vadd.f32 %v189, %v303
    %v336 = vadd.f32 %v190, %v304
    %v337 = vadd.f32 %v191, %v305
    %v338 = vadd.f32 %v192, %v306
    %v339 = vadd.f32 %v193, %v307
    %v340 = vadd.f32 %v194, %v308
    %v341 = vadd.f32 %v195, %v309
    %v342 = vadd.f32 %v196, %v310
    %v343 = vadd.f32 %v197, %v311
    %v344 = vadd.f32 %v198, %v312
    %v345 = vadd.f32 %v199, %v313
    %v346 = vadd.f32 %v200, %v314
    %v347 = vadd.f32 %v201, %v315
    %v348 = vadd.f32 %v202, %v316
    %v349 = vadd.f32 %v203, %v317
    %v350 = vadd.f32 %v204, %v318
    %v351 = vadd.f32 %v205, %v319
    %v352 = vadd.f32 %v206, %v320
    %v353 = vadd.f32 %v207, %v321
    %v354 = vadd.f32 %v208, %v322
    %v355 = vadd.f32 %v209, %v323
    %v356 = vadd.f32 %v210, %v324
    %v357 = vadd.f32 %v211, %v325
    %v358 = vadd.f32 %v212, %v326
    %v359 = vadd.f32 %v213, %v327
    %v360 = vadd.f32 %v214, %v328
    %v361 = vadd.f32 %v215, %v329
    %v362 = vadd.f32 %v216, %v330
    %363 = vset.pattern.permute.xlu0 2
    %364 = vperm.xlu0 %363, %v70
    %v365 = vpop.permute.xlu0 %364
    %367 = vset.pattern.permute.xlu0 2
    %368 = vperm.xlu0 %367, %v71
    %v369 = vpop.permute.xlu0 %368
    %371 = vset.pattern.permute.xlu0 2
    %372 = vperm.xlu0 %371, %v72
    %v373 = vpop.permute.xlu0 %372
    %375 = vset.pattern.permute.xlu0 2
    %376 = vperm.xlu0 %375, %v73
    %v377 = vpop.permute.xlu0 %376
    %379 = vset.pattern.permute.xlu0 2
    %380 = vperm.xlu0 %379, %v74
    %v381 = vpop.permute.xlu0 %380
    %383 = vset.pattern.permute.xlu0 2
    %384 = vperm.xlu0 %383, %v75
    %v385 = vpop.permute.xlu0 %384
    %387 = vset.pattern.permute.xlu0 2
    %388 = vperm.xlu0 %387, %v76
    %v389 = vpop.permute.xlu0 %388
    %391 = vset.pattern.permute.xlu0 2
    %392 = vperm.xlu0 %391, %v77
    %v393 = vpop.permute.xlu0 %392
    %395 = vset.pattern.permute.xlu0 2
    %396 = vperm.xlu0 %395, %v78
    %v397 = vpop.permute.xlu0 %396
    %399 = vset.pattern.permute.xlu0 2
    %400 = vperm.xlu0 %399, %v79
    %v401 = vpop.permute.xlu0 %400
    %403 = vset.pattern.permute.xlu0 2
    %404 = vperm.xlu0 %403, %v80
    %v405 = vpop.permute.xlu0 %404
    %407 = vset.pattern.permute.xlu0 2
    %408 = vperm.xlu0 %407, %v81
    %v409 = vpop.permute.xlu0 %408
    %411 = vset.pattern.permute.xlu0 2
    %412 = vperm.xlu0 %411, %v82
    %v413 = vpop.permute.xlu0 %412
    %415 = vset.pattern.permute.xlu0 2
    %416 = vperm.xlu0 %415, %v83
    %v417 = vpop.permute.xlu0 %416
    %419 = vset.pattern.permute.xlu0 2
    %420 = vperm.xlu0 %419, %v84
    %v421 = vpop.permute.xlu0 %420
    %423 = vset.pattern.permute.xlu0 2
    %424 = vperm.xlu0 %423, %v85
    %v425 = vpop.permute.xlu0 %424
    %v427 = vlaneseq
    %v428 = vshrl.u32 %v427, 7
    %v429 = vsub.s32 2, %v428
    %v430 = vrot.slane %v69, %v429
    %v431 = vlaneseq
    %v432 = vshrl.u32 %v431, 7
    %v433 = vsub.s32 6, %v432
    %v434 = vrot.slane %v69, %v433
    %v437 = vlaneseq
    %v438 = vshrl.u32 %v437, 7
    %v439 = vsub.s32 2, %v438
    %v440 = vrot.slane %v430, %v439
    %v441 = vlaneseq
    %v442 = vshrl.u32 %v441, 7
    %v443 = vsub.s32 2, %v442
    %v444 = vrot.slane %v434, %v443
    %v445 = vmul.f32 %v365, %v440
    %v446 = vmul.f32 %v365, %v444
    %v447 = vmul.f32 %v369, %v440
    %v448 = vmul.f32 %v369, %v444
    %v449 = vmul.f32 %v373, %v440
    %v450 = vmul.f32 %v373, %v444
    %v451 = vmul.f32 %v377, %v440
    %v452 = vmul.f32 %v377, %v444
    %v453 = vmul.f32 %v381, %v440
    %v454 = vmul.f32 %v381, %v444
    %v455 = vmul.f32 %v385, %v440
    %v456 = vmul.f32 %v385, %v444
    %v457 = vmul.f32 %v389, %v440
    %v458 = vmul.f32 %v389, %v444
    %v459 = vmul.f32 %v393, %v440
    %v460 = vmul.f32 %v393, %v444
    %v461 = vmul.f32 %v397, %v440
    %v462 = vmul.f32 %v397, %v444
    %v463 = vmul.f32 %v401, %v440
    %v464 = vmul.f32 %v401, %v444
    %v465 = vmul.f32 %v405, %v440
    %v466 = vmul.f32 %v405, %v444
    %v467 = vmul.f32 %v409, %v440
    %v468 = vmul.f32 %v409, %v444
    %v469 = vmul.f32 %v413, %v440
    %v470 = vmul.f32 %v413, %v444
    %v471 = vmul.f32 %v417, %v440
    %v472 = vmul.f32 %v417, %v444
    %v473 = vmul.f32 %v421, %v440
    %v474 = vmul.f32 %v421, %v444
    %v475 = vmul.f32 %v425, %v440
    %v476 = vmul.f32 %v425, %v444
    %v477 = vadd.f32 %v331, %v445
    %v478 = vadd.f32 %v332, %v446
    %v479 = vadd.f32 %v333, %v447
    %v480 = vadd.f32 %v334, %v448
    %v481 = vadd.f32 %v335, %v449
    %v482 = vadd.f32 %v336, %v450
    %v483 = vadd.f32 %v337, %v451
    %v484 = vadd.f32 %v338, %v452
    %v485 = vadd.f32 %v339, %v453
    %v486 = vadd.f32 %v340, %v454
    %v487 = vadd.f32 %v341, %v455
    %v488 = vadd.f32 %v342, %v456
    %v489 = vadd.f32 %v343, %v457
    %v490 = vadd.f32 %v344, %v458
    %v491 = vadd.f32 %v345, %v459
    %v492 = vadd.f32 %v346, %v460
    %v493 = vadd.f32 %v347, %v461
    %v494 = vadd.f32 %v348, %v462
    %v495 = vadd.f32 %v349, %v463
    %v496 = vadd.f32 %v350, %v464
    %v497 = vadd.f32 %v351, %v465
    %v498 = vadd.f32 %v352, %v466
    %v499 = vadd.f32 %v353, %v467
    %v500 = vadd.f32 %v354, %v468
    %v501 = vadd.f32 %v355, %v469
    %v502 = vadd.f32 %v356, %v470
    %v503 = vadd.f32 %v357, %v471
    %v504 = vadd.f32 %v358, %v472
    %v505 = vadd.f32 %v359, %v473
    %v506 = vadd.f32 %v360, %v474
    %v507 = vadd.f32 %v361, %v475
    %v508 = vadd.f32 %v362, %v476
    %509 = vset.pattern.permute.xlu0 3
    %510 = vperm.xlu0 %509, %v70
    %v511 = vpop.permute.xlu0 %510
    %513 = vset.pattern.permute.xlu0 3
    %514 = vperm.xlu0 %513, %v71
    %v515 = vpop.permute.xlu0 %514
    %517 = vset.pattern.permute.xlu0 3
    %518 = vperm.xlu0 %517, %v72
    %v519 = vpop.permute.xlu0 %518
    %521 = vset.pattern.permute.xlu0 3
    %522 = vperm.xlu0 %521, %v73
    %v523 = vpop.permute.xlu0 %522
    %525 = vset.pattern.permute.xlu0 3
    %526 = vperm.xlu0 %525, %v74
    %v527 = vpop.permute.xlu0 %526
    %529 = vset.pattern.permute.xlu0 3
    %530 = vperm.xlu0 %529, %v75
    %v531 = vpop.permute.xlu0 %530
    %533 = vset.pattern.permute.xlu0 3
    %534 = vperm.xlu0 %533, %v76
    %v535 = vpop.permute.xlu0 %534
    %537 = vset.pattern.permute.xlu0 3
    %538 = vperm.xlu0 %537, %v77
    %v539 = vpop.permute.xlu0 %538
    %541 = vset.pattern.permute.xlu0 3
    %542 = vperm.xlu0 %541, %v78
    %v543 = vpop.permute.xlu0 %542
    %545 = vset.pattern.permute.xlu0 3
    %546 = vperm.xlu0 %545, %v79
    %v547 = vpop.permute.xlu0 %546
    %549 = vset.pattern.permute.xlu0 3
    %550 = vperm.xlu0 %549, %v80
    %v551 = vpop.permute.xlu0 %550
    %553 = vset.pattern.permute.xlu0 3
    %554 = vperm.xlu0 %553, %v81
    %v555 = vpop.permute.xlu0 %554
    %557 = vset.pattern.permute.xlu0 3
    %558 = vperm.xlu0 %557, %v82
    %v559 = vpop.permute.xlu0 %558
    %561 = vset.pattern.permute.xlu0 3
    %562 = vperm.xlu0 %561, %v83
    %v563 = vpop.permute.xlu0 %562
    %565 = vset.pattern.permute.xlu0 3
    %566 = vperm.xlu0 %565, %v84
    %v567 = vpop.permute.xlu0 %566
    %569 = vset.pattern.permute.xlu0 3
    %570 = vperm.xlu0 %569, %v85
    %v571 = vpop.permute.xlu0 %570
    %v573 = vlaneseq
    %v574 = vshrl.u32 %v573, 7
    %v575 = vsub.s32 3, %v574
    %v576 = vrot.slane %v69, %v575
    %v577 = vlaneseq
    %v578 = vshrl.u32 %v577, 7
    %v579 = vsub.s32 7, %v578
    %v580 = vrot.slane %v69, %v579
    %v583 = vlaneseq
    %v584 = vshrl.u32 %v583, 7
    %v585 = vsub.s32 3, %v584
    %v586 = vrot.slane %v576, %v585
    %v587 = vlaneseq
    %v588 = vshrl.u32 %v587, 7
    %v589 = vsub.s32 3, %v588
    %v590 = vrot.slane %v580, %v589
    %v591 = vmul.f32 %v511, %v586
    %v592 = vmul.f32 %v511, %v590
    %v593 = vmul.f32 %v515, %v586
    %v594 = vmul.f32 %v515, %v590
    %v595 = vmul.f32 %v519, %v586
    %v596 = vmul.f32 %v519, %v590
    %v597 = vmul.f32 %v523, %v586
    %v598 = vmul.f32 %v523, %v590
    %v599 = vmul.f32 %v527, %v586
    %v600 = vmul.f32 %v527, %v590
    %v601 = vmul.f32 %v531, %v586
    %v602 = vmul.f32 %v531, %v590
    %v603 = vmul.f32 %v535, %v586
    %v604 = vmul.f32 %v535, %v590
    %v605 = vmul.f32 %v539, %v586
    %v606 = vmul.f32 %v539, %v590
    %v607 = vmul.f32 %v543, %v586
    %v608 = vmul.f32 %v543, %v590
    %v609 = vmul.f32 %v547, %v586
    %v610 = vmul.f32 %v547, %v590
    %v611 = vmul.f32 %v551, %v586
    %v612 = vmul.f32 %v551, %v590
    %v613 = vmul.f32 %v555, %v586
    %v614 = vmul.f32 %v555, %v590
    %v615 = vmul.f32 %v559, %v586
    %v616 = vmul.f32 %v559, %v590
    %v617 = vmul.f32 %v563, %v586
    %v618 = vmul.f32 %v563, %v590
    %v619 = vmul.f32 %v567, %v586
    %v620 = vmul.f32 %v567, %v590
    %v621 = vmul.f32 %v571, %v586
    %v622 = vmul.f32 %v571, %v590
    %v623 = vadd.f32 %v477, %v591
    %v624 = vadd.f32 %v478, %v592
    %v625 = vadd.f32 %v479, %v593
    %v626 = vadd.f32 %v480, %v594
    %v627 = vadd.f32 %v481, %v595
    %v628 = vadd.f32 %v482, %v596
    %v629 = vadd.f32 %v483, %v597
    %v630 = vadd.f32 %v484, %v598
    %v631 = vadd.f32 %v485, %v599
    %v632 = vadd.f32 %v486, %v600
    %v633 = vadd.f32 %v487, %v601
    %v634 = vadd.f32 %v488, %v602
    %v635 = vadd.f32 %v489, %v603
    %v636 = vadd.f32 %v490, %v604
    %v637 = vadd.f32 %v491, %v605
    %v638 = vadd.f32 %v492, %v606
    %v639 = vadd.f32 %v493, %v607
    %v640 = vadd.f32 %v494, %v608
    %v641 = vadd.f32 %v495, %v609
    %v642 = vadd.f32 %v496, %v610
    %v643 = vadd.f32 %v497, %v611
    %v644 = vadd.f32 %v498, %v612
    %v645 = vadd.f32 %v499, %v613
    %v646 = vadd.f32 %v500, %v614
    %v647 = vadd.f32 %v501, %v615
    %v648 = vadd.f32 %v502, %v616
    %v649 = vadd.f32 %v503, %v617
    %v650 = vadd.f32 %v504, %v618
    %v651 = vadd.f32 %v505, %v619
    %v652 = vadd.f32 %v506, %v620
    %v653 = vadd.f32 %v507, %v621
    %v654 = vadd.f32 %v508, %v622
    %v655 = vld [vmem:[%s3] sm:$0xff]
    %v656 = vld [vmem:[%s3 + $0x8] sm:$0xff]
    %v657 = vld [vmem:[%s3 + $0x10] sm:$0xff]
    %v658 = vld [vmem:[%s3 + $0x18] sm:$0xff]
    %v659 = vld [vmem:[%s3 + $0x20] sm:$0xff]
    %v660 = vld [vmem:[%s3 + $0x28] sm:$0xff]
    %v661 = vld [vmem:[%s3 + $0x30] sm:$0xff]
    %v662 = vld [vmem:[%s3 + $0x38] sm:$0xff]
    %v663 = vld [vmem:[%s3 + $0x40] sm:$0xff]
    %v664 = vld [vmem:[%s3 + $0x48] sm:$0xff]
    %v665 = vld [vmem:[%s3 + $0x50] sm:$0xff]
    %v666 = vld [vmem:[%s3 + $0x58] sm:$0xff]
    %v667 = vld [vmem:[%s3 + $0x60] sm:$0xff]
    %v668 = vld [vmem:[%s3 + $0x68] sm:$0xff]
    %v669 = vld [vmem:[%s3 + $0x70] sm:$0xff]
    %v670 = vld [vmem:[%s3 + $0x78] sm:$0xff]
    %672 = vset.pattern.permute.xlu0 0
    %673 = vperm.xlu0 %672, %v655
    %v674 = vpop.permute.xlu0 %673
    %677 = vset.pattern.permute.xlu0 0
    %678 = vperm.xlu0 %677, %v656
    %v679 = vpop.permute.xlu0 %678
    %682 = vset.pattern.permute.xlu0 0
    %683 = vperm.xlu0 %682, %v657
    %v684 = vpop.permute.xlu0 %683
    %687 = vset.pattern.permute.xlu0 0
    %688 = vperm.xlu0 %687, %v658
    %v689 = vpop.permute.xlu0 %688
    %692 = vset.pattern.permute.xlu0 0
    %693 = vperm.xlu0 %692, %v659
    %v694 = vpop.permute.xlu0 %693
    %697 = vset.pattern.permute.xlu0 0
    %698 = vperm.xlu0 %697, %v660
    %v699 = vpop.permute.xlu0 %698
    %702 = vset.pattern.permute.xlu0 0
    %703 = vperm.xlu0 %702, %v661
    %v704 = vpop.permute.xlu0 %703
    %707 = vset.pattern.permute.xlu0 0
    %708 = vperm.xlu0 %707, %v662
    %v709 = vpop.permute.xlu0 %708
    %712 = vset.pattern.permute.xlu0 0
    %713 = vperm.xlu0 %712, %v663
    %v714 = vpop.permute.xlu0 %713
    %717 = vset.pattern.permute.xlu0 0
    %718 = vperm.xlu0 %717, %v664
    %v719 = vpop.permute.xlu0 %718
    %722 = vset.pattern.permute.xlu0 0
    %723 = vperm.xlu0 %722, %v665
    %v724 = vpop.permute.xlu0 %723
    %727 = vset.pattern.permute.xlu0 0
    %728 = vperm.xlu0 %727, %v666
    %v729 = vpop.permute.xlu0 %728
    %732 = vset.pattern.permute.xlu0 0
    %733 = vperm.xlu0 %732, %v667
    %v734 = vpop.permute.xlu0 %733
    %737 = vset.pattern.permute.xlu0 0
    %738 = vperm.xlu0 %737, %v668
    %v739 = vpop.permute.xlu0 %738
    %742 = vset.pattern.permute.xlu0 0
    %743 = vperm.xlu0 %742, %v669
    %v744 = vpop.permute.xlu0 %743
    %747 = vset.pattern.permute.xlu0 0
    %748 = vperm.xlu0 %747, %v670
    %v749 = vpop.permute.xlu0 %748
    %v751 = vmul.f32 %v623, %v674
    %v752 = vmul.f32 %v624, %v674
    %v753 = vmul.f32 %v625, %v679
    %v754 = vmul.f32 %v626, %v679
    %v755 = vmul.f32 %v627, %v684
    %v756 = vmul.f32 %v628, %v684
    %v757 = vmul.f32 %v629, %v689
    %v758 = vmul.f32 %v630, %v689
    %v759 = vmul.f32 %v631, %v694
    %v760 = vmul.f32 %v632, %v694
    %v761 = vmul.f32 %v633, %v699
    %v762 = vmul.f32 %v634, %v699
    %v763 = vmul.f32 %v635, %v704
    %v764 = vmul.f32 %v636, %v704
    %v765 = vmul.f32 %v637, %v709
    %v766 = vmul.f32 %v638, %v709
    %v767 = vmul.f32 %v639, %v714
    %v768 = vmul.f32 %v640, %v714
    %v769 = vmul.f32 %v641, %v719
    %v770 = vmul.f32 %v642, %v719
    %v771 = vmul.f32 %v643, %v724
    %v772 = vmul.f32 %v644, %v724
    %v773 = vmul.f32 %v645, %v729
    %v774 = vmul.f32 %v646, %v729
    %v775 = vmul.f32 %v647, %v734
    %v776 = vmul.f32 %v648, %v734
    %v777 = vmul.f32 %v649, %v739
    %v778 = vmul.f32 %v650, %v739
    %v779 = vmul.f32 %v651, %v744
    %v780 = vmul.f32 %v652, %v744
    %v781 = vmul.f32 %v653, %v749
    %v782 = vmul.f32 %v654, %v749
    %v783 = vld [vmem:[%s4] sm:$0xff]
    %v784 = vld [vmem:[%s4 + $0x8] sm:$0xff]
    %v785 = vld [vmem:[%s4 + $0x10] sm:$0xff]
    %v786 = vld [vmem:[%s4 + $0x18] sm:$0xff]
    %v787 = vld [vmem:[%s4 + $0x20] sm:$0xff]
    %v788 = vld [vmem:[%s4 + $0x28] sm:$0xff]
    %v789 = vld [vmem:[%s4 + $0x30] sm:$0xff]
    %v790 = vld [vmem:[%s4 + $0x38] sm:$0xff]
    %v791 = vld [vmem:[%s4 + $0x40] sm:$0xff]
    %v792 = vld [vmem:[%s4 + $0x48] sm:$0xff]
    %v793 = vld [vmem:[%s4 + $0x50] sm:$0xff]
    %v794 = vld [vmem:[%s4 + $0x58] sm:$0xff]
    %v795 = vld [vmem:[%s4 + $0x60] sm:$0xff]
    %v796 = vld [vmem:[%s4 + $0x68] sm:$0xff]
    %v797 = vld [vmem:[%s4 + $0x70] sm:$0xff]
    %v798 = vld [vmem:[%s4 + $0x78] sm:$0xff]
    %800 = vset.pattern.permute.xlu0 0
    %801 = vperm.xlu0 %800, %v783
    %v802 = vpop.permute.xlu0 %801
    %805 = vset.pattern.permute.xlu0 0
    %806 = vperm.xlu0 %805, %v784
    %v807 = vpop.permute.xlu0 %806
    %810 = vset.pattern.permute.xlu0 0
    %811 = vperm.xlu0 %810, %v785
    %v812 = vpop.permute.xlu0 %811
    %815 = vset.pattern.permute.xlu0 0
    %816 = vperm.xlu0 %815, %v786
    %v817 = vpop.permute.xlu0 %816
    %820 = vset.pattern.permute.xlu0 0
    %821 = vperm.xlu0 %820, %v787
    %v822 = vpop.permute.xlu0 %821
    %825 = vset.pattern.permute.xlu0 0
    %826 = vperm.xlu0 %825, %v788
    %v827 = vpop.permute.xlu0 %826
    %830 = vset.pattern.permute.xlu0 0
    %831 = vperm.xlu0 %830, %v789
    %v832 = vpop.permute.xlu0 %831
    %835 = vset.pattern.permute.xlu0 0
    %836 = vperm.xlu0 %835, %v790
    %v837 = vpop.permute.xlu0 %836
    %840 = vset.pattern.permute.xlu0 0
    %841 = vperm.xlu0 %840, %v791
    %v842 = vpop.permute.xlu0 %841
    %845 = vset.pattern.permute.xlu0 0
    %846 = vperm.xlu0 %845, %v792
    %v847 = vpop.permute.xlu0 %846
    %850 = vset.pattern.permute.xlu0 0
    %851 = vperm.xlu0 %850, %v793
    %v852 = vpop.permute.xlu0 %851
    %855 = vset.pattern.permute.xlu0 0
    %856 = vperm.xlu0 %855, %v794
    %v857 = vpop.permute.xlu0 %856
    %860 = vset.pattern.permute.xlu0 0
    %861 = vperm.xlu0 %860, %v795
    %v862 = vpop.permute.xlu0 %861
    %865 = vset.pattern.permute.xlu0 0
    %866 = vperm.xlu0 %865, %v796
    %v867 = vpop.permute.xlu0 %866
    %870 = vset.pattern.permute.xlu0 0
    %871 = vperm.xlu0 %870, %v797
    %v872 = vpop.permute.xlu0 %871
    %875 = vset.pattern.permute.xlu0 0
    %876 = vperm.xlu0 %875, %v798
    %v877 = vpop.permute.xlu0 %876
    %v879 = vadd.f32 %v751, %v802
    %v880 = vadd.f32 %v752, %v802
    %v881 = vadd.f32 %v753, %v807
    %v882 = vadd.f32 %v754, %v807
    %v883 = vadd.f32 %v755, %v812
    %v884 = vadd.f32 %v756, %v812
    %v885 = vadd.f32 %v757, %v817
    %v886 = vadd.f32 %v758, %v817
    %v887 = vadd.f32 %v759, %v822
    %v888 = vadd.f32 %v760, %v822
    %v889 = vadd.f32 %v761, %v827
    %v890 = vadd.f32 %v762, %v827
    %v891 = vadd.f32 %v763, %v832
    %v892 = vadd.f32 %v764, %v832
    %v893 = vadd.f32 %v765, %v837
    %v894 = vadd.f32 %v766, %v837
    %v895 = vadd.f32 %v767, %v842
    %v896 = vadd.f32 %v768, %v842
    %v897 = vadd.f32 %v769, %v847
    %v898 = vadd.f32 %v770, %v847
    %v899 = vadd.f32 %v771, %v852
    %v900 = vadd.f32 %v772, %v852
    %v901 = vadd.f32 %v773, %v857
    %v902 = vadd.f32 %v774, %v857
    %v903 = vadd.f32 %v775, %v862
    %v904 = vadd.f32 %v776, %v862
    %v905 = vadd.f32 %v777, %v867
    %v906 = vadd.f32 %v778, %v867
    %v907 = vadd.f32 %v779, %v872
    %v908 = vadd.f32 %v780, %v872
    %v909 = vadd.f32 %v781, %v877
    %v910 = vadd.f32 %v782, %v877
    %v911 = vmax.f32 %v879, 0.0
    %v912 = vmax.f32 %v880, 0.0
    %v913 = vmax.f32 %v881, 0.0
    %v914 = vmax.f32 %v882, 0.0
    %v915 = vmax.f32 %v883, 0.0
    %v916 = vmax.f32 %v884, 0.0
    %v917 = vmax.f32 %v885, 0.0
    %v918 = vmax.f32 %v886, 0.0
    %v919 = vmax.f32 %v887, 0.0
    %v920 = vmax.f32 %v888, 0.0
    %v921 = vmax.f32 %v889, 0.0
    %v922 = vmax.f32 %v890, 0.0
    %v923 = vmax.f32 %v891, 0.0
    %v924 = vmax.f32 %v892, 0.0
    %v925 = vmax.f32 %v893, 0.0
    %v926 = vmax.f32 %v894, 0.0
    %v927 = vmax.f32 %v895, 0.0
    %v928 = vmax.f32 %v896, 0.0
    %v929 = vmax.f32 %v897, 0.0
    %v930 = vmax.f32 %v898, 0.0
    %v931 = vmax.f32 %v899, 0.0
    %v932 = vmax.f32 %v900, 0.0
    %v933 = vmax.f32 %v901, 0.0
    %v934 = vmax.f32 %v902, 0.0
    %v935 = vmax.f32 %v903, 0.0
    %v936 = vmax.f32 %v904, 0.0
    %v937 = vmax.f32 %v905, 0.0
    %v938 = vmax.f32 %v906, 0.0
    %v939 = vmax.f32 %v907, 0.0
    %v940 = vmax.f32 %v908, 0.0
    %v941 = vmax.f32 %v909, 0.0
    %v942 = vmax.f32 %v910, 0.0
    %v943 = vld [vmem:[%s5] sm:$0xf]
    %v944 = vld [vmem:[%s5 + $0x4] sm:$0xf]
    %v945 = vld [vmem:[%s5 + $0x8] sm:$0xf]
    %v946 = vld [vmem:[%s5 + $0xc] sm:$0xf]
    %v947 = vld [vmem:[%s5 + $0x10] sm:$0xf]
    %v948 = vld [vmem:[%s5 + $0x14] sm:$0xf]
    %v949 = vld [vmem:[%s5 + $0x18] sm:$0xf]
    %v950 = vld [vmem:[%s5 + $0x1c] sm:$0xf]
    %v951 = vld [vmem:[%s5 + $0x20] sm:$0xf]
    %v952 = vld [vmem:[%s5 + $0x24] sm:$0xf]
    %v953 = vld [vmem:[%s5 + $0x28] sm:$0xf]
    %v954 = vld [vmem:[%s5 + $0x2c] sm:$0xf]
    %v955 = vld [vmem:[%s5 + $0x30] sm:$0xf]
    %v956 = vld [vmem:[%s5 + $0x34] sm:$0xf]
    %v957 = vld [vmem:[%s5 + $0x38] sm:$0xf]
    %v958 = vld [vmem:[%s5 + $0x3c] sm:$0xf]
    %v959 = vpack.c.bf16 %v913, %v911
    %v960 = vpack.c.bf16 %v914, %v912
    %v961 = vpack.c.bf16 %v917, %v915
    %v962 = vpack.c.bf16 %v918, %v916
    %v963 = vpack.c.bf16 %v921, %v919
    %v964 = vpack.c.bf16 %v922, %v920
    %v965 = vpack.c.bf16 %v925, %v923
    %v966 = vpack.c.bf16 %v926, %v924
    %v967 = vpack.c.bf16 %v929, %v927
    %v968 = vpack.c.bf16 %v930, %v928
    %v969 = vpack.c.bf16 %v933, %v931
    %v970 = vpack.c.bf16 %v934, %v932
    %v971 = vpack.c.bf16 %v937, %v935
    %v972 = vpack.c.bf16 %v938, %v936
    %v973 = vpack.c.bf16 %v941, %v939
    %v974 = vpack.c.bf16 %v942, %v940
    %v991 = vunpack.c.l.b16 %v943
    %v992 = vunpack.c.l.b16 %v944
    %v993 = vunpack.c.l.b16 %v945
    %v994 = vunpack.c.l.b16 %v946
    %v995 = vunpack.c.l.b16 %v947
    %v996 = vunpack.c.l.b16 %v948
    %v997 = vunpack.c.l.b16 %v949
    %v998 = vunpack.c.l.b16 %v950
    %v999 = vunpack.c.l.b16 %v951
    %v1000 = vunpack.c.l.b16 %v952
    %v1001 = vunpack.c.l.b16 %v953
    %v1002 = vunpack.c.l.b16 %v954
    %v1003 = vunpack.c.l.b16 %v955
    %v1004 = vunpack.c.l.b16 %v956
    %v1005 = vunpack.c.l.b16 %v957
    %v1006 = vunpack.c.l.b16 %v958
    %v1007 = vpack.c.b16 %v992, %v991
    %v1008 = vpack.c.b16 %v994, %v993
    %v1009 = vpack.c.b16 %v996, %v995
    %v1010 = vpack.c.b16 %v998, %v997
    %v1011 = vpack.c.b16 %v1000, %v999
    %v1012 = vpack.c.b16 %v1002, %v1001
    %v1013 = vpack.c.b16 %v1004, %v1003
    %v1014 = vpack.c.b16 %v1006, %v1005
    %1023 = vmatprep.subr.bf16.mxu0 %v960
    %1024 = vmatpush1.bf16.msra.mxu0 %v959
    %1025 = vmatprep.subr.bf16.mxu0 %v962
    %1026 = vmatpush1.bf16.msra.mxu0 %v961
    %1027 = vmatprep.subr.bf16.mxu0 %v964
    %1028 = vmatpush1.bf16.msra.mxu0 %v963
    %1029 = vmatprep.subr.bf16.mxu0 %v966
    %1030 = vmatpush1.bf16.msra.mxu0 %v965
    %1031 = vmatprep.subr.bf16.mxu0 %v968
    %1032 = vmatpush1.bf16.msra.mxu0 %v967
    %1033 = vmatprep.subr.bf16.mxu0 %v970
    %1034 = vmatpush1.bf16.msra.mxu0 %v969
    %1035 = vmatprep.subr.bf16.mxu0 %v972
    %1036 = vmatpush1.bf16.msra.mxu0 %v971
    %1037 = vmatprep.subr.bf16.mxu0 %v974
    %1038 = vmatpush1.bf16.msra.mxu0 %v973
    %1039 = vmatprep.subr.bf16.mxu0 0
    %1040 = vmatpush1.bf16.msra.mxu0 0
    %1041 = vmatprep.subr.bf16.mxu0 0
    %1042 = vmatpush1.bf16.msra.mxu0 0
    %1043 = vmatprep.subr.bf16.mxu0 0
    %1044 = vmatpush1.bf16.msra.mxu0 0
    %1045 = vmatprep.subr.bf16.mxu0 0
    %1046 = vmatpush1.bf16.msra.mxu0 0
    %1047 = vmatprep.subr.bf16.mxu0 0
    %1048 = vmatpush1.bf16.msra.mxu0 0
    %1049 = vmatprep.subr.bf16.mxu0 0
    %1050 = vmatpush1.bf16.msra.mxu0 0
    %1051 = vmatprep.subr.bf16.mxu0 0
    %1052 = vmatpush1.bf16.msra.mxu0 0
    %1053 = vmatprep.subr.bf16.mxu0 0
    %1054 = vmatpush1.bf16.msra.mxu0 0
    %1055 = vmatprep.mubr.bf16.mxu0 0
    %1056 = vmatmul.mubr.bf16.gmra.mrb[0].mxu0 %v1007
    %v1057 = vpop.f32.mrb[0].mxu0
    %v1058 = vadd.f32 0.0, %v1057
    %v1059 = vpop.f32.mrb[0].mxu0
    %v1060 = vadd.f32 0.0, %v1059
    %v1061 = vpop.f32.mrb[0].mxu0
    %v1062 = vadd.f32 0.0, %v1061
    %v1063 = vpop.f32.mrb[0].mxu0
    %v1064 = vadd.f32 0.0, %v1063
    %1065 = vmatprep.mubr.bf16.mxu0 0
    %1066 = vmatmul.mubr.bf16.gmra.mrb[0].mxu0 %v1008
    %v1067 = vpop.f32.mrb[0].mxu0
    %v1068 = vadd.f32 0.0, %v1067
    %v1069 = vpop.f32.mrb[0].mxu0
    %v1070 = vadd.f32 0.0, %v1069
    %v1071 = vpop.f32.mrb[0].mxu0
    %v1072 = vadd.f32 0.0, %v1071
    %v1073 = vpop.f32.mrb[0].mxu0
    %v1074 = vadd.f32 0.0, %v1073
    %1075 = vmatprep.mubr.bf16.mxu0 0
    %1076 = vmatmul.mubr.bf16.gmra.mrb[0].mxu0 %v1009
    %v1077 = vpop.f32.mrb[0].mxu0
    %v1078 = vadd.f32 0.0, %v1077
    %v1079 = vpop.f32.mrb[0].mxu0
    %v1080 = vadd.f32 0.0, %v1079
    %v1081 = vpop.f32.mrb[0].mxu0
    %v1082 = vadd.f32 0.0, %v1081
    %v1083 = vpop.f32.mrb[0].mxu0
    %v1084 = vadd.f32 0.0, %v1083
    %1085 = vmatprep.mubr.bf16.mxu0 0
    %1086 = vmatmul.mubr.bf16.gmra.mrb[0].mxu0 %v1010
    %v1087 = vpop.f32.mrb[0].mxu0
    %v1088 = vadd.f32 0.0, %v1087
    %v1089 = vpop.f32.mrb[0].mxu0
    %v1090 = vadd.f32 0.0, %v1089
    %v1091 = vpop.f32.mrb[0].mxu0
    %v1092 = vadd.f32 0.0, %v1091
    %v1093 = vpop.f32.mrb[0].mxu0
    %v1094 = vadd.f32 0.0, %v1093
    %1095 = vmatprep.mubr.bf16.mxu0 0
    %1096 = vmatmul.mubr.bf16.gmra.mrb[0].mxu0 %v1011
    %v1097 = vpop.f32.mrb[0].mxu0
    %v1098 = vadd.f32 0.0, %v1097
    %v1099 = vpop.f32.mrb[0].mxu0
    %v1100 = vadd.f32 0.0, %v1099
    %v1101 = vpop.f32.mrb[0].mxu0
    %v1102 = vadd.f32 0.0, %v1101
    %v1103 = vpop.f32.mrb[0].mxu0
    %v1104 = vadd.f32 0.0, %v1103
    %1105 = vmatprep.mubr.bf16.mxu0 0
    %1106 = vmatmul.mubr.bf16.gmra.mrb[0].mxu0 %v1012
    %v1107 = vpop.f32.mrb[0].mxu0
    %v1108 = vadd.f32 0.0, %v1107
    %v1109 = vpop.f32.mrb[0].mxu0
    %v1110 = vadd.f32 0.0, %v1109
    %v1111 = vpop.f32.mrb[0].mxu0
    %v1112 = vadd.f32 0.0, %v1111
    %v1113 = vpop.f32.mrb[0].mxu0
    %v1114 = vadd.f32 0.0, %v1113
    %1115 = vmatprep.mubr.bf16.mxu0 0
    %1116 = vmatmul.mubr.bf16.gmra.mrb[0].mxu0 %v1013
    %v1117 = vpop.f32.mrb[0].mxu0
    %v1118 = vadd.f32 0.0, %v1117
    %v1119 = vpop.f32.mrb[0].mxu0
    %v1120 = vadd.f32 0.0, %v1119
    %v1121 = vpop.f32.mrb[0].mxu0
    %v1122 = vadd.f32 0.0, %v1121
    %v1123 = vpop.f32.mrb[0].mxu0
    %v1124 = vadd.f32 0.0, %v1123
    %1125 = vmatprep.mubr.bf16.mxu0 0
    %1126 = vmatmul.mubr.bf16.gmra.mrb[0].mxu0 %v1014
    %v1127 = vpop.f32.mrb[0].mxu0
    %v1128 = vadd.f32 0.0, %v1127
    %v1129 = vpop.f32.mrb[0].mxu0
    %v1130 = vadd.f32 0.0, %v1129
    %v1131 = vpop.f32.mrb[0].mxu0
    %v1132 = vadd.f32 0.0, %v1131
    %v1133 = vpop.f32.mrb[0].mxu0
    %v1134 = vadd.f32 0.0, %v1133
    %1135 = vdwg.mxu0
    %v1136 = vld [vmem:[%s6] sm:$0xff]
    %v1137 = vld [vmem:[%s6 + $0x8] sm:$0xff]
    %v1138 = vld [vmem:[%s6 + $0x10] sm:$0xff]
    %v1139 = vld [vmem:[%s6 + $0x18] sm:$0xff]
    %v1140 = vld [vmem:[%s6 + $0x20] sm:$0xff]
    %v1141 = vld [vmem:[%s6 + $0x28] sm:$0xff]
    %v1142 = vld [vmem:[%s6 + $0x30] sm:$0xff]
    %v1143 = vld [vmem:[%s6 + $0x38] sm:$0xff]
    %v1144 = vld [vmem:[%s6 + $0x40] sm:$0xff]
    %v1145 = vld [vmem:[%s6 + $0x48] sm:$0xff]
    %v1146 = vld [vmem:[%s6 + $0x50] sm:$0xff]
    %v1147 = vld [vmem:[%s6 + $0x58] sm:$0xff]
    %v1148 = vld [vmem:[%s6 + $0x60] sm:$0xff]
    %v1149 = vld [vmem:[%s6 + $0x68] sm:$0xff]
    %v1150 = vld [vmem:[%s6 + $0x70] sm:$0xff]
    %v1151 = vld [vmem:[%s6 + $0x78] sm:$0xff]
    %1153 = vset.pattern.permute.xlu0 0
    %1154 = vperm.xlu0 %1153, %v1136
    %v1155 = vpop.permute.xlu0 %1154
    %1158 = vset.pattern.permute.xlu0 0
    %1159 = vperm.xlu0 %1158, %v1137
    %v1160 = vpop.permute.xlu0 %1159
    %1163 = vset.pattern.permute.xlu0 0
    %1164 = vperm.xlu0 %1163, %v1138
    %v1165 = vpop.permute.xlu0 %1164
    %1168 = vset.pattern.permute.xlu0 0
    %1169 = vperm.xlu0 %1168, %v1139
    %v1170 = vpop.permute.xlu0 %1169
    %1173 = vset.pattern.permute.xlu0 0
    %1174 = vperm.xlu0 %1173, %v1140
    %v1175 = vpop.permute.xlu0 %1174
    %1178 = vset.pattern.permute.xlu0 0
    %1179 = vperm.xlu0 %1178, %v1141
    %v1180 = vpop.permute.xlu0 %1179
    %1183 = vset.pattern.permute.xlu0 0
    %1184 = vperm.xlu0 %1183, %v1142
    %v1185 = vpop.permute.xlu0 %1184
    %1188 = vset.pattern.permute.xlu0 0
    %1189 = vperm.xlu0 %1188, %v1143
    %v1190 = vpop.permute.xlu0 %1189
    %1193 = vset.pattern.permute.xlu0 0
    %1194 = vperm.xlu0 %1193, %v1144
    %v1195 = vpop.permute.xlu0 %1194
    %1198 = vset.pattern.permute.xlu0 0
    %1199 = vperm.xlu0 %1198, %v1145
    %v1200 = vpop.permute.xlu0 %1199
    %1203 = vset.pattern.permute.xlu0 0
    %1204 = vperm.xlu0 %1203, %v1146
    %v1205 = vpop.permute.xlu0 %1204
    %1208 = vset.pattern.permute.xlu0 0
    %1209 = vperm.xlu0 %1208, %v1147
    %v1210 = vpop.permute.xlu0 %1209
    %1213 = vset.pattern.permute.xlu0 0
    %1214 = vperm.xlu0 %1213, %v1148
    %v1215 = vpop.permute.xlu0 %1214
    %1218 = vset.pattern.permute.xlu0 0
    %1219 = vperm.xlu0 %1218, %v1149
    %v1220 = vpop.permute.xlu0 %1219
    %1223 = vset.pattern.permute.xlu0 0
    %1224 = vperm.xlu0 %1223, %v1150
    %v1225 = vpop.permute.xlu0 %1224
    %1228 = vset.pattern.permute.xlu0 0
    %1229 = vperm.xlu0 %1228, %v1151
    %v1230 = vpop.permute.xlu0 %1229
    %v1232 = vmul.f32 %v1058, %v1155
    %v1233 = vmul.f32 %v1060, %v1155
    %v1234 = vmul.f32 %v1062, %v1160
    %v1235 = vmul.f32 %v1064, %v1160
    %v1236 = vmul.f32 %v1068, %v1165
    %v1237 = vmul.f32 %v1070, %v1165
    %v1238 = vmul.f32 %v1072, %v1170
    %v1239 = vmul.f32 %v1074, %v1170
    %v1240 = vmul.f32 %v1078, %v1175
    %v1241 = vmul.f32 %v1080, %v1175
    %v1242 = vmul.f32 %v1082, %v1180
    %v1243 = vmul.f32 %v1084, %v1180
    %v1244 = vmul.f32 %v1088, %v1185
    %v1245 = vmul.f32 %v1090, %v1185
    %v1246 = vmul.f32 %v1092, %v1190
    %v1247 = vmul.f32 %v1094, %v1190
    %v1248 = vmul.f32 %v1098, %v1195
    %v1249 = vmul.f32 %v1100, %v1195
    %v1250 = vmul.f32 %v1102, %v1200
    %v1251 = vmul.f32 %v1104, %v1200
    %v1252 = vmul.f32 %v1108, %v1205
    %v1253 = vmul.f32 %v1110, %v1205
    %v1254 = vmul.f32 %v1112, %v1210
    %v1255 = vmul.f32 %v1114, %v1210
    %v1256 = vmul.f32 %v1118, %v1215
    %v1257 = vmul.f32 %v1120, %v1215
    %v1258 = vmul.f32 %v1122, %v1220
    %v1259 = vmul.f32 %v1124, %v1220
    %v1260 = vmul.f32 %v1128, %v1225
    %v1261 = vmul.f32 %v1130, %v1225
    %v1262 = vmul.f32 %v1132, %v1230
    %v1263 = vmul.f32 %v1134, %v1230
    %v1264 = vld [vmem:[%s7] sm:$0xff]
    %v1265 = vld [vmem:[%s7 + $0x8] sm:$0xff]
    %v1266 = vld [vmem:[%s7 + $0x10] sm:$0xff]
    %v1267 = vld [vmem:[%s7 + $0x18] sm:$0xff]
    %v1268 = vld [vmem:[%s7 + $0x20] sm:$0xff]
    %v1269 = vld [vmem:[%s7 + $0x28] sm:$0xff]
    %v1270 = vld [vmem:[%s7 + $0x30] sm:$0xff]
    %v1271 = vld [vmem:[%s7 + $0x38] sm:$0xff]
    %v1272 = vld [vmem:[%s7 + $0x40] sm:$0xff]
    %v1273 = vld [vmem:[%s7 + $0x48] sm:$0xff]
    %v1274 = vld [vmem:[%s7 + $0x50] sm:$0xff]
    %v1275 = vld [vmem:[%s7 + $0x58] sm:$0xff]
    %v1276 = vld [vmem:[%s7 + $0x60] sm:$0xff]
    %v1277 = vld [vmem:[%s7 + $0x68] sm:$0xff]
    %v1278 = vld [vmem:[%s7 + $0x70] sm:$0xff]
    %v1279 = vld [vmem:[%s7 + $0x78] sm:$0xff]
    %1281 = vset.pattern.permute.xlu0 0
    %1282 = vperm.xlu0 %1281, %v1264
    %v1283 = vpop.permute.xlu0 %1282
    %1286 = vset.pattern.permute.xlu0 0
    %1287 = vperm.xlu0 %1286, %v1265
    %v1288 = vpop.permute.xlu0 %1287
    %1291 = vset.pattern.permute.xlu0 0
    %1292 = vperm.xlu0 %1291, %v1266
    %v1293 = vpop.permute.xlu0 %1292
    %1296 = vset.pattern.permute.xlu0 0
    %1297 = vperm.xlu0 %1296, %v1267
    %v1298 = vpop.permute.xlu0 %1297
    %1301 = vset.pattern.permute.xlu0 0
    %1302 = vperm.xlu0 %1301, %v1268
    %v1303 = vpop.permute.xlu0 %1302
    %1306 = vset.pattern.permute.xlu0 0
    %1307 = vperm.xlu0 %1306, %v1269
    %v1308 = vpop.permute.xlu0 %1307
    %1311 = vset.pattern.permute.xlu0 0
    %1312 = vperm.xlu0 %1311, %v1270
    %v1313 = vpop.permute.xlu0 %1312
    %1316 = vset.pattern.permute.xlu0 0
    %1317 = vperm.xlu0 %1316, %v1271
    %v1318 = vpop.permute.xlu0 %1317
    %1321 = vset.pattern.permute.xlu0 0
    %1322 = vperm.xlu0 %1321, %v1272
    %v1323 = vpop.permute.xlu0 %1322
    %1326 = vset.pattern.permute.xlu0 0
    %1327 = vperm.xlu0 %1326, %v1273
    %v1328 = vpop.permute.xlu0 %1327
    %1331 = vset.pattern.permute.xlu0 0
    %1332 = vperm.xlu0 %1331, %v1274
    %v1333 = vpop.permute.xlu0 %1332
    %1336 = vset.pattern.permute.xlu0 0
    %1337 = vperm.xlu0 %1336, %v1275
    %v1338 = vpop.permute.xlu0 %1337
    %1341 = vset.pattern.permute.xlu0 0
    %1342 = vperm.xlu0 %1341, %v1276
    %v1343 = vpop.permute.xlu0 %1342
    %1346 = vset.pattern.permute.xlu0 0
    %1347 = vperm.xlu0 %1346, %v1277
    %v1348 = vpop.permute.xlu0 %1347
    %1351 = vset.pattern.permute.xlu0 0
    %1352 = vperm.xlu0 %1351, %v1278
    %v1353 = vpop.permute.xlu0 %1352
    %1356 = vset.pattern.permute.xlu0 0
    %1357 = vperm.xlu0 %1356, %v1279
    %v1358 = vpop.permute.xlu0 %1357
    %v1360 = vadd.f32 %v1232, %v1283
    %v1361 = vadd.f32 %v1233, %v1283
    %v1362 = vadd.f32 %v1234, %v1288
    %v1363 = vadd.f32 %v1235, %v1288
    %v1364 = vadd.f32 %v1236, %v1293
    %v1365 = vadd.f32 %v1237, %v1293
    %v1366 = vadd.f32 %v1238, %v1298
    %v1367 = vadd.f32 %v1239, %v1298
    %v1368 = vadd.f32 %v1240, %v1303
    %v1369 = vadd.f32 %v1241, %v1303
    %v1370 = vadd.f32 %v1242, %v1308
    %v1371 = vadd.f32 %v1243, %v1308
    %v1372 = vadd.f32 %v1244, %v1313
    %v1373 = vadd.f32 %v1245, %v1313
    %v1374 = vadd.f32 %v1246, %v1318
    %v1375 = vadd.f32 %v1247, %v1318
    %v1376 = vadd.f32 %v1248, %v1323
    %v1377 = vadd.f32 %v1249, %v1323
    %v1378 = vadd.f32 %v1250, %v1328
    %v1379 = vadd.f32 %v1251, %v1328
    %v1380 = vadd.f32 %v1252, %v1333
    %v1381 = vadd.f32 %v1253, %v1333
    %v1382 = vadd.f32 %v1254, %v1338
    %v1383 = vadd.f32 %v1255, %v1338
    %v1384 = vadd.f32 %v1256, %v1343
    %v1385 = vadd.f32 %v1257, %v1343
    %v1386 = vadd.f32 %v1258, %v1348
    %v1387 = vadd.f32 %v1259, %v1348
    %v1388 = vadd.f32 %v1260, %v1353
    %v1389 = vadd.f32 %v1261, %v1353
    %v1390 = vadd.f32 %v1262, %v1358
    %v1391 = vadd.f32 %v1263, %v1358
    %v1392 = vmax.f32 %v1360, 0.0
    %v1393 = vmax.f32 %v1361, 0.0
    %v1394 = vmax.f32 %v1362, 0.0
    %v1395 = vmax.f32 %v1363, 0.0
    %v1396 = vmax.f32 %v1364, 0.0
    %v1397 = vmax.f32 %v1365, 0.0
    %v1398 = vmax.f32 %v1366, 0.0
    %v1399 = vmax.f32 %v1367, 0.0
    %v1400 = vmax.f32 %v1368, 0.0
    %v1401 = vmax.f32 %v1369, 0.0
    %v1402 = vmax.f32 %v1370, 0.0
    %v1403 = vmax.f32 %v1371, 0.0
    %v1404 = vmax.f32 %v1372, 0.0
    %v1405 = vmax.f32 %v1373, 0.0
    %v1406 = vmax.f32 %v1374, 0.0
    %v1407 = vmax.f32 %v1375, 0.0
    %v1408 = vmax.f32 %v1376, 0.0
    %v1409 = vmax.f32 %v1377, 0.0
    %v1410 = vmax.f32 %v1378, 0.0
    %v1411 = vmax.f32 %v1379, 0.0
    %v1412 = vmax.f32 %v1380, 0.0
    %v1413 = vmax.f32 %v1381, 0.0
    %v1414 = vmax.f32 %v1382, 0.0
    %v1415 = vmax.f32 %v1383, 0.0
    %v1416 = vmax.f32 %v1384, 0.0
    %v1417 = vmax.f32 %v1385, 0.0
    %v1418 = vmax.f32 %v1386, 0.0
    %v1419 = vmax.f32 %v1387, 0.0
    %v1420 = vmax.f32 %v1388, 0.0
    %v1421 = vmax.f32 %v1389, 0.0
    %v1422 = vmax.f32 %v1390, 0.0
    %v1423 = vmax.f32 %v1391, 0.0
    %v1424 = vld [vmem:[%s8] sm:$0xf]
    %v1425 = vld [vmem:[%s8 + $0x4] sm:$0xf]
    %v1426 = vld [vmem:[%s8 + $0x8] sm:$0xf]
    %v1427 = vld [vmem:[%s8 + $0xc] sm:$0xf]
    %v1428 = vld [vmem:[%s8 + $0x10] sm:$0xf]
    %v1429 = vld [vmem:[%s8 + $0x14] sm:$0xf]
    %v1430 = vld [vmem:[%s8 + $0x18] sm:$0xf]
    %v1431 = vld [vmem:[%s8 + $0x1c] sm:$0xf]
    %v1432 = vld [vmem:[%s8 + $0x20] sm:$0xf]
    %v1433 = vld [vmem:[%s8 + $0x24] sm:$0xf]
    %v1434 = vld [vmem:[%s8 + $0x28] sm:$0xf]
    %v1435 = vld [vmem:[%s8 + $0x2c] sm:$0xf]
    %v1436 = vld [vmem:[%s8 + $0x30] sm:$0xf]
    %v1437 = vld [vmem:[%s8 + $0x34] sm:$0xf]
    %v1438 = vld [vmem:[%s8 + $0x38] sm:$0xf]
    %v1439 = vld [vmem:[%s8 + $0x3c] sm:$0xf]
    %v1440 = vld [vmem:[%s8 + $0x40] sm:$0xf]
    %v1441 = vld [vmem:[%s8 + $0x44] sm:$0xf]
    %v1442 = vld [vmem:[%s8 + $0x48] sm:$0xf]
    %v1443 = vld [vmem:[%s8 + $0x4c] sm:$0xf]
    %v1444 = vld [vmem:[%s8 + $0x50] sm:$0xf]
    %v1445 = vld [vmem:[%s8 + $0x54] sm:$0xf]
    %v1446 = vld [vmem:[%s8 + $0x58] sm:$0xf]
    %v1447 = vld [vmem:[%s8 + $0x5c] sm:$0xf]
    %v1448 = vld [vmem:[%s8 + $0x60] sm:$0xf]
    %v1449 = vld [vmem:[%s8 + $0x64] sm:$0xf]
    %v1450 = vld [vmem:[%s8 + $0x68] sm:$0xf]
    %v1451 = vld [vmem:[%s8 + $0x6c] sm:$0xf]
    %v1452 = vld [vmem:[%s8 + $0x70] sm:$0xf]
    %v1453 = vld [vmem:[%s8 + $0x74] sm:$0xf]
    %v1454 = vld [vmem:[%s8 + $0x78] sm:$0xf]
    %v1455 = vld [vmem:[%s8 + $0x7c] sm:$0xf]
    %v1456 = vpack.c.bf16 %v1394, %v1392
    %v1457 = vpack.c.bf16 %v1395, %v1393
    %v1458 = vpack.c.bf16 %v1398, %v1396
    %v1459 = vpack.c.bf16 %v1399, %v1397
    %v1460 = vpack.c.bf16 %v1402, %v1400
    %v1461 = vpack.c.bf16 %v1403, %v1401
    %v1462 = vpack.c.bf16 %v1406, %v1404
    %v1463 = vpack.c.bf16 %v1407, %v1405
    %v1464 = vpack.c.bf16 %v1410, %v1408
    %v1465 = vpack.c.bf16 %v1411, %v1409
    %v1466 = vpack.c.bf16 %v1414, %v1412
    %v1467 = vpack.c.bf16 %v1415, %v1413
    %v1468 = vpack.c.bf16 %v1418, %v1416
    %v1469 = vpack.c.bf16 %v1419, %v1417
    %v1470 = vpack.c.bf16 %v1422, %v1420
    %v1471 = vpack.c.bf16 %v1423, %v1421
    %v1504 = vunpack.c.l.b16 %v1424
    %v1505 = vunpack.c.l.b16 %v1425
    %v1506 = vunpack.c.l.b16 %v1426
    %v1507 = vunpack.c.l.b16 %v1427
    %v1508 = vunpack.c.l.b16 %v1428
    %v1509 = vunpack.c.l.b16 %v1429
    %v1510 = vunpack.c.l.b16 %v1430
    %v1511 = vunpack.c.l.b16 %v1431
    %v1512 = vunpack.c.l.b16 %v1432
    %v1513 = vunpack.c.l.b16 %v1433
    %v1514 = vunpack.c.l.b16 %v1434
    %v1515 = vunpack.c.l.b16 %v1435
    %v1516 = vunpack.c.l.b16 %v1436
    %v1517 = vunpack.c.l.b16 %v1437
    %v1518 = vunpack.c.l.b16 %v1438
    %v1519 = vunpack.c.l.b16 %v1439
    %v1520 = vunpack.c.l.b16 %v1440
    %v1521 = vunpack.c.l.b16 %v1441
    %v1522 = vunpack.c.l.b16 %v1442
    %v1523 = vunpack.c.l.b16 %v1443
    %v1524 = vunpack.c.l.b16 %v1444
    %v1525 = vunpack.c.l.b16 %v1445
    %v1526 = vunpack.c.l.b16 %v1446
    %v1527 = vunpack.c.l.b16 %v1447
    %v1528 = vunpack.c.l.b16 %v1448
    %v1529 = vunpack.c.l.b16 %v1449
    %v1530 = vunpack.c.l.b16 %v1450
    %v1531 = vunpack.c.l.b16 %v1451
    %v1532 = vunpack.c.l.b16 %v1452
    %v1533 = vunpack.c.l.b16 %v1453
    %v1534 = vunpack.c.l.b16 %v1454
    %v1535 = vunpack.c.l.b16 %v1455
    %v1536 = vpack.c.b16 %v1505, %v1504
    %v1537 = vpack.c.b16 %v1507, %v1506
    %v1538 = vpack.c.b16 %v1509, %v1508
    %v1539 = vpack.c.b16 %v1511, %v1510
    %v1540 = vpack.c.b16 %v1513, %v1512
    %v1541 = vpack.c.b16 %v1515, %v1514
    %v1542 = vpack.c.b16 %v1517, %v1516
    %v1543 = vpack.c.b16 %v1519, %v1518
    %v1544 = vpack.c.b16 %v1521, %v1520
    %v1545 = vpack.c.b16 %v1523, %v1522
    %v1546 = vpack.c.b16 %v1525, %v1524
    %v1547 = vpack.c.b16 %v1527, %v1526
    %v1548 = vpack.c.b16 %v1529, %v1528
    %v1549 = vpack.c.b16 %v1531, %v1530
    %v1550 = vpack.c.b16 %v1533, %v1532
    %v1551 = vpack.c.b16 %v1535, %v1534
    %1568 = vmatprep.subr.bf16.mxu0 %v1457
    %1569 = vmatpush1.bf16.msra.mxu0 %v1456
    %1570 = vmatprep.subr.bf16.mxu0 %v1459
    %1571 = vmatpush1.bf16.msra.mxu0 %v1458
    %1572 = vmatprep.subr.bf16.mxu0 %v1461
    %1573 = vmatpush1.bf16.msra.mxu0 %v1460
    %1574 = vmatprep.subr.bf16.mxu0 %v1463
    %1575 = vmatpush1.bf16.msra.mxu0 %v1462
    %1576 = vmatprep.subr.bf16.mxu0 %v1465
    %1577 = vmatpush1.bf16.msra.mxu0 %v1464
    %1578 = vmatprep.subr.bf16.mxu0 %v1467
    %1579 = vmatpush1.bf16.msra.mxu0 %v1466
    %1580 = vmatprep.subr.bf16.mxu0 %v1469
    %1581 = vmatpush1.bf16.msra.mxu0 %v1468
    %1582 = vmatprep.subr.bf16.mxu0 %v1471
    %1583 = vmatpush1.bf16.msra.mxu0 %v1470
    %1584 = vmatprep.subr.bf16.mxu0 0
    %1585 = vmatpush1.bf16.msra.mxu0 0
    %1586 = vmatprep.subr.bf16.mxu0 0
    %1587 = vmatpush1.bf16.msra.mxu0 0
    %1588 = vmatprep.subr.bf16.mxu0 0
    %1589 = vmatpush1.bf16.msra.mxu0 0
    %1590 = vmatprep.subr.bf16.mxu0 0
    %1591 = vmatpush1.bf16.msra.mxu0 0
    %1592 = vmatprep.subr.bf16.mxu0 0
    %1593 = vmatpush1.bf16.msra.mxu0 0
    %1594 = vmatprep.subr.bf16.mxu0 0
    %1595 = vmatpush1.bf16.msra.mxu0 0
    %1596 = vmatprep.subr.bf16.mxu0 0
    %1597 = vmatpush1.bf16.msra.mxu0 0
    %1598 = vmatprep.subr.bf16.mxu0 0
    %1599 = vmatpush1.bf16.msra.mxu0 0
    %1600 = vmatprep.mubr.bf16.mxu0 0
    %1601 = vmatmul.mubr.bf16.gmra.mrb[0].mxu0 %v1536
    %v1602 = vpop.f32.mrb[0].mxu0
    %v1603 = vadd.f32 0.0, %v1602
    %v1604 = vpop.f32.mrb[0].mxu0
    %v1605 = vadd.f32 0.0, %v1604
    %v1606 = vpop.f32.mrb[0].mxu0
    %v1607 = vadd.f32 0.0, %v1606
    %v1608 = vpop.f32.mrb[0].mxu0
    %v1609 = vadd.f32 0.0, %v1608
    %1610 = vmatprep.mubr.bf16.mxu0 0
    %1611 = vmatmul.mubr.bf16.gmra.mrb[0].mxu0 %v1537
    %v1612 = vpop.f32.mrb[0].mxu0
    %v1613 = vadd.f32 0.0, %v1612
    %v1614 = vpop.f32.mrb[0].mxu0
    %v1615 = vadd.f32 0.0, %v1614
    %v1616 = vpop.f32.mrb[0].mxu0
    %v1617 = vadd.f32 0.0, %v1616
    %v1618 = vpop.f32.mrb[0].mxu0
    %v1619 = vadd.f32 0.0, %v1618
    %1620 = vmatprep.mubr.bf16.mxu0 0
    %1621 = vmatmul.mubr.bf16.gmra.mrb[0].mxu0 %v1538
    %v1622 = vpop.f32.mrb[0].mxu0
    %v1623 = vadd.f32 0.0, %v1622
    %v1624 = vpop.f32.mrb[0].mxu0
    %v1625 = vadd.f32 0.0, %v1624
    %v1626 = vpop.f32.mrb[0].mxu0
    %v1627 = vadd.f32 0.0, %v1626
    %v1628 = vpop.f32.mrb[0].mxu0
    %v1629 = vadd.f32 0.0, %v1628
    %1630 = vmatprep.mubr.bf16.mxu0 0
    %1631 = vmatmul.mubr.bf16.gmra.mrb[0].mxu0 %v1539
    %v1632 = vpop.f32.mrb[0].mxu0
    %v1633 = vadd.f32 0.0, %v1632
    %v1634 = vpop.f32.mrb[0].mxu0
    %v1635 = vadd.f32 0.0, %v1634
    %v1636 = vpop.f32.mrb[0].mxu0
    %v1637 = vadd.f32 0.0, %v1636
    %v1638 = vpop.f32.mrb[0].mxu0
    %v1639 = vadd.f32 0.0, %v1638
    %1640 = vmatprep.mubr.bf16.mxu0 0
    %1641 = vmatmul.mubr.bf16.gmra.mrb[0].mxu0 %v1540
    %v1642 = vpop.f32.mrb[0].mxu0
    %v1643 = vadd.f32 0.0, %v1642
    %v1644 = vpop.f32.mrb[0].mxu0
    %v1645 = vadd.f32 0.0, %v1644
    %v1646 = vpop.f32.mrb[0].mxu0
    %v1647 = vadd.f32 0.0, %v1646
    %v1648 = vpop.f32.mrb[0].mxu0
    %v1649 = vadd.f32 0.0, %v1648
    %1650 = vmatprep.mubr.bf16.mxu0 0
    %1651 = vmatmul.mubr.bf16.gmra.mrb[0].mxu0 %v1541
    %v1652 = vpop.f32.mrb[0].mxu0
    %v1653 = vadd.f32 0.0, %v1652
    %v1654 = vpop.f32.mrb[0].mxu0
    %v1655 = vadd.f32 0.0, %v1654
    %v1656 = vpop.f32.mrb[0].mxu0
    %v1657 = vadd.f32 0.0, %v1656
    %v1658 = vpop.f32.mrb[0].mxu0
    %v1659 = vadd.f32 0.0, %v1658
    %1660 = vmatprep.mubr.bf16.mxu0 0
    %1661 = vmatmul.mubr.bf16.gmra.mrb[0].mxu0 %v1542
    %v1662 = vpop.f32.mrb[0].mxu0
    %v1663 = vadd.f32 0.0, %v1662
    %v1664 = vpop.f32.mrb[0].mxu0
    %v1665 = vadd.f32 0.0, %v1664
    %v1666 = vpop.f32.mrb[0].mxu0
    %v1667 = vadd.f32 0.0, %v1666
    %v1668 = vpop.f32.mrb[0].mxu0
    %v1669 = vadd.f32 0.0, %v1668
    %1670 = vmatprep.mubr.bf16.mxu0 0
    %1671 = vmatmul.mubr.bf16.gmra.mrb[0].mxu0 %v1543
    %v1672 = vpop.f32.mrb[0].mxu0
    %v1673 = vadd.f32 0.0, %v1672
    %v1674 = vpop.f32.mrb[0].mxu0
    %v1675 = vadd.f32 0.0, %v1674
    %v1676 = vpop.f32.mrb[0].mxu0
    %v1677 = vadd.f32 0.0, %v1676
    %v1678 = vpop.f32.mrb[0].mxu0
    %v1679 = vadd.f32 0.0, %v1678
    %1680 = vmatprep.mubr.bf16.mxu0 0
    %1681 = vmatmul.mubr.bf16.gmra.mrb[0].mxu0 %v1544
    %v1682 = vpop.f32.mrb[0].mxu0
    %v1683 = vadd.f32 0.0, %v1682
    %v1684 = vpop.f32.mrb[0].mxu0
    %v1685 = vadd.f32 0.0, %v1684
    %v1686 = vpop.f32.mrb[0].mxu0
    %v1687 = vadd.f32 0.0, %v1686
    %v1688 = vpop.f32.mrb[0].mxu0
    %v1689 = vadd.f32 0.0, %v1688
    %1690 = vmatprep.mubr.bf16.mxu0 0
    %1691 = vmatmul.mubr.bf16.gmra.mrb[0].mxu0 %v1545
    %v1692 = vpop.f32.mrb[0].mxu0
    %v1693 = vadd.f32 0.0, %v1692
    %v1694 = vpop.f32.mrb[0].mxu0
    %v1695 = vadd.f32 0.0, %v1694
    %v1696 = vpop.f32.mrb[0].mxu0
    %v1697 = vadd.f32 0.0, %v1696
    %v1698 = vpop.f32.mrb[0].mxu0
    %v1699 = vadd.f32 0.0, %v1698
    %1700 = vmatprep.mubr.bf16.mxu0 0
    %1701 = vmatmul.mubr.bf16.gmra.mrb[0].mxu0 %v1546
    %v1702 = vpop.f32.mrb[0].mxu0
    %v1703 = vadd.f32 0.0, %v1702
    %v1704 = vpop.f32.mrb[0].mxu0
    %v1705 = vadd.f32 0.0, %v1704
    %v1706 = vpop.f32.mrb[0].mxu0
    %v1707 = vadd.f32 0.0, %v1706
    %v1708 = vpop.f32.mrb[0].mxu0
    %v1709 = vadd.f32 0.0, %v1708
    %1710 = vmatprep.mubr.bf16.mxu0 0
    %1711 = vmatmul.mubr.bf16.gmra.mrb[0].mxu0 %v1547
    %v1712 = vpop.f32.mrb[0].mxu0
    %v1713 = vadd.f32 0.0, %v1712
    %v1714 = vpop.f32.mrb[0].mxu0
    %v1715 = vadd.f32 0.0, %v1714
    %v1716 = vpop.f32.mrb[0].mxu0
    %v1717 = vadd.f32 0.0, %v1716
    %v1718 = vpop.f32.mrb[0].mxu0
    %v1719 = vadd.f32 0.0, %v1718
    %1720 = vmatprep.mubr.bf16.mxu0 0
    %1721 = vmatmul.mubr.bf16.gmra.mrb[0].mxu0 %v1548
    %v1722 = vpop.f32.mrb[0].mxu0
    %v1723 = vadd.f32 0.0, %v1722
    %v1724 = vpop.f32.mrb[0].mxu0
    %v1725 = vadd.f32 0.0, %v1724
    %v1726 = vpop.f32.mrb[0].mxu0
    %v1727 = vadd.f32 0.0, %v1726
    %v1728 = vpop.f32.mrb[0].mxu0
    %v1729 = vadd.f32 0.0, %v1728
    %1730 = vmatprep.mubr.bf16.mxu0 0
    %1731 = vmatmul.mubr.bf16.gmra.mrb[0].mxu0 %v1549
    %v1732 = vpop.f32.mrb[0].mxu0
    %v1733 = vadd.f32 0.0, %v1732
    %v1734 = vpop.f32.mrb[0].mxu0
    %v1735 = vadd.f32 0.0, %v1734
    %v1736 = vpop.f32.mrb[0].mxu0
    %v1737 = vadd.f32 0.0, %v1736
    %v1738 = vpop.f32.mrb[0].mxu0
    %v1739 = vadd.f32 0.0, %v1738
    %1740 = vmatprep.mubr.bf16.mxu0 0
    %1741 = vmatmul.mubr.bf16.gmra.mrb[0].mxu0 %v1550
    %v1742 = vpop.f32.mrb[0].mxu0
    %v1743 = vadd.f32 0.0, %v1742
    %v1744 = vpop.f32.mrb[0].mxu0
    %v1745 = vadd.f32 0.0, %v1744
    %v1746 = vpop.f32.mrb[0].mxu0
    %v1747 = vadd.f32 0.0, %v1746
    %v1748 = vpop.f32.mrb[0].mxu0
    %v1749 = vadd.f32 0.0, %v1748
    %1750 = vmatprep.mubr.bf16.mxu0 0
    %1751 = vmatmul.mubr.bf16.gmra.mrb[0].mxu0 %v1551
    %v1752 = vpop.f32.mrb[0].mxu0
    %v1753 = vadd.f32 0.0, %v1752
    %v1754 = vpop.f32.mrb[0].mxu0
    %v1755 = vadd.f32 0.0, %v1754
    %v1756 = vpop.f32.mrb[0].mxu0
    %v1757 = vadd.f32 0.0, %v1756
    %v1758 = vpop.f32.mrb[0].mxu0
    %v1759 = vadd.f32 0.0, %v1758
    %1760 = vdwg.mxu0
    %v1761 = vld [vmem:[%s9] sm:$0xff]
    %v1762 = vld [vmem:[%s9 + $0x8] sm:$0xff]
    %v1763 = vld [vmem:[%s9 + $0x10] sm:$0xff]
    %v1764 = vld [vmem:[%s9 + $0x18] sm:$0xff]
    %v1765 = vld [vmem:[%s9 + $0x20] sm:$0xff]
    %v1766 = vld [vmem:[%s9 + $0x28] sm:$0xff]
    %v1767 = vld [vmem:[%s9 + $0x30] sm:$0xff]
    %v1768 = vld [vmem:[%s9 + $0x38] sm:$0xff]
    %v1769 = vld [vmem:[%s9 + $0x40] sm:$0xff]
    %v1770 = vld [vmem:[%s9 + $0x48] sm:$0xff]
    %v1771 = vld [vmem:[%s9 + $0x50] sm:$0xff]
    %v1772 = vld [vmem:[%s9 + $0x58] sm:$0xff]
    %v1773 = vld [vmem:[%s9 + $0x60] sm:$0xff]
    %v1774 = vld [vmem:[%s9 + $0x68] sm:$0xff]
    %v1775 = vld [vmem:[%s9 + $0x70] sm:$0xff]
    %v1776 = vld [vmem:[%s9 + $0x78] sm:$0xff]
    %v1777 = vld [vmem:[%s9 + $0x80] sm:$0xff]
    %v1778 = vld [vmem:[%s9 + $0x88] sm:$0xff]
    %v1779 = vld [vmem:[%s9 + $0x90] sm:$0xff]
    %v1780 = vld [vmem:[%s9 + $0x98] sm:$0xff]
    %v1781 = vld [vmem:[%s9 + $0xa0] sm:$0xff]
    %v1782 = vld [vmem:[%s9 + $0xa8] sm:$0xff]
    %v1783 = vld [vmem:[%s9 + $0xb0] sm:$0xff]
    %v1784 = vld [vmem:[%s9 + $0xb8] sm:$0xff]
    %v1785 = vld [vmem:[%s9 + $0xc0] sm:$0xff]
    %v1786 = vld [vmem:[%s9 + $0xc8] sm:$0xff]
    %v1787 = vld [vmem:[%s9 + $0xd0] sm:$0xff]
    %v1788 = vld [vmem:[%s9 + $0xd8] sm:$0xff]
    %v1789 = vld [vmem:[%s9 + $0xe0] sm:$0xff]
    %v1790 = vld [vmem:[%s9 + $0xe8] sm:$0xff]
    %v1791 = vld [vmem:[%s9 + $0xf0] sm:$0xff]
    %v1792 = vld [vmem:[%s9 + $0xf8] sm:$0xff]
    %1794 = vset.pattern.permute.xlu0 0
    %1795 = vperm.xlu0 %1794, %v1761
    %v1796 = vpop.permute.xlu0 %1795
    %1799 = vset.pattern.permute.xlu0 0
    %1800 = vperm.xlu0 %1799, %v1762
    %v1801 = vpop.permute.xlu0 %1800
    %1804 = vset.pattern.permute.xlu0 0
    %1805 = vperm.xlu0 %1804, %v1763
    %v1806 = vpop.permute.xlu0 %1805
    %1809 = vset.pattern.permute.xlu0 0
    %1810 = vperm.xlu0 %1809, %v1764
    %v1811 = vpop.permute.xlu0 %1810
    %1814 = vset.pattern.permute.xlu0 0
    %1815 = vperm.xlu0 %1814, %v1765
    %v1816 = vpop.permute.xlu0 %1815
    %1819 = vset.pattern.permute.xlu0 0
    %1820 = vperm.xlu0 %1819, %v1766
    %v1821 = vpop.permute.xlu0 %1820
    %1824 = vset.pattern.permute.xlu0 0
    %1825 = vperm.xlu0 %1824, %v1767
    %v1826 = vpop.permute.xlu0 %1825
    %1829 = vset.pattern.permute.xlu0 0
    %1830 = vperm.xlu0 %1829, %v1768
    %v1831 = vpop.permute.xlu0 %1830
    %1834 = vset.pattern.permute.xlu0 0
    %1835 = vperm.xlu0 %1834, %v1769
    %v1836 = vpop.permute.xlu0 %1835
    %1839 = vset.pattern.permute.xlu0 0
    %1840 = vperm.xlu0 %1839, %v1770
    %v1841 = vpop.permute.xlu0 %1840
    %1844 = vset.pattern.permute.xlu0 0
    %1845 = vperm.xlu0 %1844, %v1771
    %v1846 = vpop.permute.xlu0 %1845
    %1849 = vset.pattern.permute.xlu0 0
    %1850 = vperm.xlu0 %1849, %v1772
    %v1851 = vpop.permute.xlu0 %1850
    %1854 = vset.pattern.permute.xlu0 0
    %1855 = vperm.xlu0 %1854, %v1773
    %v1856 = vpop.permute.xlu0 %1855
    %1859 = vset.pattern.permute.xlu0 0
    %1860 = vperm.xlu0 %1859, %v1774
    %v1861 = vpop.permute.xlu0 %1860
    %1864 = vset.pattern.permute.xlu0 0
    %1865 = vperm.xlu0 %1864, %v1775
    %v1866 = vpop.permute.xlu0 %1865
    %1869 = vset.pattern.permute.xlu0 0
    %1870 = vperm.xlu0 %1869, %v1776
    %v1871 = vpop.permute.xlu0 %1870
    %1874 = vset.pattern.permute.xlu0 0
    %1875 = vperm.xlu0 %1874, %v1777
    %v1876 = vpop.permute.xlu0 %1875
    %1879 = vset.pattern.permute.xlu0 0
    %1880 = vperm.xlu0 %1879, %v1778
    %v1881 = vpop.permute.xlu0 %1880
    %1884 = vset.pattern.permute.xlu0 0
    %1885 = vperm.xlu0 %1884, %v1779
    %v1886 = vpop.permute.xlu0 %1885
    %1889 = vset.pattern.permute.xlu0 0
    %1890 = vperm.xlu0 %1889, %v1780
    %v1891 = vpop.permute.xlu0 %1890
    %1894 = vset.pattern.permute.xlu0 0
    %1895 = vperm.xlu0 %1894, %v1781
    %v1896 = vpop.permute.xlu0 %1895
    %1899 = vset.pattern.permute.xlu0 0
    %1900 = vperm.xlu0 %1899, %v1782
    %v1901 = vpop.permute.xlu0 %1900
    %1904 = vset.pattern.permute.xlu0 0
    %1905 = vperm.xlu0 %1904, %v1783
    %v1906 = vpop.permute.xlu0 %1905
    %1909 = vset.pattern.permute.xlu0 0
    %1910 = vperm.xlu0 %1909, %v1784
    %v1911 = vpop.permute.xlu0 %1910
    %1914 = vset.pattern.permute.xlu0 0
    %1915 = vperm.xlu0 %1914, %v1785
    %v1916 = vpop.permute.xlu0 %1915
    %1919 = vset.pattern.permute.xlu0 0
    %1920 = vperm.xlu0 %1919, %v1786
    %v1921 = vpop.permute.xlu0 %1920
    %1924 = vset.pattern.permute.xlu0 0
    %1925 = vperm.xlu0 %1924, %v1787
    %v1926 = vpop.permute.xlu0 %1925
    %1929 = vset.pattern.permute.xlu0 0
    %1930 = vperm.xlu0 %1929, %v1788
    %v1931 = vpop.permute.xlu0 %1930
    %1934 = vset.pattern.permute.xlu0 0
    %1935 = vperm.xlu0 %1934, %v1789
    %v1936 = vpop.permute.xlu0 %1935
    %1939 = vset.pattern.permute.xlu0 0
    %1940 = vperm.xlu0 %1939, %v1790
    %v1941 = vpop.permute.xlu0 %1940
    %1944 = vset.pattern.permute.xlu0 0
    %1945 = vperm.xlu0 %1944, %v1791
    %v1946 = vpop.permute.xlu0 %1945
    %1949 = vset.pattern.permute.xlu0 0
    %1950 = vperm.xlu0 %1949, %v1792
    %v1951 = vpop.permute.xlu0 %1950
    %v1953 = vmul.f32 %v1603, %v1796
    %v1954 = vmul.f32 %v1605, %v1796
    %v1955 = vmul.f32 %v1607, %v1801
    %v1956 = vmul.f32 %v1609, %v1801
    %v1957 = vmul.f32 %v1613, %v1806
    %v1958 = vmul.f32 %v1615, %v1806
    %v1959 = vmul.f32 %v1617, %v1811
    %v1960 = vmul.f32 %v1619, %v1811
    %v1961 = vmul.f32 %v1623, %v1816
    %v1962 = vmul.f32 %v1625, %v1816
    %v1963 = vmul.f32 %v1627, %v1821
    %v1964 = vmul.f32 %v1629, %v1821
    %v1965 = vmul.f32 %v1633, %v1826
    %v1966 = vmul.f32 %v1635, %v1826
    %v1967 = vmul.f32 %v1637, %v1831
    %v1968 = vmul.f32 %v1639, %v1831
    %v1969 = vmul.f32 %v1643, %v1836
    %v1970 = vmul.f32 %v1645, %v1836
    %v1971 = vmul.f32 %v1647, %v1841
    %v1972 = vmul.f32 %v1649, %v1841
    %v1973 = vmul.f32 %v1653, %v1846
    %v1974 = vmul.f32 %v1655, %v1846
    %v1975 = vmul.f32 %v1657, %v1851
    %v1976 = vmul.f32 %v1659, %v1851
    %v1977 = vmul.f32 %v1663, %v1856
    %v1978 = vmul.f32 %v1665, %v1856
    %v1979 = vmul.f32 %v1667, %v1861
    %v1980 = vmul.f32 %v1669, %v1861
    %v1981 = vmul.f32 %v1673, %v1866
    %v1982 = vmul.f32 %v1675, %v1866
    %v1983 = vmul.f32 %v1677, %v1871
    %v1984 = vmul.f32 %v1679, %v1871
    %v1985 = vmul.f32 %v1683, %v1876
    %v1986 = vmul.f32 %v1685, %v1876
    %v1987 = vmul.f32 %v1687, %v1881
    %v1988 = vmul.f32 %v1689, %v1881
    %v1989 = vmul.f32 %v1693, %v1886
    %v1990 = vmul.f32 %v1695, %v1886
    %v1991 = vmul.f32 %v1697, %v1891
    %v1992 = vmul.f32 %v1699, %v1891
    %v1993 = vmul.f32 %v1703, %v1896
    %v1994 = vmul.f32 %v1705, %v1896
    %v1995 = vmul.f32 %v1707, %v1901
    %v1996 = vmul.f32 %v1709, %v1901
    %v1997 = vmul.f32 %v1713, %v1906
    %v1998 = vmul.f32 %v1715, %v1906
    %v1999 = vmul.f32 %v1717, %v1911
    %v2000 = vmul.f32 %v1719, %v1911
    %v2001 = vmul.f32 %v1723, %v1916
    %v2002 = vmul.f32 %v1725, %v1916
    %v2003 = vmul.f32 %v1727, %v1921
    %v2004 = vmul.f32 %v1729, %v1921
    %v2005 = vmul.f32 %v1733, %v1926
    %v2006 = vmul.f32 %v1735, %v1926
    %v2007 = vmul.f32 %v1737, %v1931
    %v2008 = vmul.f32 %v1739, %v1931
    %v2009 = vmul.f32 %v1743, %v1936
    %v2010 = vmul.f32 %v1745, %v1936
    %v2011 = vmul.f32 %v1747, %v1941
    %v2012 = vmul.f32 %v1749, %v1941
    %v2013 = vmul.f32 %v1753, %v1946
    %v2014 = vmul.f32 %v1755, %v1946
    %v2015 = vmul.f32 %v1757, %v1951
    %v2016 = vmul.f32 %v1759, %v1951
    %v2017 = vld [vmem:[%s10] sm:$0xff]
    %v2018 = vld [vmem:[%s10 + $0x8] sm:$0xff]
    %v2019 = vld [vmem:[%s10 + $0x10] sm:$0xff]
    %v2020 = vld [vmem:[%s10 + $0x18] sm:$0xff]
    %v2021 = vld [vmem:[%s10 + $0x20] sm:$0xff]
    %v2022 = vld [vmem:[%s10 + $0x28] sm:$0xff]
    %v2023 = vld [vmem:[%s10 + $0x30] sm:$0xff]
    %v2024 = vld [vmem:[%s10 + $0x38] sm:$0xff]
    %v2025 = vld [vmem:[%s10 + $0x40] sm:$0xff]
    %v2026 = vld [vmem:[%s10 + $0x48] sm:$0xff]
    %v2027 = vld [vmem:[%s10 + $0x50] sm:$0xff]
    %v2028 = vld [vmem:[%s10 + $0x58] sm:$0xff]
    %v2029 = vld [vmem:[%s10 + $0x60] sm:$0xff]
    %v2030 = vld [vmem:[%s10 + $0x68] sm:$0xff]
    %v2031 = vld [vmem:[%s10 + $0x70] sm:$0xff]
    %v2032 = vld [vmem:[%s10 + $0x78] sm:$0xff]
    %v2033 = vld [vmem:[%s10 + $0x80] sm:$0xff]
    %v2034 = vld [vmem:[%s10 + $0x88] sm:$0xff]
    %v2035 = vld [vmem:[%s10 + $0x90] sm:$0xff]
    %v2036 = vld [vmem:[%s10 + $0x98] sm:$0xff]
    %v2037 = vld [vmem:[%s10 + $0xa0] sm:$0xff]
    %v2038 = vld [vmem:[%s10 + $0xa8] sm:$0xff]
    %v2039 = vld [vmem:[%s10 + $0xb0] sm:$0xff]
    %v2040 = vld [vmem:[%s10 + $0xb8] sm:$0xff]
    %v2041 = vld [vmem:[%s10 + $0xc0] sm:$0xff]
    %v2042 = vld [vmem:[%s10 + $0xc8] sm:$0xff]
    %v2043 = vld [vmem:[%s10 + $0xd0] sm:$0xff]
    %v2044 = vld [vmem:[%s10 + $0xd8] sm:$0xff]
    %v2045 = vld [vmem:[%s10 + $0xe0] sm:$0xff]
    %v2046 = vld [vmem:[%s10 + $0xe8] sm:$0xff]
    %v2047 = vld [vmem:[%s10 + $0xf0] sm:$0xff]
    %v2048 = vld [vmem:[%s10 + $0xf8] sm:$0xff]
    %2050 = vset.pattern.permute.xlu0 0
    %2051 = vperm.xlu0 %2050, %v2017
    %v2052 = vpop.permute.xlu0 %2051
    %2055 = vset.pattern.permute.xlu0 0
    %2056 = vperm.xlu0 %2055, %v2018
    %v2057 = vpop.permute.xlu0 %2056
    %2060 = vset.pattern.permute.xlu0 0
    %2061 = vperm.xlu0 %2060, %v2019
    %v2062 = vpop.permute.xlu0 %2061
    %2065 = vset.pattern.permute.xlu0 0
    %2066 = vperm.xlu0 %2065, %v2020
    %v2067 = vpop.permute.xlu0 %2066
    %2070 = vset.pattern.permute.xlu0 0
    %2071 = vperm.xlu0 %2070, %v2021
    %v2072 = vpop.permute.xlu0 %2071
    %2075 = vset.pattern.permute.xlu0 0
    %2076 = vperm.xlu0 %2075, %v2022
    %v2077 = vpop.permute.xlu0 %2076
    %2080 = vset.pattern.permute.xlu0 0
    %2081 = vperm.xlu0 %2080, %v2023
    %v2082 = vpop.permute.xlu0 %2081
    %2085 = vset.pattern.permute.xlu0 0
    %2086 = vperm.xlu0 %2085, %v2024
    %v2087 = vpop.permute.xlu0 %2086
    %2090 = vset.pattern.permute.xlu0 0
    %2091 = vperm.xlu0 %2090, %v2025
    %v2092 = vpop.permute.xlu0 %2091
    %2095 = vset.pattern.permute.xlu0 0
    %2096 = vperm.xlu0 %2095, %v2026
    %v2097 = vpop.permute.xlu0 %2096
    %2100 = vset.pattern.permute.xlu0 0
    %2101 = vperm.xlu0 %2100, %v2027
    %v2102 = vpop.permute.xlu0 %2101
    %2105 = vset.pattern.permute.xlu0 0
    %2106 = vperm.xlu0 %2105, %v2028
    %v2107 = vpop.permute.xlu0 %2106
    %2110 = vset.pattern.permute.xlu0 0
    %2111 = vperm.xlu0 %2110, %v2029
    %v2112 = vpop.permute.xlu0 %2111
    %2115 = vset.pattern.permute.xlu0 0
    %2116 = vperm.xlu0 %2115, %v2030
    %v2117 = vpop.permute.xlu0 %2116
    %2120 = vset.pattern.permute.xlu0 0
    %2121 = vperm.xlu0 %2120, %v2031
    %v2122 = vpop.permute.xlu0 %2121
    %2125 = vset.pattern.permute.xlu0 0
    %2126 = vperm.xlu0 %2125, %v2032
    %v2127 = vpop.permute.xlu0 %2126
    %2130 = vset.pattern.permute.xlu0 0
    %2131 = vperm.xlu0 %2130, %v2033
    %v2132 = vpop.permute.xlu0 %2131
    %2135 = vset.pattern.permute.xlu0 0
    %2136 = vperm.xlu0 %2135, %v2034
    %v2137 = vpop.permute.xlu0 %2136
    %2140 = vset.pattern.permute.xlu0 0
    %2141 = vperm.xlu0 %2140, %v2035
    %v2142 = vpop.permute.xlu0 %2141
    %2145 = vset.pattern.permute.xlu0 0
    %2146 = vperm.xlu0 %2145, %v2036
    %v2147 = vpop.permute.xlu0 %2146
    %2150 = vset.pattern.permute.xlu0 0
    %2151 = vperm.xlu0 %2150, %v2037
    %v2152 = vpop.permute.xlu0 %2151
    %2155 = vset.pattern.permute.xlu0 0
    %2156 = vperm.xlu0 %2155, %v2038
    %v2157 = vpop.permute.xlu0 %2156
    %2160 = vset.pattern.permute.xlu0 0
    %2161 = vperm.xlu0 %2160, %v2039
    %v2162 = vpop.permute.xlu0 %2161
    %2165 = vset.pattern.permute.xlu0 0
    %2166 = vperm.xlu0 %2165, %v2040
    %v2167 = vpop.permute.xlu0 %2166
    %2170 = vset.pattern.permute.xlu0 0
    %2171 = vperm.xlu0 %2170, %v2041
    %v2172 = vpop.permute.xlu0 %2171
    %2175 = vset.pattern.permute.xlu0 0
    %2176 = vperm.xlu0 %2175, %v2042
    %v2177 = vpop.permute.xlu0 %2176
    %2180 = vset.pattern.permute.xlu0 0
    %2181 = vperm.xlu0 %2180, %v2043
    %v2182 = vpop.permute.xlu0 %2181
    %2185 = vset.pattern.permute.xlu0 0
    %2186 = vperm.xlu0 %2185, %v2044
    %v2187 = vpop.permute.xlu0 %2186
    %2190 = vset.pattern.permute.xlu0 0
    %2191 = vperm.xlu0 %2190, %v2045
    %v2192 = vpop.permute.xlu0 %2191
    %2195 = vset.pattern.permute.xlu0 0
    %2196 = vperm.xlu0 %2195, %v2046
    %v2197 = vpop.permute.xlu0 %2196
    %2200 = vset.pattern.permute.xlu0 0
    %2201 = vperm.xlu0 %2200, %v2047
    %v2202 = vpop.permute.xlu0 %2201
    %2205 = vset.pattern.permute.xlu0 0
    %2206 = vperm.xlu0 %2205, %v2048
    %v2207 = vpop.permute.xlu0 %2206
    %v2209 = vadd.f32 %v1953, %v2052
    %v2210 = vadd.f32 %v1954, %v2052
    %v2211 = vadd.f32 %v1955, %v2057
    %v2212 = vadd.f32 %v1956, %v2057
    %v2213 = vadd.f32 %v1957, %v2062
    %v2214 = vadd.f32 %v1958, %v2062
    %v2215 = vadd.f32 %v1959, %v2067
    %v2216 = vadd.f32 %v1960, %v2067
    %v2217 = vadd.f32 %v1961, %v2072
    %v2218 = vadd.f32 %v1962, %v2072
    %v2219 = vadd.f32 %v1963, %v2077
    %v2220 = vadd.f32 %v1964, %v2077
    %v2221 = vadd.f32 %v1965, %v2082
    %v2222 = vadd.f32 %v1966, %v2082
    %v2223 = vadd.f32 %v1967, %v2087
    %v2224 = vadd.f32 %v1968, %v2087
    %v2225 = vadd.f32 %v1969, %v2092
    %v2226 = vadd.f32 %v1970, %v2092
    %v2227 = vadd.f32 %v1971, %v2097
    %v2228 = vadd.f32 %v1972, %v2097
    %v2229 = vadd.f32 %v1973, %v2102
    %v2230 = vadd.f32 %v1974, %v2102
    %v2231 = vadd.f32 %v1975, %v2107
    %v2232 = vadd.f32 %v1976, %v2107
    %v2233 = vadd.f32 %v1977, %v2112
    %v2234 = vadd.f32 %v1978, %v2112
    %v2235 = vadd.f32 %v1979, %v2117
    %v2236 = vadd.f32 %v1980, %v2117
    %v2237 = vadd.f32 %v1981, %v2122
    %v2238 = vadd.f32 %v1982, %v2122
    %v2239 = vadd.f32 %v1983, %v2127
    %v2240 = vadd.f32 %v1984, %v2127
    %v2241 = vadd.f32 %v1985, %v2132
    %v2242 = vadd.f32 %v1986, %v2132
    %v2243 = vadd.f32 %v1987, %v2137
    %v2244 = vadd.f32 %v1988, %v2137
    %v2245 = vadd.f32 %v1989, %v2142
    %v2246 = vadd.f32 %v1990, %v2142
    %v2247 = vadd.f32 %v1991, %v2147
    %v2248 = vadd.f32 %v1992, %v2147
    %v2249 = vadd.f32 %v1993, %v2152
    %v2250 = vadd.f32 %v1994, %v2152
    %v2251 = vadd.f32 %v1995, %v2157
    %v2252 = vadd.f32 %v1996, %v2157
    %v2253 = vadd.f32 %v1997, %v2162
    %v2254 = vadd.f32 %v1998, %v2162
    %v2255 = vadd.f32 %v1999, %v2167
    %v2256 = vadd.f32 %v2000, %v2167
    %v2257 = vadd.f32 %v2001, %v2172
    %v2258 = vadd.f32 %v2002, %v2172
    %v2259 = vadd.f32 %v2003, %v2177
    %v2260 = vadd.f32 %v2004, %v2177
    %v2261 = vadd.f32 %v2005, %v2182
    %v2262 = vadd.f32 %v2006, %v2182
    %v2263 = vadd.f32 %v2007, %v2187
    %v2264 = vadd.f32 %v2008, %v2187
    %v2265 = vadd.f32 %v2009, %v2192
    %v2266 = vadd.f32 %v2010, %v2192
    %v2267 = vadd.f32 %v2011, %v2197
    %v2268 = vadd.f32 %v2012, %v2197
    %v2269 = vadd.f32 %v2013, %v2202
    %v2270 = vadd.f32 %v2014, %v2202
    %v2271 = vadd.f32 %v2015, %v2207
    %v2272 = vadd.f32 %v2016, %v2207
    %v2273 = vmax.f32 %v2209, 0.0
    %v2274 = vmax.f32 %v2210, 0.0
    %v2275 = vmax.f32 %v2211, 0.0
    %v2276 = vmax.f32 %v2212, 0.0
    %v2277 = vmax.f32 %v2213, 0.0
    %v2278 = vmax.f32 %v2214, 0.0
    %v2279 = vmax.f32 %v2215, 0.0
    %v2280 = vmax.f32 %v2216, 0.0
    %v2281 = vmax.f32 %v2217, 0.0
    %v2282 = vmax.f32 %v2218, 0.0
    %v2283 = vmax.f32 %v2219, 0.0
    %v2284 = vmax.f32 %v2220, 0.0
    %v2285 = vmax.f32 %v2221, 0.0
    %v2286 = vmax.f32 %v2222, 0.0
    %v2287 = vmax.f32 %v2223, 0.0
    %v2288 = vmax.f32 %v2224, 0.0
    %v2289 = vmax.f32 %v2225, 0.0
    %v2290 = vmax.f32 %v2226, 0.0
    %v2291 = vmax.f32 %v2227, 0.0
    %v2292 = vmax.f32 %v2228, 0.0
    %v2293 = vmax.f32 %v2229, 0.0
    %v2294 = vmax.f32 %v2230, 0.0
    %v2295 = vmax.f32 %v2231, 0.0
    %v2296 = vmax.f32 %v2232, 0.0
    %v2297 = vmax.f32 %v2233, 0.0
    %v2298 = vmax.f32 %v2234, 0.0
    %v2299 = vmax.f32 %v2235, 0.0
    %v2300 = vmax.f32 %v2236, 0.0
    %v2301 = vmax.f32 %v2237, 0.0
    %v2302 = vmax.f32 %v2238, 0.0
    %v2303 = vmax.f32 %v2239, 0.0
    %v2304 = vmax.f32 %v2240, 0.0
    %v2305 = vmax.f32 %v2241, 0.0
    %v2306 = vmax.f32 %v2242, 0.0
    %v2307 = vmax.f32 %v2243, 0.0
    %v2308 = vmax.f32 %v2244, 0.0
    %v2309 = vmax.f32 %v2245, 0.0
    %v2310 = vmax.f32 %v2246, 0.0
    %v2311 = vmax.f32 %v2247, 0.0
    %v2312 = vmax.f32 %v2248, 0.0
    %v2313 = vmax.f32 %v2249, 0.0
    %v2314 = vmax.f32 %v2250, 0.0
    %v2315 = vmax.f32 %v2251, 0.0
    %v2316 = vmax.f32 %v2252, 0.0
    %v2317 = vmax.f32 %v2253, 0.0
    %v2318 = vmax.f32 %v2254, 0.0
    %v2319 = vmax.f32 %v2255, 0.0
    %v2320 = vmax.f32 %v2256, 0.0
    %v2321 = vmax.f32 %v2257, 0.0
    %v2322 = vmax.f32 %v2258, 0.0
    %v2323 = vmax.f32 %v2259, 0.0
    %v2324 = vmax.f32 %v2260, 0.0
    %v2325 = vmax.f32 %v2261, 0.0
    %v2326 = vmax.f32 %v2262, 0.0
    %v2327 = vmax.f32 %v2263, 0.0
    %v2328 = vmax.f32 %v2264, 0.0
    %v2329 = vmax.f32 %v2265, 0.0
    %v2330 = vmax.f32 %v2266, 0.0
    %v2331 = vmax.f32 %v2267, 0.0
    %v2332 = vmax.f32 %v2268, 0.0
    %v2333 = vmax.f32 %v2269, 0.0
    %v2334 = vmax.f32 %v2270, 0.0
    %v2335 = vmax.f32 %v2271, 0.0
    %v2336 = vmax.f32 %v2272, 0.0
    %2337 = vmax.xlane.f32.xlu0 %v2273
    %v2338 = vpop.xlane.xlu0 %2337
    %2339 = vmax.xlane.f32.xlu0 %v2275
    %v2340 = vpop.xlane.xlu0 %2339
    %2341 = vmax.xlane.f32.xlu0 %v2277
    %v2342 = vpop.xlane.xlu0 %2341
    %2343 = vmax.xlane.f32.xlu0 %v2279
    %v2344 = vpop.xlane.xlu0 %2343
    %2345 = vmax.xlane.f32.xlu0 %v2281
    %v2346 = vpop.xlane.xlu0 %2345
    %2347 = vmax.xlane.f32.xlu0 %v2283
    %v2348 = vpop.xlane.xlu0 %2347
    %2349 = vmax.xlane.f32.xlu0 %v2285
    %v2350 = vpop.xlane.xlu0 %2349
    %2351 = vmax.xlane.f32.xlu0 %v2287
    %v2352 = vpop.xlane.xlu0 %2351
    %2353 = vmax.xlane.f32.xlu0 %v2289
    %v2354 = vpop.xlane.xlu0 %2353
    %2355 = vmax.xlane.f32.xlu0 %v2291
    %v2356 = vpop.xlane.xlu0 %2355
    %2357 = vmax.xlane.f32.xlu0 %v2293
    %v2358 = vpop.xlane.xlu0 %2357
    %2359 = vmax.xlane.f32.xlu0 %v2295
    %v2360 = vpop.xlane.xlu0 %2359
    %2361 = vmax.xlane.f32.xlu0 %v2297
    %v2362 = vpop.xlane.xlu0 %2361
    %2363 = vmax.xlane.f32.xlu0 %v2299
    %v2364 = vpop.xlane.xlu0 %2363
    %2365 = vmax.xlane.f32.xlu0 %v2301
    %v2366 = vpop.xlane.xlu0 %2365
    %2367 = vmax.xlane.f32.xlu0 %v2303
    %v2368 = vpop.xlane.xlu0 %2367
    %2369 = vmax.xlane.f32.xlu0 %v2305
    %v2370 = vpop.xlane.xlu0 %2369
    %2371 = vmax.xlane.f32.xlu0 %v2307
    %v2372 = vpop.xlane.xlu0 %2371
    %2373 = vmax.xlane.f32.xlu0 %v2309
    %v2374 = vpop.xlane.xlu0 %2373
    %2375 = vmax.xlane.f32.xlu0 %v2311
    %v2376 = vpop.xlane.xlu0 %2375
    %2377 = vmax.xlane.f32.xlu0 %v2313
    %v2378 = vpop.xlane.xlu0 %2377
    %2379 = vmax.xlane.f32.xlu0 %v2315
    %v2380 = vpop.xlane.xlu0 %2379
    %2381 = vmax.xlane.f32.xlu0 %v2317
    %v2382 = vpop.xlane.xlu0 %2381
    %2383 = vmax.xlane.f32.xlu0 %v2319
    %v2384 = vpop.xlane.xlu0 %2383
    %2385 = vmax.xlane.f32.xlu0 %v2321
    %v2386 = vpop.xlane.xlu0 %2385
    %2387 = vmax.xlane.f32.xlu0 %v2323
    %v2388 = vpop.xlane.xlu0 %2387
    %2389 = vmax.xlane.f32.xlu0 %v2325
    %v2390 = vpop.xlane.xlu0 %2389
    %2391 = vmax.xlane.f32.xlu0 %v2327
    %v2392 = vpop.xlane.xlu0 %2391
    %2393 = vmax.xlane.f32.xlu0 %v2329
    %v2394 = vpop.xlane.xlu0 %2393
    %2395 = vmax.xlane.f32.xlu0 %v2331
    %v2396 = vpop.xlane.xlu0 %2395
    %2397 = vmax.xlane.f32.xlu0 %v2333
    %v2398 = vpop.xlane.xlu0 %2397
    %2399 = vmax.xlane.f32.xlu0 %v2335
    %v2400 = vpop.xlane.xlu0 %2399
    %2401 = vmax.xlane.f32.xlu0 %v2274
    %v2402 = vpop.xlane.xlu0 %2401
    %2403 = vmax.xlane.f32.xlu0 %v2276
    %v2404 = vpop.xlane.xlu0 %2403
    %2405 = vmax.xlane.f32.xlu0 %v2278
    %v2406 = vpop.xlane.xlu0 %2405
    %2407 = vmax.xlane.f32.xlu0 %v2280
    %v2408 = vpop.xlane.xlu0 %2407
    %2409 = vmax.xlane.f32.xlu0 %v2282
    %v2410 = vpop.xlane.xlu0 %2409
    %2411 = vmax.xlane.f32.xlu0 %v2284
    %v2412 = vpop.xlane.xlu0 %2411
    %2413 = vmax.xlane.f32.xlu0 %v2286
    %v2414 = vpop.xlane.xlu0 %2413
    %2415 = vmax.xlane.f32.xlu0 %v2288
    %v2416 = vpop.xlane.xlu0 %2415
    %2417 = vmax.xlane.f32.xlu0 %v2290
    %v2418 = vpop.xlane.xlu0 %2417
    %2419 = vmax.xlane.f32.xlu0 %v2292
    %v2420 = vpop.xlane.xlu0 %2419
    %2421 = vmax.xlane.f32.xlu0 %v2294
    %v2422 = vpop.xlane.xlu0 %2421
    %2423 = vmax.xlane.f32.xlu0 %v2296
    %v2424 = vpop.xlane.xlu0 %2423
    %2425 = vmax.xlane.f32.xlu0 %v2298
    %v2426 = vpop.xlane.xlu0 %2425
    %2427 = vmax.xlane.f32.xlu0 %v2300
    %v2428 = vpop.xlane.xlu0 %2427
    %2429 = vmax.xlane.f32.xlu0 %v2302
    %v2430 = vpop.xlane.xlu0 %2429
    %2431 = vmax.xlane.f32.xlu0 %v2304
    %v2432 = vpop.xlane.xlu0 %2431
    %2433 = vmax.xlane.f32.xlu0 %v2306
    %v2434 = vpop.xlane.xlu0 %2433
    %2435 = vmax.xlane.f32.xlu0 %v2308
    %v2436 = vpop.xlane.xlu0 %2435
    %2437 = vmax.xlane.f32.xlu0 %v2310
    %v2438 = vpop.xlane.xlu0 %2437
    %2439 = vmax.xlane.f32.xlu0 %v2312
    %v2440 = vpop.xlane.xlu0 %2439
    %2441 = vmax.xlane.f32.xlu0 %v2314
    %v2442 = vpop.xlane.xlu0 %2441
    %2443 = vmax.xlane.f32.xlu0 %v2316
    %v2444 = vpop.xlane.xlu0 %2443
    %2445 = vmax.xlane.f32.xlu0 %v2318
    %v2446 = vpop.xlane.xlu0 %2445
    %2447 = vmax.xlane.f32.xlu0 %v2320
    %v2448 = vpop.xlane.xlu0 %2447
    %2449 = vmax.xlane.f32.xlu0 %v2322
    %v2450 = vpop.xlane.xlu0 %2449
    %2451 = vmax.xlane.f32.xlu0 %v2324
    %v2452 = vpop.xlane.xlu0 %2451
    %2453 = vmax.xlane.f32.xlu0 %v2326
    %v2454 = vpop.xlane.xlu0 %2453
    %2455 = vmax.xlane.f32.xlu0 %v2328
    %v2456 = vpop.xlane.xlu0 %2455
    %2457 = vmax.xlane.f32.xlu0 %v2330
    %v2458 = vpop.xlane.xlu0 %2457
    %2459 = vmax.xlane.f32.xlu0 %v2332
    %v2460 = vpop.xlane.xlu0 %2459
    %2461 = vmax.xlane.f32.xlu0 %v2334
    %v2462 = vpop.xlane.xlu0 %2461
    %2463 = vmax.xlane.f32.xlu0 %v2336
    %v2464 = vpop.xlane.xlu0 %2463
    %vm2465 = vcmask 7168
    %v2466 = vsel %vm2465, %v2338, %v2402
    %v2467 = vsel %vm2465, %v2340, %v2404
    %v2468 = vsel %vm2465, %v2342, %v2406
    %v2469 = vsel %vm2465, %v2344, %v2408
    %v2470 = vsel %vm2465, %v2346, %v2410
    %v2471 = vsel %vm2465, %v2348, %v2412
    %v2472 = vsel %vm2465, %v2350, %v2414
    %v2473 = vsel %vm2465, %v2352, %v2416
    %v2474 = vsel %vm2465, %v2354, %v2418
    %v2475 = vsel %vm2465, %v2356, %v2420
    %v2476 = vsel %vm2465, %v2358, %v2422
    %v2477 = vsel %vm2465, %v2360, %v2424
    %v2478 = vsel %vm2465, %v2362, %v2426
    %v2479 = vsel %vm2465, %v2364, %v2428
    %v2480 = vsel %vm2465, %v2366, %v2430
    %v2481 = vsel %vm2465, %v2368, %v2432
    %v2482 = vsel %vm2465, %v2370, %v2434
    %v2483 = vsel %vm2465, %v2372, %v2436
    %v2484 = vsel %vm2465, %v2374, %v2438
    %v2485 = vsel %vm2465, %v2376, %v2440
    %v2486 = vsel %vm2465, %v2378, %v2442
    %v2487 = vsel %vm2465, %v2380, %v2444
    %v2488 = vsel %vm2465, %v2382, %v2446
    %v2489 = vsel %vm2465, %v2384, %v2448
    %v2490 = vsel %vm2465, %v2386, %v2450
    %v2491 = vsel %vm2465, %v2388, %v2452
    %v2492 = vsel %vm2465, %v2390, %v2454
    %v2493 = vsel %vm2465, %v2392, %v2456
    %v2494 = vsel %vm2465, %v2394, %v2458
    %v2495 = vsel %vm2465, %v2396, %v2460
    %v2496 = vsel %vm2465, %v2398, %v2462
    %v2497 = vsel %vm2465, %v2400, %v2464
    %v2498 = vld [vmem:[%s1] sm:$0x7]
    %v2499 = vld [vmem:[%s12] sm:$0xff]
    %v2500 = vld [vmem:[%s12 + $0x8] sm:$0xff]
    %v2501 = vld [vmem:[%s12 + $0x10] sm:$0xff]
    %v2502 = vld [vmem:[%s12 + $0x18] sm:$0xff]
    %v2503 = vld [vmem:[%s12 + $0x20] sm:$0xff]
    %v2504 = vld [vmem:[%s12 + $0x28] sm:$0xff]
    %v2505 = vld [vmem:[%s12 + $0x30] sm:$0xff]
    %v2506 = vld [vmem:[%s12 + $0x38] sm:$0xff]
    %v2507 = vld [vmem:[%s12 + $0x40] sm:$0xff]
    %v2508 = vld [vmem:[%s12 + $0x48] sm:$0xff]
    %v2509 = vld [vmem:[%s12 + $0x50] sm:$0xff]
    %v2510 = vld [vmem:[%s12 + $0x58] sm:$0xff]
    %v2511 = vld [vmem:[%s12 + $0x60] sm:$0xff]
    %v2512 = vld [vmem:[%s12 + $0x68] sm:$0xff]
    %v2513 = vld [vmem:[%s12 + $0x70] sm:$0xff]
    %v2514 = vld [vmem:[%s12 + $0x78] sm:$0xff]
    %v2515 = vld [vmem:[%s12 + $0x80] sm:$0xff]
    %v2516 = vld [vmem:[%s12 + $0x88] sm:$0xff]
    %v2517 = vld [vmem:[%s12 + $0x90] sm:$0xff]
    %v2518 = vld [vmem:[%s12 + $0x98] sm:$0xff]
    %v2519 = vld [vmem:[%s12 + $0xa0] sm:$0xff]
    %v2520 = vld [vmem:[%s12 + $0xa8] sm:$0xff]
    %v2521 = vld [vmem:[%s12 + $0xb0] sm:$0xff]
    %v2522 = vld [vmem:[%s12 + $0xb8] sm:$0xff]
    %v2523 = vld [vmem:[%s12 + $0xc0] sm:$0xff]
    %v2524 = vld [vmem:[%s12 + $0xc8] sm:$0xff]
    %v2525 = vld [vmem:[%s12 + $0xd0] sm:$0xff]
    %v2526 = vld [vmem:[%s12 + $0xd8] sm:$0xff]
    %v2527 = vld [vmem:[%s12 + $0xe0] sm:$0xff]
    %v2528 = vld [vmem:[%s12 + $0xe8] sm:$0xff]
    %v2529 = vld [vmem:[%s12 + $0xf0] sm:$0xff]
    %v2530 = vld [vmem:[%s12 + $0xf8] sm:$0xff]
    %v2531 = vld [vmem:[%s11] sm:$0xff]
    %v2532 = vld [vmem:[%s11 + $0x8] sm:$0xff]
    %v2533 = vld [vmem:[%s11 + $0x10] sm:$0xff]
    %v2534 = vld [vmem:[%s11 + $0x18] sm:$0xff]
    %v2535 = vld [vmem:[%s11 + $0x20] sm:$0xff]
    %v2536 = vld [vmem:[%s11 + $0x28] sm:$0xff]
    %v2537 = vld [vmem:[%s11 + $0x30] sm:$0xff]
    %v2538 = vld [vmem:[%s11 + $0x38] sm:$0xff]
    %v2539 = vld [vmem:[%s11 + $0x40] sm:$0xff]
    %v2540 = vld [vmem:[%s11 + $0x48] sm:$0xff]
    %v2541 = vld [vmem:[%s11 + $0x50] sm:$0xff]
    %v2542 = vld [vmem:[%s11 + $0x58] sm:$0xff]
    %v2543 = vld [vmem:[%s11 + $0x60] sm:$0xff]
    %v2544 = vld [vmem:[%s11 + $0x68] sm:$0xff]
    %v2545 = vld [vmem:[%s11 + $0x70] sm:$0xff]
    %v2546 = vld [vmem:[%s11 + $0x78] sm:$0xff]
    %v2547 = vld [vmem:[%s11 + $0x80] sm:$0xff]
    %v2548 = vld [vmem:[%s11 + $0x88] sm:$0xff]
    %v2549 = vld [vmem:[%s11 + $0x90] sm:$0xff]
    %v2550 = vld [vmem:[%s11 + $0x98] sm:$0xff]
    %v2551 = vld [vmem:[%s11 + $0xa0] sm:$0xff]
    %v2552 = vld [vmem:[%s11 + $0xa8] sm:$0xff]
    %v2553 = vld [vmem:[%s11 + $0xb0] sm:$0xff]
    %v2554 = vld [vmem:[%s11 + $0xb8] sm:$0xff]
    %v2555 = vld [vmem:[%s11 + $0xc0] sm:$0xff]
    %v2556 = vld [vmem:[%s11 + $0xc8] sm:$0xff]
    %v2557 = vld [vmem:[%s11 + $0xd0] sm:$0xff]
    %v2558 = vld [vmem:[%s11 + $0xd8] sm:$0xff]
    %v2559 = vld [vmem:[%s11 + $0xe0] sm:$0xff]
    %v2560 = vld [vmem:[%s11 + $0xe8] sm:$0xff]
    %v2561 = vld [vmem:[%s11 + $0xf0] sm:$0xff]
    %v2562 = vld [vmem:[%s11 + $0xf8] sm:$0xff]
    %v2563 = vld [vmem:[%s11 + $0x100] sm:$0xff]
    %v2564 = vld [vmem:[%s11 + $0x108] sm:$0xff]
    %v2565 = vld [vmem:[%s11 + $0x110] sm:$0xff]
    %v2566 = vld [vmem:[%s11 + $0x118] sm:$0xff]
    %v2567 = vld [vmem:[%s11 + $0x120] sm:$0xff]
    %v2568 = vld [vmem:[%s11 + $0x128] sm:$0xff]
    %v2569 = vld [vmem:[%s11 + $0x130] sm:$0xff]
    %v2570 = vld [vmem:[%s11 + $0x138] sm:$0xff]
    %v2571 = vld [vmem:[%s11 + $0x140] sm:$0xff]
    %v2572 = vld [vmem:[%s11 + $0x148] sm:$0xff]
    %v2573 = vld [vmem:[%s11 + $0x150] sm:$0xff]
    %v2574 = vld [vmem:[%s11 + $0x158] sm:$0xff]
    %v2575 = vld [vmem:[%s11 + $0x160] sm:$0xff]
    %v2576 = vld [vmem:[%s11 + $0x168] sm:$0xff]
    %v2577 = vld [vmem:[%s11 + $0x170] sm:$0xff]
    %v2578 = vld [vmem:[%s11 + $0x178] sm:$0xff]
    %v2579 = vld [vmem:[%s11 + $0x180] sm:$0xff]
    %v2580 = vld [vmem:[%s11 + $0x188] sm:$0xff]
    %v2581 = vld [vmem:[%s11 + $0x190] sm:$0xff]
    %v2582 = vld [vmem:[%s11 + $0x198] sm:$0xff]
    %v2583 = vld [vmem:[%s11 + $0x1a0] sm:$0xff]
    %v2584 = vld [vmem:[%s11 + $0x1a8] sm:$0xff]
    %v2585 = vld [vmem:[%s11 + $0x1b0] sm:$0xff]
    %v2586 = vld [vmem:[%s11 + $0x1b8] sm:$0xff]
    %v2587 = vld [vmem:[%s11 + $0x1c0] sm:$0xff]
    %v2588 = vld [vmem:[%s11 + $0x1c8] sm:$0xff]
    %v2589 = vld [vmem:[%s11 + $0x1d0] sm:$0xff]
    %v2590 = vld [vmem:[%s11 + $0x1d8] sm:$0xff]
    %v2591 = vld [vmem:[%s11 + $0x1e0] sm:$0xff]
    %v2592 = vld [vmem:[%s11 + $0x1e8] sm:$0xff]
    %v2593 = vld [vmem:[%s11 + $0x1f0] sm:$0xff]
    %v2594 = vld [vmem:[%s11 + $0x1f8] sm:$0xff]
    %2596 = vset.pattern.permute.xlu0 0
    %2597 = vperm.xlu0 %2596, %v2499
    %v2598 = vpop.permute.xlu0 %2597
    %2601 = vset.pattern.permute.xlu0 0
    %2602 = vperm.xlu0 %2601, %v2500
    %v2603 = vpop.permute.xlu0 %2602
    %2606 = vset.pattern.permute.xlu0 0
    %2607 = vperm.xlu0 %2606, %v2501
    %v2608 = vpop.permute.xlu0 %2607
    %2611 = vset.pattern.permute.xlu0 0
    %2612 = vperm.xlu0 %2611, %v2502
    %v2613 = vpop.permute.xlu0 %2612
    %2616 = vset.pattern.permute.xlu0 0
    %2617 = vperm.xlu0 %2616, %v2503
    %v2618 = vpop.permute.xlu0 %2617
    %2621 = vset.pattern.permute.xlu0 0
    %2622 = vperm.xlu0 %2621, %v2504
    %v2623 = vpop.permute.xlu0 %2622
    %2626 = vset.pattern.permute.xlu0 0
    %2627 = vperm.xlu0 %2626, %v2505
    %v2628 = vpop.permute.xlu0 %2627
    %2631 = vset.pattern.permute.xlu0 0
    %2632 = vperm.xlu0 %2631, %v2506
    %v2633 = vpop.permute.xlu0 %2632
    %2636 = vset.pattern.permute.xlu0 0
    %2637 = vperm.xlu0 %2636, %v2507
    %v2638 = vpop.permute.xlu0 %2637
    %2641 = vset.pattern.permute.xlu0 0
    %2642 = vperm.xlu0 %2641, %v2508
    %v2643 = vpop.permute.xlu0 %2642
    %2646 = vset.pattern.permute.xlu0 0
    %2647 = vperm.xlu0 %2646, %v2509
    %v2648 = vpop.permute.xlu0 %2647
    %2651 = vset.pattern.permute.xlu0 0
    %2652 = vperm.xlu0 %2651, %v2510
    %v2653 = vpop.permute.xlu0 %2652
    %2656 = vset.pattern.permute.xlu0 0
    %2657 = vperm.xlu0 %2656, %v2511
    %v2658 = vpop.permute.xlu0 %2657
    %2661 = vset.pattern.permute.xlu0 0
    %2662 = vperm.xlu0 %2661, %v2512
    %v2663 = vpop.permute.xlu0 %2662
    %2666 = vset.pattern.permute.xlu0 0
    %2667 = vperm.xlu0 %2666, %v2513
    %v2668 = vpop.permute.xlu0 %2667
    %2671 = vset.pattern.permute.xlu0 0
    %2672 = vperm.xlu0 %2671, %v2514
    %v2673 = vpop.permute.xlu0 %2672
    %2676 = vset.pattern.permute.xlu0 0
    %2677 = vperm.xlu0 %2676, %v2515
    %v2678 = vpop.permute.xlu0 %2677
    %2681 = vset.pattern.permute.xlu0 0
    %2682 = vperm.xlu0 %2681, %v2516
    %v2683 = vpop.permute.xlu0 %2682
    %2686 = vset.pattern.permute.xlu0 0
    %2687 = vperm.xlu0 %2686, %v2517
    %v2688 = vpop.permute.xlu0 %2687
    %2691 = vset.pattern.permute.xlu0 0
    %2692 = vperm.xlu0 %2691, %v2518
    %v2693 = vpop.permute.xlu0 %2692
    %2696 = vset.pattern.permute.xlu0 0
    %2697 = vperm.xlu0 %2696, %v2519
    %v2698 = vpop.permute.xlu0 %2697
    %2701 = vset.pattern.permute.xlu0 0
    %2702 = vperm.xlu0 %2701, %v2520
    %v2703 = vpop.permute.xlu0 %2702
    %2706 = vset.pattern.permute.xlu0 0
    %2707 = vperm.xlu0 %2706, %v2521
    %v2708 = vpop.permute.xlu0 %2707
    %2711 = vset.pattern.permute.xlu0 0
    %2712 = vperm.xlu0 %2711, %v2522
    %v2713 = vpop.permute.xlu0 %2712
    %2716 = vset.pattern.permute.xlu0 0
    %2717 = vperm.xlu0 %2716, %v2523
    %v2718 = vpop.permute.xlu0 %2717
    %2721 = vset.pattern.permute.xlu0 0
    %2722 = vperm.xlu0 %2721, %v2524
    %v2723 = vpop.permute.xlu0 %2722
    %2726 = vset.pattern.permute.xlu0 0
    %2727 = vperm.xlu0 %2726, %v2525
    %v2728 = vpop.permute.xlu0 %2727
    %2731 = vset.pattern.permute.xlu0 0
    %2732 = vperm.xlu0 %2731, %v2526
    %v2733 = vpop.permute.xlu0 %2732
    %2736 = vset.pattern.permute.xlu0 0
    %2737 = vperm.xlu0 %2736, %v2527
    %v2738 = vpop.permute.xlu0 %2737
    %2741 = vset.pattern.permute.xlu0 0
    %2742 = vperm.xlu0 %2741, %v2528
    %v2743 = vpop.permute.xlu0 %2742
    %2746 = vset.pattern.permute.xlu0 0
    %2747 = vperm.xlu0 %2746, %v2529
    %v2748 = vpop.permute.xlu0 %2747
    %2751 = vset.pattern.permute.xlu0 0
    %2752 = vperm.xlu0 %2751, %v2530
    %v2753 = vpop.permute.xlu0 %2752
    %v2755 = vlaneseq
    %v2756 = vshrl.u32 %v2755, 7
    %v2757 = vsub.s32 0, %v2756
    %v2758 = vrot.slane %v2498, %v2757
    %v2759 = vmul.f32 %v2598, %v2758
    %v2760 = vmul.f32 %v2603, %v2758
    %v2761 = vmul.f32 %v2608, %v2758
    %v2762 = vmul.f32 %v2613, %v2758
    %v2763 = vmul.f32 %v2618, %v2758
    %v2764 = vmul.f32 %v2623, %v2758
    %v2765 = vmul.f32 %v2628, %v2758
    %v2766 = vmul.f32 %v2633, %v2758
    %v2767 = vmul.f32 %v2638, %v2758
    %v2768 = vmul.f32 %v2643, %v2758
    %v2769 = vmul.f32 %v2648, %v2758
    %v2770 = vmul.f32 %v2653, %v2758
    %v2771 = vmul.f32 %v2658, %v2758
    %v2772 = vmul.f32 %v2663, %v2758
    %v2773 = vmul.f32 %v2668, %v2758
    %v2774 = vmul.f32 %v2673, %v2758
    %v2775 = vmul.f32 %v2678, %v2758
    %v2776 = vmul.f32 %v2683, %v2758
    %v2777 = vmul.f32 %v2688, %v2758
    %v2778 = vmul.f32 %v2693, %v2758
    %v2779 = vmul.f32 %v2698, %v2758
    %v2780 = vmul.f32 %v2703, %v2758
    %v2781 = vmul.f32 %v2708, %v2758
    %v2782 = vmul.f32 %v2713, %v2758
    %v2783 = vmul.f32 %v2718, %v2758
    %v2784 = vmul.f32 %v2723, %v2758
    %v2785 = vmul.f32 %v2728, %v2758
    %v2786 = vmul.f32 %v2733, %v2758
    %v2787 = vmul.f32 %v2738, %v2758
    %v2788 = vmul.f32 %v2743, %v2758
    %v2789 = vmul.f32 %v2748, %v2758
    %v2790 = vmul.f32 %v2753, %v2758
    %2791 = vmatprep.subr.mxu0 0.0
    %2792 = vmatpush1.msra.mxu0 %v2466
    %2793 = vmatprep.subr.mxu0 0.0
    %2794 = vmatpush1.msra.mxu0 %v2467
    %2795 = vmatprep.subr.mxu0 0.0
    %2796 = vmatpush1.msra.mxu0 %v2468
    %2797 = vmatprep.subr.mxu0 0.0
    %2798 = vmatpush1.msra.mxu0 %v2469
    %2799 = vmatprep.subr.mxu0 0.0
    %2800 = vmatpush1.msra.mxu0 %v2470
    %2801 = vmatprep.subr.mxu0 0.0
    %2802 = vmatpush1.msra.mxu0 %v2471
    %2803 = vmatprep.subr.mxu0 0.0
    %2804 = vmatpush1.msra.mxu0 %v2472
    %2805 = vmatprep.subr.mxu0 0.0
    %2806 = vmatpush1.msra.mxu0 %v2473
    %2807 = vmatprep.subr.mxu0 0.0
    %2808 = vmatpush1.msra.mxu0 %v2474
    %2809 = vmatprep.subr.mxu0 0.0
    %2810 = vmatpush1.msra.mxu0 %v2475
    %2811 = vmatprep.subr.mxu0 0.0
    %2812 = vmatpush1.msra.mxu0 %v2476
    %2813 = vmatprep.subr.mxu0 0.0
    %2814 = vmatpush1.msra.mxu0 %v2477
    %2815 = vmatprep.subr.mxu0 0.0
    %2816 = vmatpush1.msra.mxu0 %v2478
    %2817 = vmatprep.subr.mxu0 0.0
    %2818 = vmatpush1.msra.mxu0 %v2479
    %2819 = vmatprep.subr.mxu0 0.0
    %2820 = vmatpush1.msra.mxu0 %v2480
    %2821 = vmatprep.subr.mxu0 0.0
    %2822 = vmatpush1.msra.mxu0 %v2481
    %2823 = vmatprep.subr.mxu0 0.0
    %2824 = vmatpush1.msra.mxu0 %v2482
    %2825 = vmatprep.subr.mxu0 0.0
    %2826 = vmatpush1.msra.mxu0 %v2483
    %2827 = vmatprep.subr.mxu0 0.0
    %2828 = vmatpush1.msra.mxu0 %v2484
    %2829 = vmatprep.subr.mxu0 0.0
    %2830 = vmatpush1.msra.mxu0 %v2485
    %2831 = vmatprep.subr.mxu0 0.0
    %2832 = vmatpush1.msra.mxu0 %v2486
    %2833 = vmatprep.subr.mxu0 0.0
    %2834 = vmatpush1.msra.mxu0 %v2487
    %2835 = vmatprep.subr.mxu0 0.0
    %2836 = vmatpush1.msra.mxu0 %v2488
    %2837 = vmatprep.subr.mxu0 0.0
    %2838 = vmatpush1.msra.mxu0 %v2489
    %2839 = vmatprep.subr.mxu0 0.0
    %2840 = vmatpush1.msra.mxu0 %v2490
    %2841 = vmatprep.subr.mxu0 0.0
    %2842 = vmatpush1.msra.mxu0 %v2491
    %2843 = vmatprep.subr.mxu0 0.0
    %2844 = vmatpush1.msra.mxu0 %v2492
    %2845 = vmatprep.subr.mxu0 0.0
    %2846 = vmatpush1.msra.mxu0 %v2493
    %2847 = vmatprep.subr.mxu0 0.0
    %2848 = vmatpush1.msra.mxu0 %v2494
    %2849 = vmatprep.subr.mxu0 0.0
    %2850 = vmatpush1.msra.mxu0 %v2495
    %2851 = vmatprep.subr.mxu0 0.0
    %2852 = vmatpush1.msra.mxu0 %v2496
    %2853 = vmatprep.subr.mxu0 0.0
    %2854 = vmatpush1.msra.mxu0 %v2497
    %2855 = vmatprep.mubr.f32.mxu0 %v2532
    %2856 = vmatmul.mubr.f32.gmra.mrb[0].mxu0 %v2531
    %v2857 = vpop.f32.mrb[0].mxu0
    %v2858 = vadd.f32 %v2759, %v2857
    %v2859 = vpop.f32.mrb[0].mxu0
    %2860 = vmatprep.mubr.f32.mxu0 %v2534
    %2861 = vmatmul.mubr.f32.gmra.mrb[0].mxu0 %v2533
    %v2862 = vpop.f32.mrb[0].mxu0
    %v2863 = vadd.f32 %v2760, %v2862
    %v2864 = vpop.f32.mrb[0].mxu0
    %2865 = vmatprep.mubr.f32.mxu0 %v2536
    %2866 = vmatmul.mubr.f32.gmra.mrb[0].mxu0 %v2535
    %v2867 = vpop.f32.mrb[0].mxu0
    %v2868 = vadd.f32 %v2761, %v2867
    %v2869 = vpop.f32.mrb[0].mxu0
    %2870 = vmatprep.mubr.f32.mxu0 %v2538
    %2871 = vmatmul.mubr.f32.gmra.mrb[0].mxu0 %v2537
    %v2872 = vpop.f32.mrb[0].mxu0
    %v2873 = vadd.f32 %v2762, %v2872
    %v2874 = vpop.f32.mrb[0].mxu0
    %2875 = vmatprep.mubr.f32.mxu0 %v2540
    %2876 = vmatmul.mubr.f32.gmra.mrb[0].mxu0 %v2539
    %v2877 = vpop.f32.mrb[0].mxu0
    %v2878 = vadd.f32 %v2763, %v2877
    %v2879 = vpop.f32.mrb[0].mxu0
    %2880 = vmatprep.mubr.f32.mxu0 %v2542
    %2881 = vmatmul.mubr.f32.gmra.mrb[0].mxu0 %v2541
    %v2882 = vpop.f32.mrb[0].mxu0
    %v2883 = vadd.f32 %v2764, %v2882
    %v2884 = vpop.f32.mrb[0].mxu0
    %2885 = vmatprep.mubr.f32.mxu0 %v2544
    %2886 = vmatmul.mubr.f32.gmra.mrb[0].mxu0 %v2543
    %v2887 = vpop.f32.mrb[0].mxu0
    %v2888 = vadd.f32 %v2765, %v2887
    %v2889 = vpop.f32.mrb[0].mxu0
    %2890 = vmatprep.mubr.f32.mxu0 %v2546
    %2891 = vmatmul.mubr.f32.gmra.mrb[0].mxu0 %v2545
    %v2892 = vpop.f32.mrb[0].mxu0
    %v2893 = vadd.f32 %v2766, %v2892
    %v2894 = vpop.f32.mrb[0].mxu0
    %2895 = vmatprep.mubr.f32.mxu0 %v2548
    %2896 = vmatmul.mubr.f32.gmra.mrb[0].mxu0 %v2547
    %v2897 = vpop.f32.mrb[0].mxu0
    %v2898 = vadd.f32 %v2767, %v2897
    %v2899 = vpop.f32.mrb[0].mxu0
    %2900 = vmatprep.mubr.f32.mxu0 %v2550
    %2901 = vmatmul.mubr.f32.gmra.mrb[0].mxu0 %v2549
    %v2902 = vpop.f32.mrb[0].mxu0
    %v2903 = vadd.f32 %v2768, %v2902
    %v2904 = vpop.f32.mrb[0].mxu0
    %2905 = vmatprep.mubr.f32.mxu0 %v2552
    %2906 = vmatmul.mubr.f32.gmra.mrb[0].mxu0 %v2551
    %v2907 = vpop.f32.mrb[0].mxu0
    %v2908 = vadd.f32 %v2769, %v2907
    %v2909 = vpop.f32.mrb[0].mxu0
    %2910 = vmatprep.mubr.f32.mxu0 %v2554
    %2911 = vmatmul.mubr.f32.gmra.mrb[0].mxu0 %v2553
    %v2912 = vpop.f32.mrb[0].mxu0
    %v2913 = vadd.f32 %v2770, %v2912
    %v2914 = vpop.f32.mrb[0].mxu0
    %2915 = vmatprep.mubr.f32.mxu0 %v2556
    %2916 = vmatmul.mubr.f32.gmra.mrb[0].mxu0 %v2555
    %v2917 = vpop.f32.mrb[0].mxu0
    %v2918 = vadd.f32 %v2771, %v2917
    %v2919 = vpop.f32.mrb[0].mxu0
    %2920 = vmatprep.mubr.f32.mxu0 %v2558
    %2921 = vmatmul.mubr.f32.gmra.mrb[0].mxu0 %v2557
    %v2922 = vpop.f32.mrb[0].mxu0
    %v2923 = vadd.f32 %v2772, %v2922
    %v2924 = vpop.f32.mrb[0].mxu0
    %2925 = vmatprep.mubr.f32.mxu0 %v2560
    %2926 = vmatmul.mubr.f32.gmra.mrb[0].mxu0 %v2559
    %v2927 = vpop.f32.mrb[0].mxu0
    %v2928 = vadd.f32 %v2773, %v2927
    %v2929 = vpop.f32.mrb[0].mxu0
    %2930 = vmatprep.mubr.f32.mxu0 %v2562
    %2931 = vmatmul.mubr.f32.gmra.mrb[0].mxu0 %v2561
    %v2932 = vpop.f32.mrb[0].mxu0
    %v2933 = vadd.f32 %v2774, %v2932
    %v2934 = vpop.f32.mrb[0].mxu0
    %2935 = vmatprep.mubr.f32.mxu0 %v2564
    %2936 = vmatmul.mubr.f32.gmra.mrb[0].mxu0 %v2563
    %v2937 = vpop.f32.mrb[0].mxu0
    %v2938 = vadd.f32 %v2775, %v2937
    %v2939 = vpop.f32.mrb[0].mxu0
    %2940 = vmatprep.mubr.f32.mxu0 %v2566
    %2941 = vmatmul.mubr.f32.gmra.mrb[0].mxu0 %v2565
    %v2942 = vpop.f32.mrb[0].mxu0
    %v2943 = vadd.f32 %v2776, %v2942
    %v2944 = vpop.f32.mrb[0].mxu0
    %2945 = vmatprep.mubr.f32.mxu0 %v2568
    %2946 = vmatmul.mubr.f32.gmra.mrb[0].mxu0 %v2567
    %v2947 = vpop.f32.mrb[0].mxu0
    %v2948 = vadd.f32 %v2777, %v2947
    %v2949 = vpop.f32.mrb[0].mxu0
    %2950 = vmatprep.mubr.f32.mxu0 %v2570
    %2951 = vmatmul.mubr.f32.gmra.mrb[0].mxu0 %v2569
    %v2952 = vpop.f32.mrb[0].mxu0
    %v2953 = vadd.f32 %v2778, %v2952
    %v2954 = vpop.f32.mrb[0].mxu0
    %2955 = vmatprep.mubr.f32.mxu0 %v2572
    %2956 = vmatmul.mubr.f32.gmra.mrb[0].mxu0 %v2571
    %v2957 = vpop.f32.mrb[0].mxu0
    %v2958 = vadd.f32 %v2779, %v2957
    %v2959 = vpop.f32.mrb[0].mxu0
    %2960 = vmatprep.mubr.f32.mxu0 %v2574
    %2961 = vmatmul.mubr.f32.gmra.mrb[0].mxu0 %v2573
    %v2962 = vpop.f32.mrb[0].mxu0
    %v2963 = vadd.f32 %v2780, %v2962
    %v2964 = vpop.f32.mrb[0].mxu0
    %2965 = vmatprep.mubr.f32.mxu0 %v2576
    %2966 = vmatmul.mubr.f32.gmra.mrb[0].mxu0 %v2575
    %v2967 = vpop.f32.mrb[0].mxu0
    %v2968 = vadd.f32 %v2781, %v2967
    %v2969 = vpop.f32.mrb[0].mxu0
    %2970 = vmatprep.mubr.f32.mxu0 %v2578
    %2971 = vmatmul.mubr.f32.gmra.mrb[0].mxu0 %v2577
    %v2972 = vpop.f32.mrb[0].mxu0
    %v2973 = vadd.f32 %v2782, %v2972
    %v2974 = vpop.f32.mrb[0].mxu0
    %2975 = vmatprep.mubr.f32.mxu0 %v2580
    %2976 = vmatmul.mubr.f32.gmra.mrb[0].mxu0 %v2579
    %v2977 = vpop.f32.mrb[0].mxu0
    %v2978 = vadd.f32 %v2783, %v2977
    %v2979 = vpop.f32.mrb[0].mxu0
    %2980 = vmatprep.mubr.f32.mxu0 %v2582
    %2981 = vmatmul.mubr.f32.gmra.mrb[0].mxu0 %v2581
    %v2982 = vpop.f32.mrb[0].mxu0
    %v2983 = vadd.f32 %v2784, %v2982
    %v2984 = vpop.f32.mrb[0].mxu0
    %2985 = vmatprep.mubr.f32.mxu0 %v2584
    %2986 = vmatmul.mubr.f32.gmra.mrb[0].mxu0 %v2583
    %v2987 = vpop.f32.mrb[0].mxu0
    %v2988 = vadd.f32 %v2785, %v2987
    %v2989 = vpop.f32.mrb[0].mxu0
    %2990 = vmatprep.mubr.f32.mxu0 %v2586
    %2991 = vmatmul.mubr.f32.gmra.mrb[0].mxu0 %v2585
    %v2992 = vpop.f32.mrb[0].mxu0
    %v2993 = vadd.f32 %v2786, %v2992
    %v2994 = vpop.f32.mrb[0].mxu0
    %2995 = vmatprep.mubr.f32.mxu0 %v2588
    %2996 = vmatmul.mubr.f32.gmra.mrb[0].mxu0 %v2587
    %v2997 = vpop.f32.mrb[0].mxu0
    %v2998 = vadd.f32 %v2787, %v2997
    %v2999 = vpop.f32.mrb[0].mxu0
    %3000 = vmatprep.mubr.f32.mxu0 %v2590
    %3001 = vmatmul.mubr.f32.gmra.mrb[0].mxu0 %v2589
    %v3002 = vpop.f32.mrb[0].mxu0
    %v3003 = vadd.f32 %v2788, %v3002
    %v3004 = vpop.f32.mrb[0].mxu0
    %3005 = vmatprep.mubr.f32.mxu0 %v2592
    %3006 = vmatmul.mubr.f32.gmra.mrb[0].mxu0 %v2591
    %v3007 = vpop.f32.mrb[0].mxu0
    %v3008 = vadd.f32 %v2789, %v3007
    %v3009 = vpop.f32.mrb[0].mxu0
    %3010 = vmatprep.mubr.f32.mxu0 %v2594
    %3011 = vmatmul.mubr.f32.gmra.mrb[0].mxu0 %v2593
    %v3012 = vpop.f32.mrb[0].mxu0
    %v3013 = vadd.f32 %v2790, %v3012
    %v3014 = vpop.f32.mrb[0].mxu0
    %3015 = vdwg.mxu0
    %3016 = vset.pattern.permute.xlu0 1
    %3017 = vperm.xlu0 %3016, %v2499
    %v3018 = vpop.permute.xlu0 %3017
    %3020 = vset.pattern.permute.xlu0 1
    %3021 = vperm.xlu0 %3020, %v2500
    %v3022 = vpop.permute.xlu0 %3021
    %3024 = vset.pattern.permute.xlu0 1
    %3025 = vperm.xlu0 %3024, %v2501
    %v3026 = vpop.permute.xlu0 %3025
    %3028 = vset.pattern.permute.xlu0 1
    %3029 = vperm.xlu0 %3028, %v2502
    %v3030 = vpop.permute.xlu0 %3029
    %3032 = vset.pattern.permute.xlu0 1
    %3033 = vperm.xlu0 %3032, %v2503
    %v3034 = vpop.permute.xlu0 %3033
    %3036 = vset.pattern.permute.xlu0 1
    %3037 = vperm.xlu0 %3036, %v2504
    %v3038 = vpop.permute.xlu0 %3037
    %3040 = vset.pattern.permute.xlu0 1
    %3041 = vperm.xlu0 %3040, %v2505
    %v3042 = vpop.permute.xlu0 %3041
    %3044 = vset.pattern.permute.xlu0 1
    %3045 = vperm.xlu0 %3044, %v2506
    %v3046 = vpop.permute.xlu0 %3045
    %3048 = vset.pattern.permute.xlu0 1
    %3049 = vperm.xlu0 %3048, %v2507
    %v3050 = vpop.permute.xlu0 %3049
    %3052 = vset.pattern.permute.xlu0 1
    %3053 = vperm.xlu0 %3052, %v2508
    %v3054 = vpop.permute.xlu0 %3053
    %3056 = vset.pattern.permute.xlu0 1
    %3057 = vperm.xlu0 %3056, %v2509
    %v3058 = vpop.permute.xlu0 %3057
    %3060 = vset.pattern.permute.xlu0 1
    %3061 = vperm.xlu0 %3060, %v2510
    %v3062 = vpop.permute.xlu0 %3061
    %3064 = vset.pattern.permute.xlu0 1
    %3065 = vperm.xlu0 %3064, %v2511
    %v3066 = vpop.permute.xlu0 %3065
    %3068 = vset.pattern.permute.xlu0 1
    %3069 = vperm.xlu0 %3068, %v2512
    %v3070 = vpop.permute.xlu0 %3069
    %3072 = vset.pattern.permute.xlu0 1
    %3073 = vperm.xlu0 %3072, %v2513
    %v3074 = vpop.permute.xlu0 %3073
    %3076 = vset.pattern.permute.xlu0 1
    %3077 = vperm.xlu0 %3076, %v2514
    %v3078 = vpop.permute.xlu0 %3077
    %3080 = vset.pattern.permute.xlu0 1
    %3081 = vperm.xlu0 %3080, %v2515
    %v3082 = vpop.permute.xlu0 %3081
    %3084 = vset.pattern.permute.xlu0 1
    %3085 = vperm.xlu0 %3084, %v2516
    %v3086 = vpop.permute.xlu0 %3085
    %3088 = vset.pattern.permute.xlu0 1
    %3089 = vperm.xlu0 %3088, %v2517
    %v3090 = vpop.permute.xlu0 %3089
    %3092 = vset.pattern.permute.xlu0 1
    %3093 = vperm.xlu0 %3092, %v2518
    %v3094 = vpop.permute.xlu0 %3093
    %3096 = vset.pattern.permute.xlu0 1
    %3097 = vperm.xlu0 %3096, %v2519
    %v3098 = vpop.permute.xlu0 %3097
    %3100 = vset.pattern.permute.xlu0 1
    %3101 = vperm.xlu0 %3100, %v2520
    %v3102 = vpop.permute.xlu0 %3101
    %3104 = vset.pattern.permute.xlu0 1
    %3105 = vperm.xlu0 %3104, %v2521
    %v3106 = vpop.permute.xlu0 %3105
    %3108 = vset.pattern.permute.xlu0 1
    %3109 = vperm.xlu0 %3108, %v2522
    %v3110 = vpop.permute.xlu0 %3109
    %3112 = vset.pattern.permute.xlu0 1
    %3113 = vperm.xlu0 %3112, %v2523
    %v3114 = vpop.permute.xlu0 %3113
    %3116 = vset.pattern.permute.xlu0 1
    %3117 = vperm.xlu0 %3116, %v2524
    %v3118 = vpop.permute.xlu0 %3117
    %3120 = vset.pattern.permute.xlu0 1
    %3121 = vperm.xlu0 %3120, %v2525
    %v3122 = vpop.permute.xlu0 %3121
    %3124 = vset.pattern.permute.xlu0 1
    %3125 = vperm.xlu0 %3124, %v2526
    %v3126 = vpop.permute.xlu0 %3125
    %3128 = vset.pattern.permute.xlu0 1
    %3129 = vperm.xlu0 %3128, %v2527
    %v3130 = vpop.permute.xlu0 %3129
    %3132 = vset.pattern.permute.xlu0 1
    %3133 = vperm.xlu0 %3132, %v2528
    %v3134 = vpop.permute.xlu0 %3133
    %3136 = vset.pattern.permute.xlu0 1
    %3137 = vperm.xlu0 %3136, %v2529
    %v3138 = vpop.permute.xlu0 %3137
    %3140 = vset.pattern.permute.xlu0 1
    %3141 = vperm.xlu0 %3140, %v2530
    %v3142 = vpop.permute.xlu0 %3141
    %v3144 = vlaneseq
    %v3145 = vshrl.u32 %v3144, 7
    %v3146 = vsub.s32 1, %v3145
    %v3147 = vrot.slane %v2498, %v3146
    %v3148 = vmul.f32 %v3018, %v3147
    %v3149 = vmul.f32 %v3022, %v3147
    %v3150 = vmul.f32 %v3026, %v3147
    %v3151 = vmul.f32 %v3030, %v3147
    %v3152 = vmul.f32 %v3034, %v3147
    %v3153 = vmul.f32 %v3038, %v3147
    %v3154 = vmul.f32 %v3042, %v3147
    %v3155 = vmul.f32 %v3046, %v3147
    %v3156 = vmul.f32 %v3050, %v3147
    %v3157 = vmul.f32 %v3054, %v3147
    %v3158 = vmul.f32 %v3058, %v3147
    %v3159 = vmul.f32 %v3062, %v3147
    %v3160 = vmul.f32 %v3066, %v3147
    %v3161 = vmul.f32 %v3070, %v3147
    %v3162 = vmul.f32 %v3074, %v3147
    %v3163 = vmul.f32 %v3078, %v3147
    %v3164 = vmul.f32 %v3082, %v3147
    %v3165 = vmul.f32 %v3086, %v3147
    %v3166 = vmul.f32 %v3090, %v3147
    %v3167 = vmul.f32 %v3094, %v3147
    %v3168 = vmul.f32 %v3098, %v3147
    %v3169 = vmul.f32 %v3102, %v3147
    %v3170 = vmul.f32 %v3106, %v3147
    %v3171 = vmul.f32 %v3110, %v3147
    %v3172 = vmul.f32 %v3114, %v3147
    %v3173 = vmul.f32 %v3118, %v3147
    %v3174 = vmul.f32 %v3122, %v3147
    %v3175 = vmul.f32 %v3126, %v3147
    %v3176 = vmul.f32 %v3130, %v3147
    %v3177 = vmul.f32 %v3134, %v3147
    %v3178 = vmul.f32 %v3138, %v3147
    %v3179 = vmul.f32 %v3142, %v3147
    %v3180 = vadd.f32 %v2858, %v3148
    %v3181 = vadd.f32 %v2863, %v3149
    %v3182 = vadd.f32 %v2868, %v3150
    %v3183 = vadd.f32 %v2873, %v3151
    %v3184 = vadd.f32 %v2878, %v3152
    %v3185 = vadd.f32 %v2883, %v3153
    %v3186 = vadd.f32 %v2888, %v3154
    %v3187 = vadd.f32 %v2893, %v3155
    %v3188 = vadd.f32 %v2898, %v3156
    %v3189 = vadd.f32 %v2903, %v3157
    %v3190 = vadd.f32 %v2908, %v3158
    %v3191 = vadd.f32 %v2913, %v3159
    %v3192 = vadd.f32 %v2918, %v3160
    %v3193 = vadd.f32 %v2923, %v3161
    %v3194 = vadd.f32 %v2928, %v3162
    %v3195 = vadd.f32 %v2933, %v3163
    %v3196 = vadd.f32 %v2938, %v3164
    %v3197 = vadd.f32 %v2943, %v3165
    %v3198 = vadd.f32 %v2948, %v3166
    %v3199 = vadd.f32 %v2953, %v3167
    %v3200 = vadd.f32 %v2958, %v3168
    %v3201 = vadd.f32 %v2963, %v3169
    %v3202 = vadd.f32 %v2968, %v3170
    %v3203 = vadd.f32 %v2973, %v3171
    %v3204 = vadd.f32 %v2978, %v3172
    %v3205 = vadd.f32 %v2983, %v3173
    %v3206 = vadd.f32 %v2988, %v3174
    %v3207 = vadd.f32 %v2993, %v3175
    %v3208 = vadd.f32 %v2998, %v3176
    %v3209 = vadd.f32 %v3003, %v3177
    %v3210 = vadd.f32 %v3008, %v3178
    %v3211 = vadd.f32 %v3013, %v3179
    %3212 = vset.pattern.permute.xlu0 2
    %3213 = vperm.xlu0 %3212, %v2499
    %v3214 = vpop.permute.xlu0 %3213
    %3216 = vset.pattern.permute.xlu0 2
    %3217 = vperm.xlu0 %3216, %v2500
    %v3218 = vpop.permute.xlu0 %3217
    %3220 = vset.pattern.permute.xlu0 2
    %3221 = vperm.xlu0 %3220, %v2501
    %v3222 = vpop.permute.xlu0 %3221
    %3224 = vset.pattern.permute.xlu0 2
    %3225 = vperm.xlu0 %3224, %v2502
    %v3226 = vpop.permute.xlu0 %3225
    %3228 = vset.pattern.permute.xlu0 2
    %3229 = vperm.xlu0 %3228, %v2503
    %v3230 = vpop.permute.xlu0 %3229
    %3232 = vset.pattern.permute.xlu0 2
    %3233 = vperm.xlu0 %3232, %v2504
    %v3234 = vpop.permute.xlu0 %3233
    %3236 = vset.pattern.permute.xlu0 2
    %3237 = vperm.xlu0 %3236, %v2505
    %v3238 = vpop.permute.xlu0 %3237
    %3240 = vset.pattern.permute.xlu0 2
    %3241 = vperm.xlu0 %3240, %v2506
    %v3242 = vpop.permute.xlu0 %3241
    %3244 = vset.pattern.permute.xlu0 2
    %3245 = vperm.xlu0 %3244, %v2507
    %v3246 = vpop.permute.xlu0 %3245
    %3248 = vset.pattern.permute.xlu0 2
    %3249 = vperm.xlu0 %3248, %v2508
    %v3250 = vpop.permute.xlu0 %3249
    %3252 = vset.pattern.permute.xlu0 2
    %3253 = vperm.xlu0 %3252, %v2509
    %v3254 = vpop.permute.xlu0 %3253
    %3256 = vset.pattern.permute.xlu0 2
    %3257 = vperm.xlu0 %3256, %v2510
    %v3258 = vpop.permute.xlu0 %3257
    %3260 = vset.pattern.permute.xlu0 2
    %3261 = vperm.xlu0 %3260, %v2511
    %v3262 = vpop.permute.xlu0 %3261
    %3264 = vset.pattern.permute.xlu0 2
    %3265 = vperm.xlu0 %3264, %v2512
    %v3266 = vpop.permute.xlu0 %3265
    %3268 = vset.pattern.permute.xlu0 2
    %3269 = vperm.xlu0 %3268, %v2513
    %v3270 = vpop.permute.xlu0 %3269
    %3272 = vset.pattern.permute.xlu0 2
    %3273 = vperm.xlu0 %3272, %v2514
    %v3274 = vpop.permute.xlu0 %3273
    %3276 = vset.pattern.permute.xlu0 2
    %3277 = vperm.xlu0 %3276, %v2515
    %v3278 = vpop.permute.xlu0 %3277
    %3280 = vset.pattern.permute.xlu0 2
    %3281 = vperm.xlu0 %3280, %v2516
    %v3282 = vpop.permute.xlu0 %3281
    %3284 = vset.pattern.permute.xlu0 2
    %3285 = vperm.xlu0 %3284, %v2517
    %v3286 = vpop.permute.xlu0 %3285
    %3288 = vset.pattern.permute.xlu0 2
    %3289 = vperm.xlu0 %3288, %v2518
    %v3290 = vpop.permute.xlu0 %3289
    %3292 = vset.pattern.permute.xlu0 2
    %3293 = vperm.xlu0 %3292, %v2519
    %v3294 = vpop.permute.xlu0 %3293
    %3296 = vset.pattern.permute.xlu0 2
    %3297 = vperm.xlu0 %3296, %v2520
    %v3298 = vpop.permute.xlu0 %3297
    %3300 = vset.pattern.permute.xlu0 2
    %3301 = vperm.xlu0 %3300, %v2521
    %v3302 = vpop.permute.xlu0 %3301
    %3304 = vset.pattern.permute.xlu0 2
    %3305 = vperm.xlu0 %3304, %v2522
    %v3306 = vpop.permute.xlu0 %3305
    %3308 = vset.pattern.permute.xlu0 2
    %3309 = vperm.xlu0 %3308, %v2523
    %v3310 = vpop.permute.xlu0 %3309
    %3312 = vset.pattern.permute.xlu0 2
    %3313 = vperm.xlu0 %3312, %v2524
    %v3314 = vpop.permute.xlu0 %3313
    %3316 = vset.pattern.permute.xlu0 2
    %3317 = vperm.xlu0 %3316, %v2525
    %v3318 = vpop.permute.xlu0 %3317
    %3320 = vset.pattern.permute.xlu0 2
    %3321 = vperm.xlu0 %3320, %v2526
    %v3322 = vpop.permute.xlu0 %3321
    %3324 = vset.pattern.permute.xlu0 2
    %3325 = vperm.xlu0 %3324, %v2527
    %v3326 = vpop.permute.xlu0 %3325
    %3328 = vset.pattern.permute.xlu0 2
    %3329 = vperm.xlu0 %3328, %v2528
    %v3330 = vpop.permute.xlu0 %3329
    %3332 = vset.pattern.permute.xlu0 2
    %3333 = vperm.xlu0 %3332, %v2529
    %v3334 = vpop.permute.xlu0 %3333
    %3336 = vset.pattern.permute.xlu0 2
    %3337 = vperm.xlu0 %3336, %v2530
    %v3338 = vpop.permute.xlu0 %3337
    %v3340 = vlaneseq
    %v3341 = vshrl.u32 %v3340, 7
    %v3342 = vsub.s32 2, %v3341
    %v3343 = vrot.slane %v2498, %v3342
    %v3344 = vmul.f32 %v3214, %v3343
    %v3345 = vmul.f32 %v3218, %v3343
    %v3346 = vmul.f32 %v3222, %v3343
    %v3347 = vmul.f32 %v3226, %v3343
    %v3348 = vmul.f32 %v3230, %v3343
    %v3349 = vmul.f32 %v3234, %v3343
    %v3350 = vmul.f32 %v3238, %v3343
    %v3351 = vmul.f32 %v3242, %v3343
    %v3352 = vmul.f32 %v3246, %v3343
    %v3353 = vmul.f32 %v3250, %v3343
    %v3354 = vmul.f32 %v3254, %v3343
    %v3355 = vmul.f32 %v3258, %v3343
    %v3356 = vmul.f32 %v3262, %v3343
    %v3357 = vmul.f32 %v3266, %v3343
    %v3358 = vmul.f32 %v3270, %v3343
    %v3359 = vmul.f32 %v3274, %v3343
    %v3360 = vmul.f32 %v3278, %v3343
    %v3361 = vmul.f32 %v3282, %v3343
    %v3362 = vmul.f32 %v3286, %v3343
    %v3363 = vmul.f32 %v3290, %v3343
    %v3364 = vmul.f32 %v3294, %v3343
    %v3365 = vmul.f32 %v3298, %v3343
    %v3366 = vmul.f32 %v3302, %v3343
    %v3367 = vmul.f32 %v3306, %v3343
    %v3368 = vmul.f32 %v3310, %v3343
    %v3369 = vmul.f32 %v3314, %v3343
    %v3370 = vmul.f32 %v3318, %v3343
    %v3371 = vmul.f32 %v3322, %v3343
    %v3372 = vmul.f32 %v3326, %v3343
    %v3373 = vmul.f32 %v3330, %v3343
    %v3374 = vmul.f32 %v3334, %v3343
    %v3375 = vmul.f32 %v3338, %v3343
    %v3376 = vadd.f32 %v3180, %v3344
    %v3377 = vadd.f32 %v3181, %v3345
    %v3378 = vadd.f32 %v3182, %v3346
    %v3379 = vadd.f32 %v3183, %v3347
    %v3380 = vadd.f32 %v3184, %v3348
    %v3381 = vadd.f32 %v3185, %v3349
    %v3382 = vadd.f32 %v3186, %v3350
    %v3383 = vadd.f32 %v3187, %v3351
    %v3384 = vadd.f32 %v3188, %v3352
    %v3385 = vadd.f32 %v3189, %v3353
    %v3386 = vadd.f32 %v3190, %v3354
    %v3387 = vadd.f32 %v3191, %v3355
    %v3388 = vadd.f32 %v3192, %v3356
    %v3389 = vadd.f32 %v3193, %v3357
    %v3390 = vadd.f32 %v3194, %v3358
    %v3391 = vadd.f32 %v3195, %v3359
    %v3392 = vadd.f32 %v3196, %v3360
    %v3393 = vadd.f32 %v3197, %v3361
    %v3394 = vadd.f32 %v3198, %v3362
    %v3395 = vadd.f32 %v3199, %v3363
    %v3396 = vadd.f32 %v3200, %v3364
    %v3397 = vadd.f32 %v3201, %v3365
    %v3398 = vadd.f32 %v3202, %v3366
    %v3399 = vadd.f32 %v3203, %v3367
    %v3400 = vadd.f32 %v3204, %v3368
    %v3401 = vadd.f32 %v3205, %v3369
    %v3402 = vadd.f32 %v3206, %v3370
    %v3403 = vadd.f32 %v3207, %v3371
    %v3404 = vadd.f32 %v3208, %v3372
    %v3405 = vadd.f32 %v3209, %v3373
    %v3406 = vadd.f32 %v3210, %v3374
    %v3407 = vadd.f32 %v3211, %v3375
    %v3408 = vld [vmem:[%s13] sm:$0xff]
    %v3409 = vld [vmem:[%s13 + $0x8] sm:$0xff]
    %v3410 = vld [vmem:[%s13 + $0x10] sm:$0xff]
    %v3411 = vld [vmem:[%s13 + $0x18] sm:$0xff]
    %v3412 = vld [vmem:[%s13 + $0x20] sm:$0xff]
    %v3413 = vld [vmem:[%s13 + $0x28] sm:$0xff]
    %v3414 = vld [vmem:[%s13 + $0x30] sm:$0xff]
    %v3415 = vld [vmem:[%s13 + $0x38] sm:$0xff]
    %v3416 = vld [vmem:[%s13 + $0x40] sm:$0xff]
    %v3417 = vld [vmem:[%s13 + $0x48] sm:$0xff]
    %v3418 = vld [vmem:[%s13 + $0x50] sm:$0xff]
    %v3419 = vld [vmem:[%s13 + $0x58] sm:$0xff]
    %v3420 = vld [vmem:[%s13 + $0x60] sm:$0xff]
    %v3421 = vld [vmem:[%s13 + $0x68] sm:$0xff]
    %v3422 = vld [vmem:[%s13 + $0x70] sm:$0xff]
    %v3423 = vld [vmem:[%s13 + $0x78] sm:$0xff]
    %v3424 = vld [vmem:[%s13 + $0x80] sm:$0xff]
    %v3425 = vld [vmem:[%s13 + $0x88] sm:$0xff]
    %v3426 = vld [vmem:[%s13 + $0x90] sm:$0xff]
    %v3427 = vld [vmem:[%s13 + $0x98] sm:$0xff]
    %v3428 = vld [vmem:[%s13 + $0xa0] sm:$0xff]
    %v3429 = vld [vmem:[%s13 + $0xa8] sm:$0xff]
    %v3430 = vld [vmem:[%s13 + $0xb0] sm:$0xff]
    %v3431 = vld [vmem:[%s13 + $0xb8] sm:$0xff]
    %v3432 = vld [vmem:[%s13 + $0xc0] sm:$0xff]
    %v3433 = vld [vmem:[%s13 + $0xc8] sm:$0xff]
    %v3434 = vld [vmem:[%s13 + $0xd0] sm:$0xff]
    %v3435 = vld [vmem:[%s13 + $0xd8] sm:$0xff]
    %v3436 = vld [vmem:[%s13 + $0xe0] sm:$0xff]
    %v3437 = vld [vmem:[%s13 + $0xe8] sm:$0xff]
    %v3438 = vld [vmem:[%s13 + $0xf0] sm:$0xff]
    %v3439 = vld [vmem:[%s13 + $0xf8] sm:$0xff]
    %3441 = vset.pattern.permute.xlu0 0
    %3442 = vperm.xlu0 %3441, %v3408
    %v3443 = vpop.permute.xlu0 %3442
    %3446 = vset.pattern.permute.xlu0 0
    %3447 = vperm.xlu0 %3446, %v3409
    %v3448 = vpop.permute.xlu0 %3447
    %3451 = vset.pattern.permute.xlu0 0
    %3452 = vperm.xlu0 %3451, %v3410
    %v3453 = vpop.permute.xlu0 %3452
    %3456 = vset.pattern.permute.xlu0 0
    %3457 = vperm.xlu0 %3456, %v3411
    %v3458 = vpop.permute.xlu0 %3457
    %3461 = vset.pattern.permute.xlu0 0
    %3462 = vperm.xlu0 %3461, %v3412
    %v3463 = vpop.permute.xlu0 %3462
    %3466 = vset.pattern.permute.xlu0 0
    %3467 = vperm.xlu0 %3466, %v3413
    %v3468 = vpop.permute.xlu0 %3467
    %3471 = vset.pattern.permute.xlu0 0
    %3472 = vperm.xlu0 %3471, %v3414
    %v3473 = vpop.permute.xlu0 %3472
    %3476 = vset.pattern.permute.xlu0 0
    %3477 = vperm.xlu0 %3476, %v3415
    %v3478 = vpop.permute.xlu0 %3477
    %3481 = vset.pattern.permute.xlu0 0
    %3482 = vperm.xlu0 %3481, %v3416
    %v3483 = vpop.permute.xlu0 %3482
    %3486 = vset.pattern.permute.xlu0 0
    %3487 = vperm.xlu0 %3486, %v3417
    %v3488 = vpop.permute.xlu0 %3487
    %3491 = vset.pattern.permute.xlu0 0
    %3492 = vperm.xlu0 %3491, %v3418
    %v3493 = vpop.permute.xlu0 %3492
    %3496 = vset.pattern.permute.xlu0 0
    %3497 = vperm.xlu0 %3496, %v3419
    %v3498 = vpop.permute.xlu0 %3497
    %3501 = vset.pattern.permute.xlu0 0
    %3502 = vperm.xlu0 %3501, %v3420
    %v3503 = vpop.permute.xlu0 %3502
    %3506 = vset.pattern.permute.xlu0 0
    %3507 = vperm.xlu0 %3506, %v3421
    %v3508 = vpop.permute.xlu0 %3507
    %3511 = vset.pattern.permute.xlu0 0
    %3512 = vperm.xlu0 %3511, %v3422
    %v3513 = vpop.permute.xlu0 %3512
    %3516 = vset.pattern.permute.xlu0 0
    %3517 = vperm.xlu0 %3516, %v3423
    %v3518 = vpop.permute.xlu0 %3517
    %3521 = vset.pattern.permute.xlu0 0
    %3522 = vperm.xlu0 %3521, %v3424
    %v3523 = vpop.permute.xlu0 %3522
    %3526 = vset.pattern.permute.xlu0 0
    %3527 = vperm.xlu0 %3526, %v3425
    %v3528 = vpop.permute.xlu0 %3527
    %3531 = vset.pattern.permute.xlu0 0
    %3532 = vperm.xlu0 %3531, %v3426
    %v3533 = vpop.permute.xlu0 %3532
    %3536 = vset.pattern.permute.xlu0 0
    %3537 = vperm.xlu0 %3536, %v3427
    %v3538 = vpop.permute.xlu0 %3537
    %3541 = vset.pattern.permute.xlu0 0
    %3542 = vperm.xlu0 %3541, %v3428
    %v3543 = vpop.permute.xlu0 %3542
    %3546 = vset.pattern.permute.xlu0 0
    %3547 = vperm.xlu0 %3546, %v3429
    %v3548 = vpop.permute.xlu0 %3547
    %3551 = vset.pattern.permute.xlu0 0
    %3552 = vperm.xlu0 %3551, %v3430
    %v3553 = vpop.permute.xlu0 %3552
    %3556 = vset.pattern.permute.xlu0 0
    %3557 = vperm.xlu0 %3556, %v3431
    %v3558 = vpop.permute.xlu0 %3557
    %3561 = vset.pattern.permute.xlu0 0
    %3562 = vperm.xlu0 %3561, %v3432
    %v3563 = vpop.permute.xlu0 %3562
    %3566 = vset.pattern.permute.xlu0 0
    %3567 = vperm.xlu0 %3566, %v3433
    %v3568 = vpop.permute.xlu0 %3567
    %3571 = vset.pattern.permute.xlu0 0
    %3572 = vperm.xlu0 %3571, %v3434
    %v3573 = vpop.permute.xlu0 %3572
    %3576 = vset.pattern.permute.xlu0 0
    %3577 = vperm.xlu0 %3576, %v3435
    %v3578 = vpop.permute.xlu0 %3577
    %3581 = vset.pattern.permute.xlu0 0
    %3582 = vperm.xlu0 %3581, %v3436
    %v3583 = vpop.permute.xlu0 %3582
    %3586 = vset.pattern.permute.xlu0 0
    %3587 = vperm.xlu0 %3586, %v3437
    %v3588 = vpop.permute.xlu0 %3587
    %3591 = vset.pattern.permute.xlu0 0
    %3592 = vperm.xlu0 %3591, %v3438
    %v3593 = vpop.permute.xlu0 %3592
    %3596 = vset.pattern.permute.xlu0 0
    %3597 = vperm.xlu0 %3596, %v3439
    %v3598 = vpop.permute.xlu0 %3597
    %v3600 = vmul.f32 %v3376, %v3443
    %v3601 = vmul.f32 %v3377, %v3448
    %v3602 = vmul.f32 %v3378, %v3453
    %v3603 = vmul.f32 %v3379, %v3458
    %v3604 = vmul.f32 %v3380, %v3463
    %v3605 = vmul.f32 %v3381, %v3468
    %v3606 = vmul.f32 %v3382, %v3473
    %v3607 = vmul.f32 %v3383, %v3478
    %v3608 = vmul.f32 %v3384, %v3483
    %v3609 = vmul.f32 %v3385, %v3488
    %v3610 = vmul.f32 %v3386, %v3493
    %v3611 = vmul.f32 %v3387, %v3498
    %v3612 = vmul.f32 %v3388, %v3503
    %v3613 = vmul.f32 %v3389, %v3508
    %v3614 = vmul.f32 %v3390, %v3513
    %v3615 = vmul.f32 %v3391, %v3518
    %v3616 = vmul.f32 %v3392, %v3523
    %v3617 = vmul.f32 %v3393, %v3528
    %v3618 = vmul.f32 %v3394, %v3533
    %v3619 = vmul.f32 %v3395, %v3538
    %v3620 = vmul.f32 %v3396, %v3543
    %v3621 = vmul.f32 %v3397, %v3548
    %v3622 = vmul.f32 %v3398, %v3553
    %v3623 = vmul.f32 %v3399, %v3558
    %v3624 = vmul.f32 %v3400, %v3563
    %v3625 = vmul.f32 %v3401, %v3568
    %v3626 = vmul.f32 %v3402, %v3573
    %v3627 = vmul.f32 %v3403, %v3578
    %v3628 = vmul.f32 %v3404, %v3583
    %v3629 = vmul.f32 %v3405, %v3588
    %v3630 = vmul.f32 %v3406, %v3593
    %v3631 = vmul.f32 %v3407, %v3598
    %v3632 = vld [vmem:[%s14] sm:$0xff]
    %v3633 = vld [vmem:[%s14 + $0x8] sm:$0xff]
    %v3634 = vld [vmem:[%s14 + $0x10] sm:$0xff]
    %v3635 = vld [vmem:[%s14 + $0x18] sm:$0xff]
    %v3636 = vld [vmem:[%s14 + $0x20] sm:$0xff]
    %v3637 = vld [vmem:[%s14 + $0x28] sm:$0xff]
    %v3638 = vld [vmem:[%s14 + $0x30] sm:$0xff]
    %v3639 = vld [vmem:[%s14 + $0x38] sm:$0xff]
    %v3640 = vld [vmem:[%s14 + $0x40] sm:$0xff]
    %v3641 = vld [vmem:[%s14 + $0x48] sm:$0xff]
    %v3642 = vld [vmem:[%s14 + $0x50] sm:$0xff]
    %v3643 = vld [vmem:[%s14 + $0x58] sm:$0xff]
    %v3644 = vld [vmem:[%s14 + $0x60] sm:$0xff]
    %v3645 = vld [vmem:[%s14 + $0x68] sm:$0xff]
    %v3646 = vld [vmem:[%s14 + $0x70] sm:$0xff]
    %v3647 = vld [vmem:[%s14 + $0x78] sm:$0xff]
    %v3648 = vld [vmem:[%s14 + $0x80] sm:$0xff]
    %v3649 = vld [vmem:[%s14 + $0x88] sm:$0xff]
    %v3650 = vld [vmem:[%s14 + $0x90] sm:$0xff]
    %v3651 = vld [vmem:[%s14 + $0x98] sm:$0xff]
    %v3652 = vld [vmem:[%s14 + $0xa0] sm:$0xff]
    %v3653 = vld [vmem:[%s14 + $0xa8] sm:$0xff]
    %v3654 = vld [vmem:[%s14 + $0xb0] sm:$0xff]
    %v3655 = vld [vmem:[%s14 + $0xb8] sm:$0xff]
    %v3656 = vld [vmem:[%s14 + $0xc0] sm:$0xff]
    %v3657 = vld [vmem:[%s14 + $0xc8] sm:$0xff]
    %v3658 = vld [vmem:[%s14 + $0xd0] sm:$0xff]
    %v3659 = vld [vmem:[%s14 + $0xd8] sm:$0xff]
    %v3660 = vld [vmem:[%s14 + $0xe0] sm:$0xff]
    %v3661 = vld [vmem:[%s14 + $0xe8] sm:$0xff]
    %v3662 = vld [vmem:[%s14 + $0xf0] sm:$0xff]
    %v3663 = vld [vmem:[%s14 + $0xf8] sm:$0xff]
    %3665 = vset.pattern.permute.xlu0 0
    %3666 = vperm.xlu0 %3665, %v3632
    %v3667 = vpop.permute.xlu0 %3666
    %3670 = vset.pattern.permute.xlu0 0
    %3671 = vperm.xlu0 %3670, %v3633
    %v3672 = vpop.permute.xlu0 %3671
    %3675 = vset.pattern.permute.xlu0 0
    %3676 = vperm.xlu0 %3675, %v3634
    %v3677 = vpop.permute.xlu0 %3676
    %3680 = vset.pattern.permute.xlu0 0
    %3681 = vperm.xlu0 %3680, %v3635
    %v3682 = vpop.permute.xlu0 %3681
    %3685 = vset.pattern.permute.xlu0 0
    %3686 = vperm.xlu0 %3685, %v3636
    %v3687 = vpop.permute.xlu0 %3686
    %3690 = vset.pattern.permute.xlu0 0
    %3691 = vperm.xlu0 %3690, %v3637
    %v3692 = vpop.permute.xlu0 %3691
    %3695 = vset.pattern.permute.xlu0 0
    %3696 = vperm.xlu0 %3695, %v3638
    %v3697 = vpop.permute.xlu0 %3696
    %3700 = vset.pattern.permute.xlu0 0
    %3701 = vperm.xlu0 %3700, %v3639
    %v3702 = vpop.permute.xlu0 %3701
    %3705 = vset.pattern.permute.xlu0 0
    %3706 = vperm.xlu0 %3705, %v3640
    %v3707 = vpop.permute.xlu0 %3706
    %3710 = vset.pattern.permute.xlu0 0
    %3711 = vperm.xlu0 %3710, %v3641
    %v3712 = vpop.permute.xlu0 %3711
    %3715 = vset.pattern.permute.xlu0 0
    %3716 = vperm.xlu0 %3715, %v3642
    %v3717 = vpop.permute.xlu0 %3716
    %3720 = vset.pattern.permute.xlu0 0
    %3721 = vperm.xlu0 %3720, %v3643
    %v3722 = vpop.permute.xlu0 %3721
    %3725 = vset.pattern.permute.xlu0 0
    %3726 = vperm.xlu0 %3725, %v3644
    %v3727 = vpop.permute.xlu0 %3726
    %3730 = vset.pattern.permute.xlu0 0
    %3731 = vperm.xlu0 %3730, %v3645
    %v3732 = vpop.permute.xlu0 %3731
    %3735 = vset.pattern.permute.xlu0 0
    %3736 = vperm.xlu0 %3735, %v3646
    %v3737 = vpop.permute.xlu0 %3736
    %3740 = vset.pattern.permute.xlu0 0
    %3741 = vperm.xlu0 %3740, %v3647
    %v3742 = vpop.permute.xlu0 %3741
    %3745 = vset.pattern.permute.xlu0 0
    %3746 = vperm.xlu0 %3745, %v3648
    %v3747 = vpop.permute.xlu0 %3746
    %3750 = vset.pattern.permute.xlu0 0
    %3751 = vperm.xlu0 %3750, %v3649
    %v3752 = vpop.permute.xlu0 %3751
    %3755 = vset.pattern.permute.xlu0 0
    %3756 = vperm.xlu0 %3755, %v3650
    %v3757 = vpop.permute.xlu0 %3756
    %3760 = vset.pattern.permute.xlu0 0
    %3761 = vperm.xlu0 %3760, %v3651
    %v3762 = vpop.permute.xlu0 %3761
    %3765 = vset.pattern.permute.xlu0 0
    %3766 = vperm.xlu0 %3765, %v3652
    %v3767 = vpop.permute.xlu0 %3766
    %3770 = vset.pattern.permute.xlu0 0
    %3771 = vperm.xlu0 %3770, %v3653
    %v3772 = vpop.permute.xlu0 %3771
    %3775 = vset.pattern.permute.xlu0 0
    %3776 = vperm.xlu0 %3775, %v3654
    %v3777 = vpop.permute.xlu0 %3776
    %3780 = vset.pattern.permute.xlu0 0
    %3781 = vperm.xlu0 %3780, %v3655
    %v3782 = vpop.permute.xlu0 %3781
    %3785 = vset.pattern.permute.xlu0 0
    %3786 = vperm.xlu0 %3785, %v3656
    %v3787 = vpop.permute.xlu0 %3786
    %3790 = vset.pattern.permute.xlu0 0
    %3791 = vperm.xlu0 %3790, %v3657
    %v3792 = vpop.permute.xlu0 %3791
    %3795 = vset.pattern.permute.xlu0 0
    %3796 = vperm.xlu0 %3795, %v3658
    %v3797 = vpop.permute.xlu0 %3796
    %3800 = vset.pattern.permute.xlu0 0
    %3801 = vperm.xlu0 %3800, %v3659
    %v3802 = vpop.permute.xlu0 %3801
    %3805 = vset.pattern.permute.xlu0 0
    %3806 = vperm.xlu0 %3805, %v3660
    %v3807 = vpop.permute.xlu0 %3806
    %3810 = vset.pattern.permute.xlu0 0
    %3811 = vperm.xlu0 %3810, %v3661
    %v3812 = vpop.permute.xlu0 %3811
    %3815 = vset.pattern.permute.xlu0 0
    %3816 = vperm.xlu0 %3815, %v3662
    %v3817 = vpop.permute.xlu0 %3816
    %3820 = vset.pattern.permute.xlu0 0
    %3821 = vperm.xlu0 %3820, %v3663
    %v3822 = vpop.permute.xlu0 %3821
    %v3824 = vadd.f32 %v3600, %v3667
    %v3825 = vadd.f32 %v3601, %v3672
    %v3826 = vadd.f32 %v3602, %v3677
    %v3827 = vadd.f32 %v3603, %v3682
    %v3828 = vadd.f32 %v3604, %v3687
    %v3829 = vadd.f32 %v3605, %v3692
    %v3830 = vadd.f32 %v3606, %v3697
    %v3831 = vadd.f32 %v3607, %v3702
    %v3832 = vadd.f32 %v3608, %v3707
    %v3833 = vadd.f32 %v3609, %v3712
    %v3834 = vadd.f32 %v3610, %v3717
    %v3835 = vadd.f32 %v3611, %v3722
    %v3836 = vadd.f32 %v3612, %v3727
    %v3837 = vadd.f32 %v3613, %v3732
    %v3838 = vadd.f32 %v3614, %v3737
    %v3839 = vadd.f32 %v3615, %v3742
    %v3840 = vadd.f32 %v3616, %v3747
    %v3841 = vadd.f32 %v3617, %v3752
    %v3842 = vadd.f32 %v3618, %v3757
    %v3843 = vadd.f32 %v3619, %v3762
    %v3844 = vadd.f32 %v3620, %v3767
    %v3845 = vadd.f32 %v3621, %v3772
    %v3846 = vadd.f32 %v3622, %v3777
    %v3847 = vadd.f32 %v3623, %v3782
    %v3848 = vadd.f32 %v3624, %v3787
    %v3849 = vadd.f32 %v3625, %v3792
    %v3850 = vadd.f32 %v3626, %v3797
    %v3851 = vadd.f32 %v3627, %v3802
    %v3852 = vadd.f32 %v3628, %v3807
    %v3853 = vadd.f32 %v3629, %v3812
    %v3854 = vadd.f32 %v3630, %v3817
    %v3855 = vadd.f32 %v3631, %v3822
    %v3856 = vmax.f32 %v3824, 0.0
    %v3857 = vmax.f32 %v3825, 0.0
    %v3858 = vmax.f32 %v3826, 0.0
    %v3859 = vmax.f32 %v3827, 0.0
    %v3860 = vmax.f32 %v3828, 0.0
    %v3861 = vmax.f32 %v3829, 0.0
    %v3862 = vmax.f32 %v3830, 0.0
    %v3863 = vmax.f32 %v3831, 0.0
    %v3864 = vmax.f32 %v3832, 0.0
    %v3865 = vmax.f32 %v3833, 0.0
    %v3866 = vmax.f32 %v3834, 0.0
    %v3867 = vmax.f32 %v3835, 0.0
    %v3868 = vmax.f32 %v3836, 0.0
    %v3869 = vmax.f32 %v3837, 0.0
    %v3870 = vmax.f32 %v3838, 0.0
    %v3871 = vmax.f32 %v3839, 0.0
    %v3872 = vmax.f32 %v3840, 0.0
    %v3873 = vmax.f32 %v3841, 0.0
    %v3874 = vmax.f32 %v3842, 0.0
    %v3875 = vmax.f32 %v3843, 0.0
    %v3876 = vmax.f32 %v3844, 0.0
    %v3877 = vmax.f32 %v3845, 0.0
    %v3878 = vmax.f32 %v3846, 0.0
    %v3879 = vmax.f32 %v3847, 0.0
    %v3880 = vmax.f32 %v3848, 0.0
    %v3881 = vmax.f32 %v3849, 0.0
    %v3882 = vmax.f32 %v3850, 0.0
    %v3883 = vmax.f32 %v3851, 0.0
    %v3884 = vmax.f32 %v3852, 0.0
    %v3885 = vmax.f32 %v3853, 0.0
    %v3886 = vmax.f32 %v3854, 0.0
    %v3887 = vmax.f32 %v3855, 0.0
    %v3888 = vld [vmem:[%s15] sm:$0xff]
    %v3889 = vld [vmem:[%s15 + $0x8] sm:$0xff]
    %v3890 = vld [vmem:[%s15 + $0x10] sm:$0xff]
    %v3891 = vld [vmem:[%s15 + $0x18] sm:$0xff]
    %v3892 = vld [vmem:[%s15 + $0x20] sm:$0xff]
    %v3893 = vld [vmem:[%s15 + $0x28] sm:$0xff]
    %v3894 = vld [vmem:[%s15 + $0x30] sm:$0xff]
    %v3895 = vld [vmem:[%s15 + $0x38] sm:$0xff]
    %v3896 = vld [vmem:[%s15 + $0x40] sm:$0xff]
    %v3897 = vld [vmem:[%s15 + $0x48] sm:$0xff]
    %v3898 = vld [vmem:[%s15 + $0x50] sm:$0xff]
    %v3899 = vld [vmem:[%s15 + $0x58] sm:$0xff]
    %v3900 = vld [vmem:[%s15 + $0x60] sm:$0xff]
    %v3901 = vld [vmem:[%s15 + $0x68] sm:$0xff]
    %v3902 = vld [vmem:[%s15 + $0x70] sm:$0xff]
    %v3903 = vld [vmem:[%s15 + $0x78] sm:$0xff]
    %v3904 = vld [vmem:[%s15 + $0x80] sm:$0xff]
    %v3905 = vld [vmem:[%s15 + $0x88] sm:$0xff]
    %v3906 = vld [vmem:[%s15 + $0x90] sm:$0xff]
    %v3907 = vld [vmem:[%s15 + $0x98] sm:$0xff]
    %v3908 = vld [vmem:[%s15 + $0xa0] sm:$0xff]
    %v3909 = vld [vmem:[%s15 + $0xa8] sm:$0xff]
    %v3910 = vld [vmem:[%s15 + $0xb0] sm:$0xff]
    %v3911 = vld [vmem:[%s15 + $0xb8] sm:$0xff]
    %v3912 = vld [vmem:[%s15 + $0xc0] sm:$0xff]
    %v3913 = vld [vmem:[%s15 + $0xc8] sm:$0xff]
    %v3914 = vld [vmem:[%s15 + $0xd0] sm:$0xff]
    %v3915 = vld [vmem:[%s15 + $0xd8] sm:$0xff]
    %v3916 = vld [vmem:[%s15 + $0xe0] sm:$0xff]
    %v3917 = vld [vmem:[%s15 + $0xe8] sm:$0xff]
    %v3918 = vld [vmem:[%s15 + $0xf0] sm:$0xff]
    %v3919 = vld [vmem:[%s15 + $0xf8] sm:$0xff]
    %3920 = vmatprep.subr.mxu0 0.0
    %3921 = vmatpush1.msra.mxu0 %v3856
    %3922 = vmatprep.subr.mxu0 0.0
    %3923 = vmatpush1.msra.mxu0 %v3857
    %3924 = vmatprep.subr.mxu0 0.0
    %3925 = vmatpush1.msra.mxu0 %v3858
    %3926 = vmatprep.subr.mxu0 0.0
    %3927 = vmatpush1.msra.mxu0 %v3859
    %3928 = vmatprep.subr.mxu0 0.0
    %3929 = vmatpush1.msra.mxu0 %v3860
    %3930 = vmatprep.subr.mxu0 0.0
    %3931 = vmatpush1.msra.mxu0 %v3861
    %3932 = vmatprep.subr.mxu0 0.0
    %3933 = vmatpush1.msra.mxu0 %v3862
    %3934 = vmatprep.subr.mxu0 0.0
    %3935 = vmatpush1.msra.mxu0 %v3863
    %3936 = vmatprep.subr.mxu0 0.0
    %3937 = vmatpush1.msra.mxu0 %v3864
    %3938 = vmatprep.subr.mxu0 0.0
    %3939 = vmatpush1.msra.mxu0 %v3865
    %3940 = vmatprep.subr.mxu0 0.0
    %3941 = vmatpush1.msra.mxu0 %v3866
    %3942 = vmatprep.subr.mxu0 0.0
    %3943 = vmatpush1.msra.mxu0 %v3867
    %3944 = vmatprep.subr.mxu0 0.0
    %3945 = vmatpush1.msra.mxu0 %v3868
    %3946 = vmatprep.subr.mxu0 0.0
    %3947 = vmatpush1.msra.mxu0 %v3869
    %3948 = vmatprep.subr.mxu0 0.0
    %3949 = vmatpush1.msra.mxu0 %v3870
    %3950 = vmatprep.subr.mxu0 0.0
    %3951 = vmatpush1.msra.mxu0 %v3871
    %3952 = vmatprep.subr.mxu0 0.0
    %3953 = vmatpush1.msra.mxu0 %v3872
    %3954 = vmatprep.subr.mxu0 0.0
    %3955 = vmatpush1.msra.mxu0 %v3873
    %3956 = vmatprep.subr.mxu0 0.0
    %3957 = vmatpush1.msra.mxu0 %v3874
    %3958 = vmatprep.subr.mxu0 0.0
    %3959 = vmatpush1.msra.mxu0 %v3875
    %3960 = vmatprep.subr.mxu0 0.0
    %3961 = vmatpush1.msra.mxu0 %v3876
    %3962 = vmatprep.subr.mxu0 0.0
    %3963 = vmatpush1.msra.mxu0 %v3877
    %3964 = vmatprep.subr.mxu0 0.0
    %3965 = vmatpush1.msra.mxu0 %v3878
    %3966 = vmatprep.subr.mxu0 0.0
    %3967 = vmatpush1.msra.mxu0 %v3879
    %3968 = vmatprep.subr.mxu0 0.0
    %3969 = vmatpush1.msra.mxu0 %v3880
    %3970 = vmatprep.subr.mxu0 0.0
    %3971 = vmatpush1.msra.mxu0 %v3881
    %3972 = vmatprep.subr.mxu0 0.0
    %3973 = vmatpush1.msra.mxu0 %v3882
    %3974 = vmatprep.subr.mxu0 0.0
    %3975 = vmatpush1.msra.mxu0 %v3883
    %3976 = vmatprep.subr.mxu0 0.0
    %3977 = vmatpush1.msra.mxu0 %v3884
    %3978 = vmatprep.subr.mxu0 0.0
    %3979 = vmatpush1.msra.mxu0 %v3885
    %3980 = vmatprep.subr.mxu0 0.0
    %3981 = vmatpush1.msra.mxu0 %v3886
    %3982 = vmatprep.subr.mxu0 0.0
    %3983 = vmatpush1.msra.mxu0 %v3887
    %3984 = vmatprep.mubr.f32.mxu0 %v3889
    %3985 = vmatmul.mubr.f32.gmra.mrb[0].mxu0 %v3888
    %v3986 = vpop.f32.mrb[0].mxu0
    %v3987 = vadd.f32 0.0, %v3986
    %v3988 = vpop.f32.mrb[0].mxu0
    %3989 = vmatprep.mubr.f32.mxu0 %v3891
    %3990 = vmatmul.mubr.f32.gmra.mrb[0].mxu0 %v3890
    %v3991 = vpop.f32.mrb[0].mxu0
    %v3992 = vadd.f32 0.0, %v3991
    %v3993 = vpop.f32.mrb[0].mxu0
    %3994 = vmatprep.mubr.f32.mxu0 %v3893
    %3995 = vmatmul.mubr.f32.gmra.mrb[0].mxu0 %v3892
    %v3996 = vpop.f32.mrb[0].mxu0
    %v3997 = vadd.f32 0.0, %v3996
    %v3998 = vpop.f32.mrb[0].mxu0
    %3999 = vmatprep.mubr.f32.mxu0 %v3895
    %4000 = vmatmul.mubr.f32.gmra.mrb[0].mxu0 %v3894
    %v4001 = vpop.f32.mrb[0].mxu0
    %v4002 = vadd.f32 0.0, %v4001
    %v4003 = vpop.f32.mrb[0].mxu0
    %4004 = vmatprep.mubr.f32.mxu0 %v3897
    %4005 = vmatmul.mubr.f32.gmra.mrb[0].mxu0 %v3896
    %v4006 = vpop.f32.mrb[0].mxu0
    %v4007 = vadd.f32 0.0, %v4006
    %v4008 = vpop.f32.mrb[0].mxu0
    %4009 = vmatprep.mubr.f32.mxu0 %v3899
    %4010 = vmatmul.mubr.f32.gmra.mrb[0].mxu0 %v3898
    %v4011 = vpop.f32.mrb[0].mxu0
    %v4012 = vadd.f32 0.0, %v4011
    %v4013 = vpop.f32.mrb[0].mxu0
    %4014 = vmatprep.mubr.f32.mxu0 %v3901
    %4015 = vmatmul.mubr.f32.gmra.mrb[0].mxu0 %v3900
    %v4016 = vpop.f32.mrb[0].mxu0
    %v4017 = vadd.f32 0.0, %v4016
    %v4018 = vpop.f32.mrb[0].mxu0
    %4019 = vmatprep.mubr.f32.mxu0 %v3903
    %4020 = vmatmul.mubr.f32.gmra.mrb[0].mxu0 %v3902
    %v4021 = vpop.f32.mrb[0].mxu0
    %v4022 = vadd.f32 0.0, %v4021
    %v4023 = vpop.f32.mrb[0].mxu0
    %4024 = vmatprep.mubr.f32.mxu0 %v3905
    %4025 = vmatmul.mubr.f32.gmra.mrb[0].mxu0 %v3904
    %v4026 = vpop.f32.mrb[0].mxu0
    %v4027 = vadd.f32 0.0, %v4026
    %v4028 = vpop.f32.mrb[0].mxu0
    %4029 = vmatprep.mubr.f32.mxu0 %v3907
    %4030 = vmatmul.mubr.f32.gmra.mrb[0].mxu0 %v3906
    %v4031 = vpop.f32.mrb[0].mxu0
    %v4032 = vadd.f32 0.0, %v4031
    %v4033 = vpop.f32.mrb[0].mxu0
    %4034 = vmatprep.mubr.f32.mxu0 %v3909
    %4035 = vmatmul.mubr.f32.gmra.mrb[0].mxu0 %v3908
    %v4036 = vpop.f32.mrb[0].mxu0
    %v4037 = vadd.f32 0.0, %v4036
    %v4038 = vpop.f32.mrb[0].mxu0
    %4039 = vmatprep.mubr.f32.mxu0 %v3911
    %4040 = vmatmul.mubr.f32.gmra.mrb[0].mxu0 %v3910
    %v4041 = vpop.f32.mrb[0].mxu0
    %v4042 = vadd.f32 0.0, %v4041
    %v4043 = vpop.f32.mrb[0].mxu0
    %4044 = vmatprep.mubr.f32.mxu0 %v3913
    %4045 = vmatmul.mubr.f32.gmra.mrb[0].mxu0 %v3912
    %v4046 = vpop.f32.mrb[0].mxu0
    %v4047 = vadd.f32 0.0, %v4046
    %v4048 = vpop.f32.mrb[0].mxu0
    %4049 = vmatprep.mubr.f32.mxu0 %v3915
    %4050 = vmatmul.mubr.f32.gmra.mrb[0].mxu0 %v3914
    %v4051 = vpop.f32.mrb[0].mxu0
    %v4052 = vadd.f32 0.0, %v4051
    %v4053 = vpop.f32.mrb[0].mxu0
    %4054 = vmatprep.mubr.f32.mxu0 %v3917
    %4055 = vmatmul.mubr.f32.gmra.mrb[0].mxu0 %v3916
    %v4056 = vpop.f32.mrb[0].mxu0
    %v4057 = vadd.f32 0.0, %v4056
    %v4058 = vpop.f32.mrb[0].mxu0
    %4059 = vmatprep.mubr.f32.mxu0 %v3919
    %4060 = vmatmul.mubr.f32.gmra.mrb[0].mxu0 %v3918
    %v4061 = vpop.f32.mrb[0].mxu0
    %v4062 = vadd.f32 0.0, %v4061
    %v4063 = vpop.f32.mrb[0].mxu0
    %4064 = vdwg.mxu0
    %v4065 = vld [vmem:[%s16] sm:$0xff]
    %v4066 = vld [vmem:[%s16 + $0x8] sm:$0xff]
    %v4067 = vld [vmem:[%s16 + $0x10] sm:$0xff]
    %v4068 = vld [vmem:[%s16 + $0x18] sm:$0xff]
    %v4069 = vld [vmem:[%s16 + $0x20] sm:$0xff]
    %v4070 = vld [vmem:[%s16 + $0x28] sm:$0xff]
    %v4071 = vld [vmem:[%s16 + $0x30] sm:$0xff]
    %v4072 = vld [vmem:[%s16 + $0x38] sm:$0xff]
    %v4073 = vld [vmem:[%s16 + $0x40] sm:$0xff]
    %v4074 = vld [vmem:[%s16 + $0x48] sm:$0xff]
    %v4075 = vld [vmem:[%s16 + $0x50] sm:$0xff]
    %v4076 = vld [vmem:[%s16 + $0x58] sm:$0xff]
    %v4077 = vld [vmem:[%s16 + $0x60] sm:$0xff]
    %v4078 = vld [vmem:[%s16 + $0x68] sm:$0xff]
    %v4079 = vld [vmem:[%s16 + $0x70] sm:$0xff]
    %v4080 = vld [vmem:[%s16 + $0x78] sm:$0xff]
    %4082 = vset.pattern.permute.xlu0 0
    %4083 = vperm.xlu0 %4082, %v4065
    %v4084 = vpop.permute.xlu0 %4083
    %4087 = vset.pattern.permute.xlu0 0
    %4088 = vperm.xlu0 %4087, %v4066
    %v4089 = vpop.permute.xlu0 %4088
    %4092 = vset.pattern.permute.xlu0 0
    %4093 = vperm.xlu0 %4092, %v4067
    %v4094 = vpop.permute.xlu0 %4093
    %4097 = vset.pattern.permute.xlu0 0
    %4098 = vperm.xlu0 %4097, %v4068
    %v4099 = vpop.permute.xlu0 %4098
    %4102 = vset.pattern.permute.xlu0 0
    %4103 = vperm.xlu0 %4102, %v4069
    %v4104 = vpop.permute.xlu0 %4103
    %4107 = vset.pattern.permute.xlu0 0
    %4108 = vperm.xlu0 %4107, %v4070
    %v4109 = vpop.permute.xlu0 %4108
    %4112 = vset.pattern.permute.xlu0 0
    %4113 = vperm.xlu0 %4112, %v4071
    %v4114 = vpop.permute.xlu0 %4113
    %4117 = vset.pattern.permute.xlu0 0
    %4118 = vperm.xlu0 %4117, %v4072
    %v4119 = vpop.permute.xlu0 %4118
    %4122 = vset.pattern.permute.xlu0 0
    %4123 = vperm.xlu0 %4122, %v4073
    %v4124 = vpop.permute.xlu0 %4123
    %4127 = vset.pattern.permute.xlu0 0
    %4128 = vperm.xlu0 %4127, %v4074
    %v4129 = vpop.permute.xlu0 %4128
    %4132 = vset.pattern.permute.xlu0 0
    %4133 = vperm.xlu0 %4132, %v4075
    %v4134 = vpop.permute.xlu0 %4133
    %4137 = vset.pattern.permute.xlu0 0
    %4138 = vperm.xlu0 %4137, %v4076
    %v4139 = vpop.permute.xlu0 %4138
    %4142 = vset.pattern.permute.xlu0 0
    %4143 = vperm.xlu0 %4142, %v4077
    %v4144 = vpop.permute.xlu0 %4143
    %4147 = vset.pattern.permute.xlu0 0
    %4148 = vperm.xlu0 %4147, %v4078
    %v4149 = vpop.permute.xlu0 %4148
    %4152 = vset.pattern.permute.xlu0 0
    %4153 = vperm.xlu0 %4152, %v4079
    %v4154 = vpop.permute.xlu0 %4153
    %4157 = vset.pattern.permute.xlu0 0
    %4158 = vperm.xlu0 %4157, %v4080
    %v4159 = vpop.permute.xlu0 %4158
    %v4161 = vmul.f32 %v3987, %v4084
    %v4162 = vmul.f32 %v3992, %v4089
    %v4163 = vmul.f32 %v3997, %v4094
    %v4164 = vmul.f32 %v4002, %v4099
    %v4165 = vmul.f32 %v4007, %v4104
    %v4166 = vmul.f32 %v4012, %v4109
    %v4167 = vmul.f32 %v4017, %v4114
    %v4168 = vmul.f32 %v4022, %v4119
    %v4169 = vmul.f32 %v4027, %v4124
    %v4170 = vmul.f32 %v4032, %v4129
    %v4171 = vmul.f32 %v4037, %v4134
    %v4172 = vmul.f32 %v4042, %v4139
    %v4173 = vmul.f32 %v4047, %v4144
    %v4174 = vmul.f32 %v4052, %v4149
    %v4175 = vmul.f32 %v4057, %v4154
    %v4176 = vmul.f32 %v4062, %v4159
    %v4177 = vld [vmem:[%s17] sm:$0xff]
    %v4178 = vld [vmem:[%s17 + $0x8] sm:$0xff]
    %v4179 = vld [vmem:[%s17 + $0x10] sm:$0xff]
    %v4180 = vld [vmem:[%s17 + $0x18] sm:$0xff]
    %v4181 = vld [vmem:[%s17 + $0x20] sm:$0xff]
    %v4182 = vld [vmem:[%s17 + $0x28] sm:$0xff]
    %v4183 = vld [vmem:[%s17 + $0x30] sm:$0xff]
    %v4184 = vld [vmem:[%s17 + $0x38] sm:$0xff]
    %v4185 = vld [vmem:[%s17 + $0x40] sm:$0xff]
    %v4186 = vld [vmem:[%s17 + $0x48] sm:$0xff]
    %v4187 = vld [vmem:[%s17 + $0x50] sm:$0xff]
    %v4188 = vld [vmem:[%s17 + $0x58] sm:$0xff]
    %v4189 = vld [vmem:[%s17 + $0x60] sm:$0xff]
    %v4190 = vld [vmem:[%s17 + $0x68] sm:$0xff]
    %v4191 = vld [vmem:[%s17 + $0x70] sm:$0xff]
    %v4192 = vld [vmem:[%s17 + $0x78] sm:$0xff]
    %4194 = vset.pattern.permute.xlu0 0
    %4195 = vperm.xlu0 %4194, %v4177
    %v4196 = vpop.permute.xlu0 %4195
    %4199 = vset.pattern.permute.xlu0 0
    %4200 = vperm.xlu0 %4199, %v4178
    %v4201 = vpop.permute.xlu0 %4200
    %4204 = vset.pattern.permute.xlu0 0
    %4205 = vperm.xlu0 %4204, %v4179
    %v4206 = vpop.permute.xlu0 %4205
    %4209 = vset.pattern.permute.xlu0 0
    %4210 = vperm.xlu0 %4209, %v4180
    %v4211 = vpop.permute.xlu0 %4210
    %4214 = vset.pattern.permute.xlu0 0
    %4215 = vperm.xlu0 %4214, %v4181
    %v4216 = vpop.permute.xlu0 %4215
    %4219 = vset.pattern.permute.xlu0 0
    %4220 = vperm.xlu0 %4219, %v4182
    %v4221 = vpop.permute.xlu0 %4220
    %4224 = vset.pattern.permute.xlu0 0
    %4225 = vperm.xlu0 %4224, %v4183
    %v4226 = vpop.permute.xlu0 %4225
    %4229 = vset.pattern.permute.xlu0 0
    %4230 = vperm.xlu0 %4229, %v4184
    %v4231 = vpop.permute.xlu0 %4230
    %4234 = vset.pattern.permute.xlu0 0
    %4235 = vperm.xlu0 %4234, %v4185
    %v4236 = vpop.permute.xlu0 %4235
    %4239 = vset.pattern.permute.xlu0 0
    %4240 = vperm.xlu0 %4239, %v4186
    %v4241 = vpop.permute.xlu0 %4240
    %4244 = vset.pattern.permute.xlu0 0
    %4245 = vperm.xlu0 %4244, %v4187
    %v4246 = vpop.permute.xlu0 %4245
    %4249 = vset.pattern.permute.xlu0 0
    %4250 = vperm.xlu0 %4249, %v4188
    %v4251 = vpop.permute.xlu0 %4250
    %4254 = vset.pattern.permute.xlu0 0
    %4255 = vperm.xlu0 %4254, %v4189
    %v4256 = vpop.permute.xlu0 %4255
    %4259 = vset.pattern.permute.xlu0 0
    %4260 = vperm.xlu0 %4259, %v4190
    %v4261 = vpop.permute.xlu0 %4260
    %4264 = vset.pattern.permute.xlu0 0
    %4265 = vperm.xlu0 %4264, %v4191
    %v4266 = vpop.permute.xlu0 %4265
    %4269 = vset.pattern.permute.xlu0 0
    %4270 = vperm.xlu0 %4269, %v4192
    %v4271 = vpop.permute.xlu0 %4270
    %v4273 = vadd.f32 %v4161, %v4196
    %v4274 = vadd.f32 %v4162, %v4201
    %v4275 = vadd.f32 %v4163, %v4206
    %v4276 = vadd.f32 %v4164, %v4211
    %v4277 = vadd.f32 %v4165, %v4216
    %v4278 = vadd.f32 %v4166, %v4221
    %v4279 = vadd.f32 %v4167, %v4226
    %v4280 = vadd.f32 %v4168, %v4231
    %v4281 = vadd.f32 %v4169, %v4236
    %v4282 = vadd.f32 %v4170, %v4241
    %v4283 = vadd.f32 %v4171, %v4246
    %v4284 = vadd.f32 %v4172, %v4251
    %v4285 = vadd.f32 %v4173, %v4256
    %v4286 = vadd.f32 %v4174, %v4261
    %v4287 = vadd.f32 %v4175, %v4266
    %v4288 = vadd.f32 %v4176, %v4271
    %v4289 = vmax.f32 %v4273, 0.0
    %v4290 = vmax.f32 %v4274, 0.0
    %v4291 = vmax.f32 %v4275, 0.0
    %v4292 = vmax.f32 %v4276, 0.0
    %v4293 = vmax.f32 %v4277, 0.0
    %v4294 = vmax.f32 %v4278, 0.0
    %v4295 = vmax.f32 %v4279, 0.0
    %v4296 = vmax.f32 %v4280, 0.0
    %v4297 = vmax.f32 %v4281, 0.0
    %v4298 = vmax.f32 %v4282, 0.0
    %v4299 = vmax.f32 %v4283, 0.0
    %v4300 = vmax.f32 %v4284, 0.0
    %v4301 = vmax.f32 %v4285, 0.0
    %v4302 = vmax.f32 %v4286, 0.0
    %v4303 = vmax.f32 %v4287, 0.0
    %v4304 = vmax.f32 %v4288, 0.0
    %v4305 = vld [vmem:[%s18] sm:$0xf]
    %v4306 = vld [vmem:[%s19] sm:$0xf]
    %4308 = vset.pattern.permute.xlu0 0
    %4309 = vperm.xlu0 %4308, %v4306
    %v4310 = vpop.permute.xlu0 %4309
    %4312 = vmatprep.subr.mxu0 0.0
    %4313 = vmatpush1.msra.mxu0 %v4289
    %4314 = vmatprep.subr.mxu0 0.0
    %4315 = vmatpush1.msra.mxu0 %v4290
    %4316 = vmatprep.subr.mxu0 0.0
    %4317 = vmatpush1.msra.mxu0 %v4291
    %4318 = vmatprep.subr.mxu0 0.0
    %4319 = vmatpush1.msra.mxu0 %v4292
    %4320 = vmatprep.subr.mxu0 0.0
    %4321 = vmatpush1.msra.mxu0 %v4293
    %4322 = vmatprep.subr.mxu0 0.0
    %4323 = vmatpush1.msra.mxu0 %v4294
    %4324 = vmatprep.subr.mxu0 0.0
    %4325 = vmatpush1.msra.mxu0 %v4295
    %4326 = vmatprep.subr.mxu0 0.0
    %4327 = vmatpush1.msra.mxu0 %v4296
    %4328 = vmatprep.subr.mxu0 0.0
    %4329 = vmatpush1.msra.mxu0 %v4297
    %4330 = vmatprep.subr.mxu0 0.0
    %4331 = vmatpush1.msra.mxu0 %v4298
    %4332 = vmatprep.subr.mxu0 0.0
    %4333 = vmatpush1.msra.mxu0 %v4299
    %4334 = vmatprep.subr.mxu0 0.0
    %4335 = vmatpush1.msra.mxu0 %v4300
    %4336 = vmatprep.subr.mxu0 0.0
    %4337 = vmatpush1.msra.mxu0 %v4301
    %4338 = vmatprep.subr.mxu0 0.0
    %4339 = vmatpush1.msra.mxu0 %v4302
    %4340 = vmatprep.subr.mxu0 0.0
    %4341 = vmatpush1.msra.mxu0 %v4303
    %4342 = vmatprep.subr.mxu0 0.0
    %4343 = vmatpush1.msra.mxu0 %v4304
    %4344 = vmatprep.subr.mxu0 0.0
    %4345 = vmatpush1.msra.mxu0 0.0
    %4346 = vmatprep.subr.mxu0 0.0
    %4347 = vmatpush1.msra.mxu0 0.0
    %4348 = vmatprep.subr.mxu0 0.0
    %4349 = vmatpush1.msra.mxu0 0.0
    %4350 = vmatprep.subr.mxu0 0.0
    %4351 = vmatpush1.msra.mxu0 0.0
    %4352 = vmatprep.subr.mxu0 0.0
    %4353 = vmatpush1.msra.mxu0 0.0
    %4354 = vmatprep.subr.mxu0 0.0
    %4355 = vmatpush1.msra.mxu0 0.0
    %4356 = vmatprep.subr.mxu0 0.0
    %4357 = vmatpush1.msra.mxu0 0.0
    %4358 = vmatprep.subr.mxu0 0.0
    %4359 = vmatpush1.msra.mxu0 0.0
    %4360 = vmatprep.subr.mxu0 0.0
    %4361 = vmatpush1.msra.mxu0 0.0
    %4362 = vmatprep.subr.mxu0 0.0
    %4363 = vmatpush1.msra.mxu0 0.0
    %4364 = vmatprep.subr.mxu0 0.0
    %4365 = vmatpush1.msra.mxu0 0.0
    %4366 = vmatprep.subr.mxu0 0.0
    %4367 = vmatpush1.msra.mxu0 0.0
    %4368 = vmatprep.subr.mxu0 0.0
    %4369 = vmatpush1.msra.mxu0 0.0
    %4370 = vmatprep.subr.mxu0 0.0
    %4371 = vmatpush1.msra.mxu0 0.0
    %4372 = vmatprep.subr.mxu0 0.0
    %4373 = vmatpush1.msra.mxu0 0.0
    %4374 = vmatprep.subr.mxu0 0.0
    %4375 = vmatpush1.msra.mxu0 0.0
    %4376 = vmatprep.mubr.f32.mxu0 0.0
    %4377 = vmatmul.mubr.f32.gmra.mrb[0].mxu0 %v4305
    %v4378 = vpop.f32.mrb[0].mxu0
    %v4379 = vadd.f32 %v4310, %v4378
    %v4380 = vpop.f32.mrb[0].mxu0
    %4381 = vdwg.mxu0
    %vm4382 = vcmask 11264
    %4383 = vst.msk [vmem:[%s21] sm:$0xf] %vm4382, %v4379
    %4385 = vset.pattern.permute.xlu0 0
    %4386 = vperm.xlu0 %4385, %v4379
    %v4387 = vpop.permute.xlu0 %4386
    %v4389 = vsub.f32 %v69, %v4387
    %4390 = vst [vmem:[#allocation2] sm:$0xf] %v4389
    %4391 = vset.pattern.permute.xlu0 1
    %4392 = vperm.xlu0 %4391, %v4379
    %v4393 = vpop.permute.xlu0 %4392
    %v4395 = vrot.slane %v69, 4
    %v4397 = vsub.f32 %v4395, %v4393
    %4398 = vst [vmem:[#allocation2 + $0x4] sm:$0xf] %v4397
    // Predicated region
    $region82: #{_forward_arrays.1} parent=1 // pred_check
      _
    $region83: #{_forward_arrays.1} parent=1 // pred_check_branch
      %4400 = sbr.rel (0) target = $region85
    $region84: #{_forward_arrays.1} parent=1 // pred_region
      %s4402 = ssub.s32 128, 128
      %4403 = vsyncadd [#allocation3], %s4402
      %s4405 = sshll.u32 [#allocation2], 4
      %s4406 = int_to_ptr.vmem [resolvable:$true] %s4405
      %4408 = dma.vmem_to_hbm [thread:$0]  %s4406, 128, %s20, [#allocation3]
    $region85: #{_forward_arrays.1} parent=1 // pred_fallthru
      _
    // Predicated region
    $region86: #{_forward_arrays.1} parent=1 // pred_check
      _
    $region87: #{_forward_arrays.1} parent=1 // pred_check_branch
      %4410 = sbr.rel (0) target = $region89
    $region88: #{_forward_arrays.1} parent=1 // pred_region
      _
    $region89: #{_forward_arrays.1} parent=1 // pred_fallthru
      _
    // Predicated region
    $region90: #{_forward_arrays.1} parent=1 // pred_check
      _
    $region91: #{_forward_arrays.1} parent=1 // pred_check_branch
      %4412 = sbr.rel (0) target = $region93
    $region92: #{_forward_arrays.1} parent=1 // pred_region
      %4413 = dma.done [#allocation3], 128
    $region93: #{_forward_arrays.1} parent=1 // pred_fallthru
      _
    // Predicated region
    $region94: #{_forward_arrays.1} parent=1 // pred_check
      _
    $region95: #{_forward_arrays.1} parent=1 // pred_check_branch
      %4415 = sbr.rel (0) target = $region97
    $region96: #{_forward_arrays.1} parent=1 // pred_region
      _
    $region97: #{_forward_arrays.1} parent=1 // pred_fallthru
      _
    %4416 = vsyncpa [#allocation3], 1

</llo_original>
